<compile_context>
chip_gen: v5e
topology: v5e:2x2
jax: 0.10.0
libtpu: 0.0.40
codegen_flags: <defaults>
</compile_context>

<pallas_src>
import math
import jax
import jax.numpy as jnp
from jax.experimental import pallas as pl
from jax.experimental.pallas import tpu as pltpu

NEG_SLOPE = 0.01  # nn.LeakyReLU default negative_slope

# Parity slot order inside the folded channel axis.  With this order every (ph, pw) tap group
# reads a contiguous channel slice:
#   slot 0: (rh=1, rw=0)   slot 1: (rh=0, rw=0)   slot 2: (rh=0, rw=1)   slot 3: (rh=1, rw=1)
#   ph<2, pw<2 -> slots [0:4] (K=512)      ph<2, pw=2 -> slots [0:2] (K=256)
#   ph=2, pw<2 -> slots [1:3] (K=256)      ph=2, pw=2 -> slots [1:2] (K=128)
_QMAP = ((1, 0), (0, 0), (0, 1), (1, 1))


def _group_table(C):
    """Static (ph, pw, slot_start, n_slots, weight_row_offset) table for the 9 tap groups."""
    groups = []
    off = 0
    for ph in range(3):
        for pw in range(3):
            s = 0 if ph < 2 else 1
            L = (2 if ph < 2 else 1) * (2 if pw < 2 else 1)
            groups.append((ph, pw, s, L, off))
            off += L * C
    assert off == 25 * C
    return tuple(groups)


def _pack_weights(weight_oihw, groups, C):
    """(O, I, 5, 5) -> (25*C, O) bf16, rows ordered to match the kernel's contiguous group slices."""
    blocks = []
    for (ph, pw, s, L, _off) in groups:
        for l in range(L):
            rh, rw = _QMAP[s + l]
            kh, kw = 2 * ph + rh, 2 * pw + rw
            blocks.append(jnp.transpose(weight_oihw[:, :, kh, kw], (1, 0)))  # (I, O)
    return jnp.concatenate(blocks, axis=0).astype(jnp.bfloat16)


def _make_conv_kernel(C, Cout, Wo, th, groups):
    """Fused 5x5/stride-2 conv + LeakyReLU: 9 grouped MXU dots over a parity-folded slab."""
    M = th * Wo

    def kernel(x_ref, w_ref, o_ref, acc_ref):
        # x_ref:   (1, Hh, Wh, 4C) bf16  parity-folded padded image; resident across rb.
        # w_ref:   (25C, Cout)     bf16  packed weights; resident for the whole grid.
        # o_ref:   (1, th, Wo, Cout) bf16 lane-dense output block (Cout = 128).
        # acc_ref: (M, Cout)       f32   VMEM accumulator scratch (keeps vreg pressure low).
        r0 = pl.program_id(1) * th  # first output row of this block
        for g, (ph, pw, s, L, off) in enumerate(groups):
            K = L * C
            # x_pad[2*oh+kh, 2*ow+kw, c] lives at x4[oh+ph, ow+pw, q(rh,rw)*C + c]; the channel
            # slice [s*C : (s+L)*C] covers exactly the (rh, rw) parities of this (ph, pw) group.
            xt = x_ref[0, pl.ds(r0 + ph, th), pl.ds(pw, Wo), pl.ds(s * C, K)]   # (th, Wo, K)
            part = jnp.dot(xt.reshape(M, K), w_ref[pl.ds(off, K), :],
                           preferred_element_type=jnp.float32)                  # (M, Cout) f32
            if g == 0:
                acc_ref[...] = part          # first group initialises -> no separate zero pass
            else:
                acc_ref[...] += part
        a = acc_ref[...]
        y = jnp.where(a > 0, a, NEG_SLOPE * a)                                  # LeakyReLU(0.01) in f32
        o_ref[...] = y.astype(o_ref.dtype).reshape(1, th, Wo, Cout)

    return kernel


def _vmem_limit_bytes():
    """~3/4 of physical VMEM, capped at 96 MiB (=> ~48 MiB on v7x, 96 MiB on v5e/v6e)."""
    try:
        cap = int(pltpu.get_tpu_info().vmem_capacity_bytes)
        return min((cap * 3) // 4, 96 * 1024 * 1024)
    except Exception:
        return 48 * 1024 * 1024  # conservative fallback, safe on every generation


def conv_relu_block5(x_nchw, weight_oihw, *, stride=2, pad=2):
    """Forward of Conv_ReLU_Block5. x: (N, 128, H, W) f32, weight: (128, 128, 5, 5) f32 -> bf16 NCHW."""
    N, C, H, W = x_nchw.shape
    Cout, Cin, KH, KW = weight_oihw.shape
    assert C == Cin and stride == 2 and pad == 2 and KH == 5 and KW == 5
    Ho = (H + 2 * pad - KH) // stride + 1   # = ceil(H/2)
    Wo = (W + 2 * pad - KW) // stride + 1   # = ceil(W/2)

    # Output-row block: target M = th*Wo up to ~512 MXU rows; Ho is padded to a multiple of th
    # (tail handled by padding + final slice) so th never degrades for awkward Ho.
    th = max(1, min(Ho, 512 // max(Wo, 1)))
    n_rb = -(-Ho // th)          # cdiv
    Ho_pad = n_rb * th

    # ---- cheap glue (a couple of memory passes; no 25x im2col expansion) ----
    # NCHW -> NHWC (module-API fidelity; a model staying NHWC/bf16 end-to-end can drop this),
    # bf16 cast, and ONE jnp.pad that covers the conv's own zero padding, the 2x2 phase split,
    # and the Ho -> Ho_pad row padding.
    x = jnp.transpose(x_nchw, (0, 2, 3, 1)).astype(jnp.bfloat16)
    pad_b = 2 * Ho_pad + 2 - H
    pad_r = 2 * Wo + 2 - W
    x_pad = jnp.pad(x, ((0, 0), (pad, pad_b), (pad, pad_r), (0, 0)))

    # Fold BOTH parities into the channel axis in _QMAP slot order:
    #   x4[n, i, j, q*C + c] = x_pad[n, 2*i + rh(q), 2*j + rw(q), c]       -> (N, Hh, Wh, 4C)
    x4 = jnp.concatenate([x_pad[:, rh::2, rw::2, :] for (rh, rw) in _QMAP], axis=-1)
    Hh, Wh = Ho_pad + 2, Wo + 2

    groups = _group_table(C)
    w_packed = _pack_weights(weight_oihw, groups, C)     # (3200, 128) bf16, ~0.8 MB, VMEM-resident

    out = pl.pallas_call(
        _make_conv_kernel(C, Cout, Wo, th, groups),
        out_shape=jax.ShapeDtypeStruct((N, Ho_pad, Wo, Cout), jnp.bfloat16),
        grid=(N, n_rb),
        in_specs=[
            # Parity-folded image for batch n; index_map ignores rb -> one DMA per batch,
            # block stays resident (revisited, not re-fetched) across the row-block axis.
            pl.BlockSpec((1, Hh, Wh, 4 * C), lambda n, rb: (n, 0, 0, 0)),
            # Packed weights, constant index -> fetched once, resident for the whole grid.
            pl.BlockSpec((KH * KW * Cin, Cout), lambda n, rb: (0, 0)),
        ],
        out_specs=pl.BlockSpec((1, th, Wo, Cout), lambda n, rb: (n, rb, 0, 0)),
        scratch_shapes=[pltpu.VMEM((th * Wo, Cout), jnp.float32)],
        compiler_params=pltpu.CompilerParams(
            # The 25-tap reduction is entirely in-kernel, so both grid axes are independent;
            # "parallel" lets multi-core TensorCores split them (no-op on single-core chips).
            dimension_semantics=("parallel", "parallel"),
            vmem_limit_bytes=_vmem_limit_bytes(),
        ),
    )(x4, w_packed)

    out = out[:, :Ho] if Ho_pad != Ho else out
    # Back to the module's NCHW layout (drop if the surrounding model stays NHWC).
    return jnp.transpose(out, (0, 3, 1, 2))


if __name__ == "__main__":
    key = jax.random.PRNGKey(0)
    kx, kw = jax.random.split(key)

    # The module fixes channels = 128; keep batch/spatial small.
    N, C, H, W = 2, 128, 16, 16
    x = jax.random.normal(kx, (N, C, H, W), dtype=jnp.float32)
    # VDSR-style init: N(0, sqrt(2 / (k*k*out_channels)))
    w_std = math.sqrt(2.0 / (5 * 5 * 128))
    weight = jax.random.normal(kw, (128, 128, 5, 5), dtype=jnp.float32) * w_std

    y = jax.jit(conv_relu_block5)(x, weight)
    y = jax.block_until_ready(y)
    assert y.shape == (N, 128, 8, 8), y.shape
    assert y.dtype == jnp.bfloat16, y.dtype

    # Reference: identical bf16 rounding of the MXU operands, f32 conv math + LeakyReLU(0.01).
    # The kernel additionally rounds its OUTPUT to bf16, so compare with bf16-level tolerance.
    xr = x.astype(jnp.bfloat16).astype(jnp.float32)
    wr = weight.astype(jnp.bfloat16).astype(jnp.float32)
    ref = jax.lax.conv_general_dilated(
        xr, wr, window_strides=(2, 2), padding=((2, 2), (2, 2)),
        dimension_numbers=("NCHW", "OIHW", "NCHW"),
        precision=jax.lax.Precision.HIGHEST,
    )
    ref = jnp.where(ref > 0, ref, NEG_SLOPE * ref)
    y_f32 = y.astype(jnp.float32)
    max_err = float(jnp.max(jnp.abs(y_f32 - ref)))
    assert jnp.allclose(y_f32, ref, rtol=2e-2, atol=2e-2), max_err

    print("KERNEL_OK")
</pallas_src>

<mosaic_0001>
module attributes {stable_mosaic.version = 11 : i64} {
  func.func @kernel(%arg0: i32, %arg1: i32, %arg2: memref<1x10x10x512xbf16, #tpu.memory_space<vmem>>, %arg3: memref<3200x128xbf16, #tpu.memory_space<vmem>>, %arg4: memref<1x8x8x128xbf16, #tpu.memory_space<vmem>>, %arg5: memref<64x128xf32, #tpu.memory_space<vmem>>) attributes {dimension_semantics = [#tpu.dimension_semantics<parallel>, #tpu.dimension_semantics<parallel>], iteration_bounds = array<i64: 2, 1>, scalar_prefetch = 0 : i64, scratch_operands = 1 : i64, tpu.core_type = #tpu.core_type<tc>, window_params = [{transform_indices = @transform_0, window_bounds = array<i64: 1, 10, 10, 512>}, {pipeline_mode = #tpu.pipeline_mode<synchronous>, transform_indices = @transform_1, window_bounds = array<i64: 3200, 128>}, {transform_indices = @transform_2, window_bounds = array<i64: 1, 8, 8, 128>}]} {
    %c8_i32 = arith.constant 8 : i32
    %0 = arith.muli %arg1, %c8_i32 : i32
    %c0_i32 = arith.constant 0 : i32
    %1 = arith.addi %0, %c0_i32 : i32
    %c0 = arith.constant 0 : index
    %2 = arith.index_cast %1 : i32 to index
    %c0_0 = arith.constant 0 : index
    %c0_1 = arith.constant 0 : index
    %3 = vector.load %arg2[%c0, %2, %c0_0, %c0_1] : memref<1x10x10x512xbf16, #tpu.memory_space<vmem>>, vector<1x8x8x512xbf16>
    %4 = vector.shape_cast %3 : vector<1x8x8x512xbf16> to vector<8x8x512xbf16>
    %5 = vector.shape_cast %4 : vector<8x8x512xbf16> to vector<64x512xbf16>
    %c0_2 = arith.constant 0 : index
    %c0_3 = arith.constant 0 : index
    %6 = vector.load %arg3[%c0_2, %c0_3] : memref<3200x128xbf16, #tpu.memory_space<vmem>>, vector<512x128xbf16>
    %cst = arith.constant dense<0.000000e+00> : vector<64x128xf32>
    %7 = tpu.matmul %5, %6, %cst {dimension_numbers = #tpu.dot_dimension_numbers<[1], [0], [0], [1], [0, 0, 1, 1], [], []>} : vector<64x512xbf16>, vector<512x128xbf16>, vector<64x128xf32> -> vector<64x128xf32>
    %c0_4 = arith.constant 0 : index
    %c0_5 = arith.constant 0 : index
    %8 = vector.load %arg5[%c0_4, %c0_5] : memref<64x128xf32, #tpu.memory_space<vmem>>, vector<64x128xf32>
    tpu.vector_store %arg5[%c0_4, %c0_5], %7 {strides = array<i32>} : memref<64x128xf32, #tpu.memory_space<vmem>>, vector<64x128xf32>,
    %c0_i32_6 = arith.constant 0 : i32
    %9 = arith.addi %0, %c0_i32_6 : i32
    %c0_7 = arith.constant 0 : index
    %10 = arith.index_cast %9 : i32 to index
    %c1 = arith.constant 1 : index
    %c0_8 = arith.constant 0 : index
    %11 = vector.load %arg2[%c0_7, %10, %c1, %c0_8] : memref<1x10x10x512xbf16, #tpu.memory_space<vmem>>, vector<1x8x8x512xbf16>
    %12 = vector.shape_cast %11 : vector<1x8x8x512xbf16> to vector<8x8x512xbf16>
    %13 = vector.shape_cast %12 : vector<8x8x512xbf16> to vector<64x512xbf16>
    %c512 = arith.constant 512 : index
    %c0_9 = arith.constant 0 : index
    %14 = vector.load %arg3[%c512, %c0_9] : memref<3200x128xbf16, #tpu.memory_space<vmem>>, vector<512x128xbf16>
    %cst_10 = arith.constant dense<0.000000e+00> : vector<64x128xf32>
    %15 = tpu.matmul %13, %14, %cst_10 {dimension_numbers = #tpu.dot_dimension_numbers<[1], [0], [0], [1], [0, 0, 1, 1], [], []>} : vector<64x512xbf16>, vector<512x128xbf16>, vector<64x128xf32> -> vector<64x128xf32>
    %c0_11 = arith.constant 0 : index
    %c0_12 = arith.constant 0 : index
    %16 = vector.load %arg5[%c0_11, %c0_12] : memref<64x128xf32, #tpu.memory_space<vmem>>, vector<64x128xf32>
    %17 = arith.addf %16, %15 : vector<64x128xf32>
    %c0_13 = arith.constant 0 : index
    %c0_14 = arith.constant 0 : index
    %18 = vector.load %arg5[%c0_13, %c0_14] : memref<64x128xf32, #tpu.memory_space<vmem>>, vector<64x128xf32>
    tpu.vector_store %arg5[%c0_13, %c0_14], %17 {strides = array<i32>} : memref<64x128xf32, #tpu.memory_space<vmem>>, vector<64x128xf32>,
    %c0_i32_15 = arith.constant 0 : i32
    %19 = arith.addi %0, %c0_i32_15 : i32
    %c0_16 = arith.constant 0 : index
    %20 = arith.index_cast %19 : i32 to index
    %c2 = arith.constant 2 : index
    %c0_17 = arith.constant 0 : index
    %21 = vector.load %arg2[%c0_16, %20, %c2, %c0_17] : memref<1x10x10x512xbf16, #tpu.memory_space<vmem>>, vector<1x8x8x256xbf16>
    %22 = vector.shape_cast %21 : vector<1x8x8x256xbf16> to vector<8x8x256xbf16>
    %23 = vector.shape_cast %22 : vector<8x8x256xbf16> to vector<64x256xbf16>
    %c1024 = arith.constant 1024 : index
    %c0_18 = arith.constant 0 : index
    %24 = vector.load %arg3[%c1024, %c0_18] : memref<3200x128xbf16, #tpu.memory_space<vmem>>, vector<256x128xbf16>
    %cst_19 = arith.constant dense<0.000000e+00> : vector<64x128xf32>
    %25 = tpu.matmul %23, %24, %cst_19 {dimension_numbers = #tpu.dot_dimension_numbers<[1], [0], [0], [1], [0, 0, 1, 1], [], []>} : vector<64x256xbf16>, vector<256x128xbf16>, vector<64x128xf32> -> vector<64x128xf32>
    %c0_20 = arith.constant 0 : index
    %c0_21 = arith.constant 0 : index
    %26 = vector.load %arg5[%c0_20, %c0_21] : memref<64x128xf32, #tpu.memory_space<vmem>>, vector<64x128xf32>
    %27 = arith.addf %26, %25 : vector<64x128xf32>
    %c0_22 = arith.constant 0 : index
    %c0_23 = arith.constant 0 : index
    %28 = vector.load %arg5[%c0_22, %c0_23] : memref<64x128xf32, #tpu.memory_space<vmem>>, vector<64x128xf32>
    tpu.vector_store %arg5[%c0_22, %c0_23], %27 {strides = array<i32>} : memref<64x128xf32, #tpu.memory_space<vmem>>, vector<64x128xf32>,
    %c1_i32 = arith.constant 1 : i32
    %29 = arith.addi %0, %c1_i32 : i32
    %c0_24 = arith.constant 0 : index
    %30 = arith.index_cast %29 : i32 to index
    %c0_25 = arith.constant 0 : index
    %c0_26 = arith.constant 0 : index
    %31 = vector.load %arg2[%c0_24, %30, %c0_25, %c0_26] : memref<1x10x10x512xbf16, #tpu.memory_space<vmem>>, vector<1x8x8x512xbf16>
    %32 = vector.shape_cast %31 : vector<1x8x8x512xbf16> to vector<8x8x512xbf16>
    %33 = vector.shape_cast %32 : vector<8x8x512xbf16> to vector<64x512xbf16>
    %c1280 = arith.constant 1280 : index
    %c0_27 = arith.constant 0 : index
    %34 = vector.load %arg3[%c1280, %c0_27] : memref<3200x128xbf16, #tpu.memory_space<vmem>>, vector<512x128xbf16>
    %cst_28 = arith.constant dense<0.000000e+00> : vector<64x128xf32>
    %35 = tpu.matmul %33, %34, %cst_28 {dimension_numbers = #tpu.dot_dimension_numbers<[1], [0], [0], [1], [0, 0, 1, 1], [], []>} : vector<64x512xbf16>, vector<512x128xbf16>, vector<64x128xf32> -> vector<64x128xf32>
    %c0_29 = arith.constant 0 : index
    %c0_30 = arith.constant 0 : index
    %36 = vector.load %arg5[%c0_29, %c0_30] : memref<64x128xf32, #tpu.memory_space<vmem>>, vector<64x128xf32>
    %37 = arith.addf %36, %35 : vector<64x128xf32>
    %c0_31 = arith.constant 0 : index
    %c0_32 = arith.constant 0 : index
    %38 = vector.load %arg5[%c0_31, %c0_32] : memref<64x128xf32, #tpu.memory_space<vmem>>, vector<64x128xf32>
    tpu.vector_store %arg5[%c0_31, %c0_32], %37 {strides = array<i32>} : memref<64x128xf32, #tpu.memory_space<vmem>>, vector<64x128xf32>,
    %c1_i32_33 = arith.constant 1 : i32
    %39 = arith.addi %0, %c1_i32_33 : i32
    %c0_34 = arith.constant 0 : index
    %40 = arith.index_cast %39 : i32 to index
    %c1_35 = arith.constant 1 : index
    %c0_36 = arith.constant 0 : index
    %41 = vector.load %arg2[%c0_34, %40, %c1_35, %c0_36] : memref<1x10x10x512xbf16, #tpu.memory_space<vmem>>, vector<1x8x8x512xbf16>
    %42 = vector.shape_cast %41 : vector<1x8x8x512xbf16> to vector<8x8x512xbf16>
    %43 = vector.shape_cast %42 : vector<8x8x512xbf16> to vector<64x512xbf16>
    %c1792 = arith.constant 1792 : index
    %c0_37 = arith.constant 0 : index
    %44 = vector.load %arg3[%c1792, %c0_37] : memref<3200x128xbf16, #tpu.memory_space<vmem>>, vector<512x128xbf16>
    %cst_38 = arith.constant dense<0.000000e+00> : vector<64x128xf32>
    %45 = tpu.matmul %43, %44, %cst_38 {dimension_numbers = #tpu.dot_dimension_numbers<[1], [0], [0], [1], [0, 0, 1, 1], [], []>} : vector<64x512xbf16>, vector<512x128xbf16>, vector<64x128xf32> -> vector<64x128xf32>
    %c0_39 = arith.constant 0 : index
    %c0_40 = arith.constant 0 : index
    %46 = vector.load %arg5[%c0_39, %c0_40] : memref<64x128xf32, #tpu.memory_space<vmem>>, vector<64x128xf32>
    %47 = arith.addf %46, %45 : vector<64x128xf32>
    %c0_41 = arith.constant 0 : index
    %c0_42 = arith.constant 0 : index
    %48 = vector.load %arg5[%c0_41, %c0_42] : memref<64x128xf32, #tpu.memory_space<vmem>>, vector<64x128xf32>
    tpu.vector_store %arg5[%c0_41, %c0_42], %47 {strides = array<i32>} : memref<64x128xf32, #tpu.memory_space<vmem>>, vector<64x128xf32>,
    %c1_i32_43 = arith.constant 1 : i32
    %49 = arith.addi %0, %c1_i32_43 : i32
    %c0_44 = arith.constant 0 : index
    %50 = arith.index_cast %49 : i32 to index
    %c2_45 = arith.constant 2 : index
    %c0_46 = arith.constant 0 : index
    %51 = vector.load %arg2[%c0_44, %50, %c2_45, %c0_46] : memref<1x10x10x512xbf16, #tpu.memory_space<vmem>>, vector<1x8x8x256xbf16>
    %52 = vector.shape_cast %51 : vector<1x8x8x256xbf16> to vector<8x8x256xbf16>
    %53 = vector.shape_cast %52 : vector<8x8x256xbf16> to vector<64x256xbf16>
    %c2304 = arith.constant 2304 : index
    %c0_47 = arith.constant 0 : index
    %54 = vector.load %arg3[%c2304, %c0_47] : memref<3200x128xbf16, #tpu.memory_space<vmem>>, vector<256x128xbf16>
    %cst_48 = arith.constant dense<0.000000e+00> : vector<64x128xf32>
    %55 = tpu.matmul %53, %54, %cst_48 {dimension_numbers = #tpu.dot_dimension_numbers<[1], [0], [0], [1], [0, 0, 1, 1], [], []>} : vector<64x256xbf16>, vector<256x128xbf16>, vector<64x128xf32> -> vector<64x128xf32>
    %c0_49 = arith.constant 0 : index
    %c0_50 = arith.constant 0 : index
    %56 = vector.load %arg5[%c0_49, %c0_50] : memref<64x128xf32, #tpu.memory_space<vmem>>, vector<64x128xf32>
    %57 = arith.addf %56, %55 : vector<64x128xf32>
    %c0_51 = arith.constant 0 : index
    %c0_52 = arith.constant 0 : index
    %58 = vector.load %arg5[%c0_51, %c0_52] : memref<64x128xf32, #tpu.memory_space<vmem>>, vector<64x128xf32>
    tpu.vector_store %arg5[%c0_51, %c0_52], %57 {strides = array<i32>} : memref<64x128xf32, #tpu.memory_space<vmem>>, vector<64x128xf32>,
    %c2_i32 = arith.constant 2 : i32
    %59 = arith.addi %0, %c2_i32 : i32
    %c0_53 = arith.constant 0 : index
    %60 = arith.index_cast %59 : i32 to index
    %c0_54 = arith.constant 0 : index
    %c128 = arith.constant 128 : index
    %61 = vector.load %arg2[%c0_53, %60, %c0_54, %c128] : memref<1x10x10x512xbf16, #tpu.memory_space<vmem>>, vector<1x8x8x256xbf16>
    %62 = vector.shape_cast %61 : vector<1x8x8x256xbf16> to vector<8x8x256xbf16>
    %63 = vector.shape_cast %62 : vector<8x8x256xbf16> to vector<64x256xbf16>
    %c2560 = arith.constant 2560 : index
    %c0_55 = arith.constant 0 : index
    %64 = vector.load %arg3[%c2560, %c0_55] : memref<3200x128xbf16, #tpu.memory_space<vmem>>, vector<256x128xbf16>
    %cst_56 = arith.constant dense<0.000000e+00> : vector<64x128xf32>
    %65 = tpu.matmul %63, %64, %cst_56 {dimension_numbers = #tpu.dot_dimension_numbers<[1], [0], [0], [1], [0, 0, 1, 1], [], []>} : vector<64x256xbf16>, vector<256x128xbf16>, vector<64x128xf32> -> vector<64x128xf32>
    %c0_57 = arith.constant 0 : index
    %c0_58 = arith.constant 0 : index
    %66 = vector.load %arg5[%c0_57, %c0_58] : memref<64x128xf32, #tpu.memory_space<vmem>>, vector<64x128xf32>
    %67 = arith.addf %66, %65 : vector<64x128xf32>
    %c0_59 = arith.constant 0 : index
    %c0_60 = arith.constant 0 : index
    %68 = vector.load %arg5[%c0_59, %c0_60] : memref<64x128xf32, #tpu.memory_space<vmem>>, vector<64x128xf32>
    tpu.vector_store %arg5[%c0_59, %c0_60], %67 {strides = array<i32>} : memref<64x128xf32, #tpu.memory_space<vmem>>, vector<64x128xf32>,
    %c2_i32_61 = arith.constant 2 : i32
    %69 = arith.addi %0, %c2_i32_61 : i32
    %c0_62 = arith.constant 0 : index
    %70 = arith.index_cast %69 : i32 to index
    %c1_63 = arith.constant 1 : index
    %c128_64 = arith.constant 128 : index
    %71 = vector.load %arg2[%c0_62, %70, %c1_63, %c128_64] : memref<1x10x10x512xbf16, #tpu.memory_space<vmem>>, vector<1x8x8x256xbf16>
    %72 = vector.shape_cast %71 : vector<1x8x8x256xbf16> to vector<8x8x256xbf16>
    %73 = vector.shape_cast %72 : vector<8x8x256xbf16> to vector<64x256xbf16>
    %c2816 = arith.constant 2816 : index
    %c0_65 = arith.constant 0 : index
    %74 = vector.load %arg3[%c2816, %c0_65] : memref<3200x128xbf16, #tpu.memory_space<vmem>>, vector<256x128xbf16>
    %cst_66 = arith.constant dense<0.000000e+00> : vector<64x128xf32>
    %75 = tpu.matmul %73, %74, %cst_66 {dimension_numbers = #tpu.dot_dimension_numbers<[1], [0], [0], [1], [0, 0, 1, 1], [], []>} : vector<64x256xbf16>, vector<256x128xbf16>, vector<64x128xf32> -> vector<64x128xf32>
    %c0_67 = arith.constant 0 : index
    %c0_68 = arith.constant 0 : index
    %76 = vector.load %arg5[%c0_67, %c0_68] : memref<64x128xf32, #tpu.memory_space<vmem>>, vector<64x128xf32>
    %77 = arith.addf %76, %75 : vector<64x128xf32>
    %c0_69 = arith.constant 0 : index
    %c0_70 = arith.constant 0 : index
    %78 = vector.load %arg5[%c0_69, %c0_70] : memref<64x128xf32, #tpu.memory_space<vmem>>, vector<64x128xf32>
    tpu.vector_store %arg5[%c0_69, %c0_70], %77 {strides = array<i32>} : memref<64x128xf32, #tpu.memory_space<vmem>>, vector<64x128xf32>,
    %c2_i32_71 = arith.constant 2 : i32
    %79 = arith.addi %0, %c2_i32_71 : i32
    %c0_72 = arith.constant 0 : index
    %80 = arith.index_cast %79 : i32 to index
    %c2_73 = arith.constant 2 : index
    %c128_74 = arith.constant 128 : index
    %81 = vector.load %arg2[%c0_72, %80, %c2_73, %c128_74] : memref<1x10x10x512xbf16, #tpu.memory_space<vmem>>, vector<1x8x8x128xbf16>
    %82 = vector.shape_cast %81 : vector<1x8x8x128xbf16> to vector<8x8x128xbf16>
    %83 = vector.shape_cast %82 : vector<8x8x128xbf16> to vector<64x128xbf16>
    %c3072 = arith.constant 3072 : index
    %c0_75 = arith.constant 0 : index
    %84 = vector.load %arg3[%c3072, %c0_75] : memref<3200x128xbf16, #tpu.memory_space<vmem>>, vector<128x128xbf16>
    %cst_76 = arith.constant dense<0.000000e+00> : vector<64x128xf32>
    %85 = tpu.matmul %83, %84, %cst_76 {dimension_numbers = #tpu.dot_dimension_numbers<[1], [0], [0], [1], [0, 0, 1, 1], [], []>} : vector<64x128xbf16>, vector<128x128xbf16>, vector<64x128xf32> -> vector<64x128xf32>
    %c0_77 = arith.constant 0 : index
    %c0_78 = arith.constant 0 : index
    %86 = vector.load %arg5[%c0_77, %c0_78] : memref<64x128xf32, #tpu.memory_space<vmem>>, vector<64x128xf32>
    %87 = arith.addf %86, %85 : vector<64x128xf32>
    %c0_79 = arith.constant 0 : index
    %c0_80 = arith.constant 0 : index
    %88 = vector.load %arg5[%c0_79, %c0_80] : memref<64x128xf32, #tpu.memory_space<vmem>>, vector<64x128xf32>
    tpu.vector_store %arg5[%c0_79, %c0_80], %87 {strides = array<i32>} : memref<64x128xf32, #tpu.memory_space<vmem>>, vector<64x128xf32>,
    %c0_81 = arith.constant 0 : index
    %c0_82 = arith.constant 0 : index
    %89 = vector.load %arg5[%c0_81, %c0_82] : memref<64x128xf32, #tpu.memory_space<vmem>>, vector<64x128xf32>
    %cst_83 = arith.constant 0.000000e+00 : f32
    %90 = vector.broadcast %cst_83 : f32 to vector<64x128xf32>
    %91 = arith.cmpf ogt, %89, %90 : vector<64x128xf32>
    %cst_84 = arith.constant 0.00999999977 : f32
    %92 = vector.broadcast %cst_84 : f32 to vector<64x128xf32>
    %93 = arith.mulf %92, %89 : vector<64x128xf32>
    %94 = arith.select %91, %89, %93 : vector<64x128xi1>, vector<64x128xf32>
    %95 = arith.truncf %94 : vector<64x128xf32> to vector<64x128xbf16>
    %96 = vector.shape_cast %95 : vector<64x128xbf16> to vector<1x8x8x128xbf16>
    %c0_85 = arith.constant 0 : index
    %c0_86 = arith.constant 0 : index
    %c0_87 = arith.constant 0 : index
    %c0_88 = arith.constant 0 : index
    %97 = vector.load %arg4[%c0_85, %c0_86, %c0_87, %c0_88] : memref<1x8x8x128xbf16, #tpu.memory_space<vmem>>, vector<1x8x8x128xbf16>
    tpu.vector_store %arg4[%c0_85, %c0_86, %c0_87, %c0_88], %96 {strides = array<i32>} : memref<1x8x8x128xbf16, #tpu.memory_space<vmem>>, vector<1x8x8x128xbf16>,
    return
  }
  func.func @transform_0(%arg0: i32, %arg1: i32) -> (i32, i32, i32, i32) {
    %c0_i32 = arith.constant 0 : i32
    %c0_i32_0 = arith.constant 0 : i32
    %c0_i32_1 = arith.constant 0 : i32
    %c0_i32_2 = arith.constant 0 : i32
    return %arg0, %c0_i32, %c0_i32_0, %c0_i32_1 : i32, i32, i32, i32
  }
  func.func @transform_1(%arg0: i32, %arg1: i32) -> (i32, i32) {
    %c0_i32 = arith.constant 0 : i32
    %c0_i32_0 = arith.constant 0 : i32
    %c0_i32_1 = arith.constant 0 : i32
    return %c0_i32, %c0_i32_0 : i32, i32
  }
  func.func @transform_2(%arg0: i32, %arg1: i32) -> (i32, i32, i32, i32) {
    %c0_i32 = arith.constant 0 : i32
    %c0_i32_0 = arith.constant 0 : i32
    %c0_i32_1 = arith.constant 0 : i32
    return %arg0, %arg1, %c0_i32, %c0_i32_0 : i32, i32, i32, i32
  }
}

</mosaic_0001>

<llo_original>
// kernel: conv_relu_block5.1
$region0: #{conv_relu_block5.1}
  #allocation0 [shape = 'u32[]', space=smem, size = 0x4, offset = 0x4, fixed_abs, tag = 'smem constant byte address 0x4 - core index']
  #allocation1 [shape = 'u32[72,128]{1,0:T(1,128)}', space=vmem, size = 0x9000, scoped, tag = 'internal scratch']
  #allocation2 [shape = 'f32[64,128]{1,0:T(8,128)}', space=vmem, size = 0x8000, scoped, tag = 'scratch operand']
  %s0 = inlined_call_operand.vmem [shape: bf16[2,10,10,512], index: 0, kind: input, shape index: {}]
  %s1 = inlined_call_operand.vmem [shape: bf16[3200,128], index: 1, kind: input, shape index: {}]
  %s2 = inlined_call_operand.hbm [shape: bf16[2,8,8,128], index: 2, kind: output, shape index: {}]
  %s3 = sld [smem:[#allocation0]]
  $region41: #{conv_relu_block5.1} parent=0
    _
  %s5 = ssub.s32 1, %s3
  %s6 = scalar_select 0, %s5, %s3
  $region1: #{conv_relu_block5.1} parent=0
    #allocation3 [shape = 'u8[32768]{0}', space=vmem, size = 0x8000, scoped, tag = 'output window, operand 0']
    #allocation4 [shape = 's32[2]{0}', space=sflag, size = 0x8, scoped, tag = 'scoped memory for conv_relu_block5.1']
    %7 = vsyncpa [#allocation4], 0
    %s8 = scalar_lea.sflag [#allocation4], 1
    %9 = vsyncpa %s8, 0
    loop: start=0, step=1, limit=4
    $region2: #{conv_relu_block5.1} parent=1 // loop_pre_header
      _
    $region3: #{conv_relu_block5.1} parent=1 // loop_header
      %s11 = sphi 0, %s15
      %p12 = scmp.ge.s32.totalorder %s11, 4
      %s18 = sphi 0, %s30
      %s19 = sphi 0, %s26
      %s20 = sphi 0, %s18
      %s21 = sphi 0, %s19
      %s22 = sphi 0, %s20
      %s23 = sphi 0, %s21
      %s33 = sphi 0, %s35
      %s36 = sphi 0, %s33
      %s37 = sphi 0, %s36
      %s53 = sphi 0, %s37
      %s57 = sphi 0, %s57
      %s59 = sphi 0, %s57
      %s60 = sphi 0, %s59
      %s74 = sphi 0, %s60
      %s82 = sphi 0, %s84
      %s85 = sphi 0, %s82
      %s86 = sphi 0, %s85
      %s102 = sphi 0, %s86
    $region4: #{conv_relu_block5.1} parent=1 // loop_header_branch
      %14 = sbr.rel (%p12) target = $region8
    $region5: #{conv_relu_block5.1} parent=1 // loop_body
      %s16 = ssub.s32 %s11, 1
      %s17 = ssub.s32 %s11, 2
      %s24 = sadd.s32 1, %s19
      %p25 = scmp.ge.s32.totalorder %s24, 1
      %s26 = scalar_select %p25, 0, %s24
      %s27 = sadd.s32 1, %s18
      %s28 = scalar_select %p25, %s27, %s18
      %p29 = scmp.ge.s32.totalorder %s28, 2
      %s30 = scalar_select %p29, 0, %s28
      %s31 = ssub.s32 %s18, %s30
      %p32 = scmp.eq.s32.totalorder %s31, 0
      %s34 = sadd.s32 %s33, 1
      %s35 = scalar_select %p32, %s33, %s34
      %p38 = pneg %p32
      %p39 = scmp.eq.s32.totalorder %s11, 1
      %p40 = por %p38, %p39
      %p41 = scmp.ne.s32.totalorder %s33, %s36
      %p42 = scmp.eq.s32.totalorder %s11, 0
      %p43 = por %p41, %p42
      %p44 = scmp.ne.s32.totalorder %s33, %s36
      %p45 = scmp.eq.s32.totalorder %s16, 1
      %p46 = por %p44, %p45
      %p47 = scmp.ne.s32.totalorder %s36, %s37
      %p48 = scmp.eq.s32.totalorder %s16, 0
      %p49 = por %p47, %p48
      %p50 = scmp.ne.s32.totalorder %s36, %s37
      %p51 = scmp.eq.s32.totalorder %s17, 1
      %p52 = por %p50, %p51
      %p54 = scmp.ne.s32.totalorder %s37, %s53
      %p55 = scmp.eq.s32.totalorder %s17, 0
      %p56 = por %p54, %p55
      %s58 = sadd.s32 %s57, 1
      %p61 = scmp.eq.s32.totalorder %s11, 1
      %p62 = scmp.ne.s32.totalorder %s57, %s59
      %p63 = scmp.eq.s32.totalorder %s11, 0
      %p64 = por %p62, %p63
      %p65 = scmp.ne.s32.totalorder %s57, %s59
      %p66 = scmp.eq.s32.totalorder %s16, 1
      %p67 = por %p65, %p66
      %p68 = scmp.ne.s32.totalorder %s59, %s60
      %p69 = scmp.eq.s32.totalorder %s16, 0
      %p70 = por %p68, %p69
      %p71 = scmp.ne.s32.totalorder %s59, %s60
      %p72 = scmp.eq.s32.totalorder %s17, 1
      %p73 = por %p71, %p72
      %p75 = scmp.ne.s32.totalorder %s60, %s74
      %p76 = scmp.eq.s32.totalorder %s17, 0
      %p77 = por %p75, %p76
      %s78 = ssub.s32 %s18, %s30
      %s79 = ssub.s32 %s19, %s26
      %s80 = sor.u32 %s78, %s79
      %p81 = scmp.eq.s32.totalorder %s80, 0
      %s83 = sadd.s32 %s82, 1
      %s84 = scalar_select %p81, %s82, %s83
      %p87 = pneg %p81
      %p88 = scmp.eq.s32.totalorder %s11, 1
      %p89 = por %p87, %p88
      %p90 = scmp.ne.s32.totalorder %s82, %s85
      %p91 = scmp.eq.s32.totalorder %s11, 0
      %p92 = por %p90, %p91
      %p93 = scmp.ne.s32.totalorder %s82, %s85
      %p94 = scmp.eq.s32.totalorder %s16, 1
      %p95 = por %p93, %p94
      %p96 = scmp.ne.s32.totalorder %s85, %s86
      %p97 = scmp.eq.s32.totalorder %s16, 0
      %p98 = por %p96, %p97
      %p99 = scmp.ne.s32.totalorder %s85, %s86
      %p100 = scmp.eq.s32.totalorder %s17, 1
      %p101 = por %p99, %p100
      %p103 = scmp.ne.s32.totalorder %s86, %s102
      %p104 = scmp.eq.s32.totalorder %s17, 0
      %p105 = por %p103, %p104
      %p106 = scmp.le.s32.totalorder 1, %s11
      %p107 = scmp.lt.s32.totalorder %s11, 3
      %p108 = pnand %p106, %p107
      %p109 = pneg %p108
      // Predicated region
      $region9: #{conv_relu_block5.1} parent=5 // pred_check
        _
      $region10: #{conv_relu_block5.1} parent=5 // pred_check_branch
        %111 = sbr.rel (%p108) target = $region12
      $region11: #{conv_relu_block5.1} parent=5 // pred_region
        %s112 = ssub.s32 %s11, 1
        // Predicated region
        $region13: #{conv_relu_block5.1} parent=11 // pred_check
          %p113 = pneg %p70
        $region14: #{conv_relu_block5.1} parent=11 // pred_check_branch
          %115 = sbr.rel (%p113) target = $region16
        $region15: #{conv_relu_block5.1} parent=11 // pred_region
          _
        $region16: #{conv_relu_block5.1} parent=11 // pred_fallthru
          _
      $region12: #{conv_relu_block5.1} parent=5 // pred_fallthru
        _
      %p116 = scmp.lt.s32.totalorder %s11, 2
      // Predicated region
      $region17: #{conv_relu_block5.1} parent=5 // pred_check
        %p117 = pneg %p116
      $region18: #{conv_relu_block5.1} parent=5 // pred_check_branch
        %119 = sbr.rel (%p117) target = $region20
      $region19: #{conv_relu_block5.1} parent=5 // pred_region
        // Predicated region
        $region21: #{conv_relu_block5.1} parent=19 // pred_check
          %p120 = pneg %p43
        $region22: #{conv_relu_block5.1} parent=19 // pred_check_branch
          %122 = sbr.rel (%p120) target = $region24
        $region23: #{conv_relu_block5.1} parent=19 // pred_region
          %p123 = scmp.lt.s32.totalorder %s18, 1
          %s124 = scalar_select %p123, %s18, 1
          %s125 = smul.addr %s124, 80
          %s126 = smul.addr %s125, 4
          %s127 = scalar_lea.vmem %s0, %s126
        $region24: #{conv_relu_block5.1} parent=19 // pred_fallthru
          _
      $region20: #{conv_relu_block5.1} parent=5 // pred_fallthru
        _
      %p128 = scmp.le.s32.totalorder 1, %s11
      %p129 = scmp.lt.s32.totalorder %s11, 3
      %p130 = pnand %p128, %p129
      %p131 = pneg %p130
      // Predicated region
      $region25: #{conv_relu_block5.1} parent=5 // pred_check
        _
      $region26: #{conv_relu_block5.1} parent=5 // pred_check_branch
        %133 = sbr.rel (%p130) target = $region28
      $region27: #{conv_relu_block5.1} parent=5 // pred_region
        %s134 = ssub.s32 %s11, 1
        %p135 = scmp.lt.s32.totalorder %s20, 1
        %s136 = scalar_select %p135, %s20, 1
        %s137 = smul.addr %s136, 80
        %s138 = smul.addr %s137, 4
        %s139 = scalar_lea.vmem %s0, %s138
        %p140 = pneg %p49
        %p141 = pneg %p46
        %p142 = pneg %p70
        %p143 = pneg %p67
        %p144 = pneg %p98
        %p145 = pneg %p95
        %s146 = sand.u32 %s85, 1
        %s147 = scalar_lea.sflag [#allocation4], %s146
        %s148 = sand.u32 %s85, 1
        %s149 = smul.addr %s148, 32
        %s150 = scalar_lea.vmem [#allocation3], %s149
        %p151 = scmp.lt.s32.totalorder %s20, 1
        %s152 = scalar_select %p151, %s20, 1
        %s153 = smul.addr %s152, 80
        %s154 = smul.addr %s153, 4
        %s155 = scalar_lea.vmem %s0, %s154
        %s156 = smul.u32 8, %s21
        %s157 = smul.u32 %s21, 8
        %s158 = smul.u32 %s157, 8
        %s159 = smul.addr %s158, 4
        %s160 = scalar_lea.vmem %s155, %s159
        %v161 = vld [vmem:[%s160] sm:$0xff]
        %v162 = vld [vmem:[%s160 + $0x8] sm:$0xff]
        %v163 = vld [vmem:[%s160 + $0x20] sm:$0xff]
        %v164 = vld [vmem:[%s160 + $0x28] sm:$0xff]
        %v165 = vld [vmem:[%s160 + $0x40] sm:$0xff]
        %v166 = vld [vmem:[%s160 + $0x48] sm:$0xff]
        %v167 = vld [vmem:[%s160 + $0x60] sm:$0xff]
        %v168 = vld [vmem:[%s160 + $0x68] sm:$0xff]
        %v169 = vld [vmem:[%s160 + $0x80] sm:$0xff]
        %v170 = vld [vmem:[%s160 + $0x88] sm:$0xff]
        %v171 = vld [vmem:[%s160 + $0xa0] sm:$0xff]
        %v172 = vld [vmem:[%s160 + $0xa8] sm:$0xff]
        %v173 = vld [vmem:[%s160 + $0xc0] sm:$0xff]
        %v174 = vld [vmem:[%s160 + $0xc8] sm:$0xff]
        %v175 = vld [vmem:[%s160 + $0xe0] sm:$0xff]
        %v176 = vld [vmem:[%s160 + $0xe8] sm:$0xff]
        %v177 = vld [vmem:[%s1] sm:$0xf]
        %v178 = vld [vmem:[%s1 + $0x4] sm:$0xf]
        %v179 = vld [vmem:[%s1 + $0x8] sm:$0xf]
        %v180 = vld [vmem:[%s1 + $0xc] sm:$0xf]
        %v181 = vld [vmem:[%s1 + $0x10] sm:$0xf]
        %v182 = vld [vmem:[%s1 + $0x14] sm:$0xf]
        %v183 = vld [vmem:[%s1 + $0x18] sm:$0xf]
        %v184 = vld [vmem:[%s1 + $0x1c] sm:$0xf]
        %v185 = vld [vmem:[%s1 + $0x20] sm:$0xf]
        %v186 = vld [vmem:[%s1 + $0x24] sm:$0xf]
        %v187 = vld [vmem:[%s1 + $0x28] sm:$0xf]
        %v188 = vld [vmem:[%s1 + $0x2c] sm:$0xf]
        %v189 = vld [vmem:[%s1 + $0x30] sm:$0xf]
        %v190 = vld [vmem:[%s1 + $0x34] sm:$0xf]
        %v191 = vld [vmem:[%s1 + $0x38] sm:$0xf]
        %v192 = vld [vmem:[%s1 + $0x3c] sm:$0xf]
        %v193 = vld [vmem:[%s1 + $0x40] sm:$0xf]
        %v194 = vld [vmem:[%s1 + $0x44] sm:$0xf]
        %v195 = vld [vmem:[%s1 + $0x48] sm:$0xf]
        %v196 = vld [vmem:[%s1 + $0x4c] sm:$0xf]
        %v197 = vld [vmem:[%s1 + $0x50] sm:$0xf]
        %v198 = vld [vmem:[%s1 + $0x54] sm:$0xf]
        %v199 = vld [vmem:[%s1 + $0x58] sm:$0xf]
        %v200 = vld [vmem:[%s1 + $0x5c] sm:$0xf]
        %v201 = vld [vmem:[%s1 + $0x60] sm:$0xf]
        %v202 = vld [vmem:[%s1 + $0x64] sm:$0xf]
        %v203 = vld [vmem:[%s1 + $0x68] sm:$0xf]
        %v204 = vld [vmem:[%s1 + $0x6c] sm:$0xf]
        %v205 = vld [vmem:[%s1 + $0x70] sm:$0xf]
        %v206 = vld [vmem:[%s1 + $0x74] sm:$0xf]
        %v207 = vld [vmem:[%s1 + $0x78] sm:$0xf]
        %v208 = vld [vmem:[%s1 + $0x7c] sm:$0xf]
        %v209 = vld [vmem:[%s1 + $0x80] sm:$0xf]
        %v210 = vld [vmem:[%s1 + $0x84] sm:$0xf]
        %v211 = vld [vmem:[%s1 + $0x88] sm:$0xf]
        %v212 = vld [vmem:[%s1 + $0x8c] sm:$0xf]
        %v213 = vld [vmem:[%s1 + $0x90] sm:$0xf]
        %v214 = vld [vmem:[%s1 + $0x94] sm:$0xf]
        %v215 = vld [vmem:[%s1 + $0x98] sm:$0xf]
        %v216 = vld [vmem:[%s1 + $0x9c] sm:$0xf]
        %v217 = vld [vmem:[%s1 + $0xa0] sm:$0xf]
        %v218 = vld [vmem:[%s1 + $0xa4] sm:$0xf]
        %v219 = vld [vmem:[%s1 + $0xa8] sm:$0xf]
        %v220 = vld [vmem:[%s1 + $0xac] sm:$0xf]
        %v221 = vld [vmem:[%s1 + $0xb0] sm:$0xf]
        %v222 = vld [vmem:[%s1 + $0xb4] sm:$0xf]
        %v223 = vld [vmem:[%s1 + $0xb8] sm:$0xf]
        %v224 = vld [vmem:[%s1 + $0xbc] sm:$0xf]
        %v225 = vld [vmem:[%s1 + $0xc0] sm:$0xf]
        %v226 = vld [vmem:[%s1 + $0xc4] sm:$0xf]
        %v227 = vld [vmem:[%s1 + $0xc8] sm:$0xf]
        %v228 = vld [vmem:[%s1 + $0xcc] sm:$0xf]
        %v229 = vld [vmem:[%s1 + $0xd0] sm:$0xf]
        %v230 = vld [vmem:[%s1 + $0xd4] sm:$0xf]
        %v231 = vld [vmem:[%s1 + $0xd8] sm:$0xf]
        %v232 = vld [vmem:[%s1 + $0xdc] sm:$0xf]
        %v233 = vld [vmem:[%s1 + $0xe0] sm:$0xf]
        %v234 = vld [vmem:[%s1 + $0xe4] sm:$0xf]
        %v235 = vld [vmem:[%s1 + $0xe8] sm:$0xf]
        %v236 = vld [vmem:[%s1 + $0xec] sm:$0xf]
        %v237 = vld [vmem:[%s1 + $0xf0] sm:$0xf]
        %v238 = vld [vmem:[%s1 + $0xf4] sm:$0xf]
        %v239 = vld [vmem:[%s1 + $0xf8] sm:$0xf]
        %v240 = vld [vmem:[%s1 + $0xfc] sm:$0xf]
        %v257 = vunpack.c.l.b16 %v161
        %v258 = vunpack.c.h.b16 %v161
        %v259 = vunpack.c.l.b16 %v162
        %v260 = vunpack.c.h.b16 %v162
        %v261 = vunpack.c.l.b16 %v163
        %v262 = vunpack.c.h.b16 %v163
        %v263 = vunpack.c.l.b16 %v164
        %v264 = vunpack.c.h.b16 %v164
        %v265 = vunpack.c.l.b16 %v165
        %v266 = vunpack.c.h.b16 %v165
        %v267 = vunpack.c.l.b16 %v166
        %v268 = vunpack.c.h.b16 %v166
        %v269 = vunpack.c.l.b16 %v167
        %v270 = vunpack.c.h.b16 %v167
        %v271 = vunpack.c.l.b16 %v168
        %v272 = vunpack.c.h.b16 %v168
        %v273 = vunpack.c.l.b16 %v169
        %v274 = vunpack.c.h.b16 %v169
        %v275 = vunpack.c.l.b16 %v170
        %v276 = vunpack.c.h.b16 %v170
        %v277 = vunpack.c.l.b16 %v171
        %v278 = vunpack.c.h.b16 %v171
        %v279 = vunpack.c.l.b16 %v172
        %v280 = vunpack.c.h.b16 %v172
        %v281 = vunpack.c.l.b16 %v173
        %v282 = vunpack.c.h.b16 %v173
        %v283 = vunpack.c.l.b16 %v174
        %v284 = vunpack.c.h.b16 %v174
        %v285 = vunpack.c.l.b16 %v175
        %v286 = vunpack.c.h.b16 %v175
        %v287 = vunpack.c.l.b16 %v176
        %v288 = vunpack.c.h.b16 %v176
        %v289 = vpack.c.b16 %v261, %v257
        %v290 = vpack.c.b16 %v262, %v258
        %v291 = vpack.c.b16 %v263, %v259
        %v292 = vpack.c.b16 %v264, %v260
        %v293 = vpack.c.b16 %v269, %v265
        %v294 = vpack.c.b16 %v270, %v266
        %v295 = vpack.c.b16 %v271, %v267
        %v296 = vpack.c.b16 %v272, %v268
        %v297 = vpack.c.b16 %v277, %v273
        %v298 = vpack.c.b16 %v278, %v274
        %v299 = vpack.c.b16 %v279, %v275
        %v300 = vpack.c.b16 %v280, %v276
        %v301 = vpack.c.b16 %v285, %v281
        %v302 = vpack.c.b16 %v286, %v282
        %v303 = vpack.c.b16 %v287, %v283
        %v304 = vpack.c.b16 %v288, %v284
        %v385 = vunpack.c.l.b16 %v177
        %v386 = vunpack.c.l.b16 %v178
        %v387 = vunpack.c.l.b16 %v179
        %v388 = vunpack.c.l.b16 %v180
        %v389 = vunpack.c.l.b16 %v181
        %v390 = vunpack.c.l.b16 %v182
        %v391 = vunpack.c.l.b16 %v183
        %v392 = vunpack.c.l.b16 %v184
        %v393 = vunpack.c.l.b16 %v185
        %v394 = vunpack.c.l.b16 %v186
        %v395 = vunpack.c.l.b16 %v187
        %v396 = vunpack.c.l.b16 %v188
        %v397 = vunpack.c.l.b16 %v189
        %v398 = vunpack.c.l.b16 %v190
        %v399 = vunpack.c.l.b16 %v191
        %v400 = vunpack.c.l.b16 %v192
        %v401 = vunpack.c.l.b16 %v193
        %v402 = vunpack.c.l.b16 %v194
        %v403 = vunpack.c.l.b16 %v195
        %v404 = vunpack.c.l.b16 %v196
        %v405 = vunpack.c.l.b16 %v197
        %v406 = vunpack.c.l.b16 %v198
        %v407 = vunpack.c.l.b16 %v199
        %v408 = vunpack.c.l.b16 %v200
        %v409 = vunpack.c.l.b16 %v201
        %v410 = vunpack.c.l.b16 %v202
        %v411 = vunpack.c.l.b16 %v203
        %v412 = vunpack.c.l.b16 %v204
        %v413 = vunpack.c.l.b16 %v205
        %v414 = vunpack.c.l.b16 %v206
        %v415 = vunpack.c.l.b16 %v207
        %v416 = vunpack.c.l.b16 %v208
        %v417 = vunpack.c.l.b16 %v209
        %v418 = vunpack.c.l.b16 %v210
        %v419 = vunpack.c.l.b16 %v211
        %v420 = vunpack.c.l.b16 %v212
        %v421 = vunpack.c.l.b16 %v213
        %v422 = vunpack.c.l.b16 %v214
        %v423 = vunpack.c.l.b16 %v215
        %v424 = vunpack.c.l.b16 %v216
        %v425 = vunpack.c.l.b16 %v217
        %v426 = vunpack.c.l.b16 %v218
        %v427 = vunpack.c.l.b16 %v219
        %v428 = vunpack.c.l.b16 %v220
        %v429 = vunpack.c.l.b16 %v221
        %v430 = vunpack.c.l.b16 %v222
        %v431 = vunpack.c.l.b16 %v223
        %v432 = vunpack.c.l.b16 %v224
        %v433 = vunpack.c.l.b16 %v225
        %v434 = vunpack.c.l.b16 %v226
        %v435 = vunpack.c.l.b16 %v227
        %v436 = vunpack.c.l.b16 %v228
        %v437 = vunpack.c.l.b16 %v229
        %v438 = vunpack.c.l.b16 %v230
        %v439 = vunpack.c.l.b16 %v231
        %v440 = vunpack.c.l.b16 %v232
        %v441 = vunpack.c.l.b16 %v233
        %v442 = vunpack.c.l.b16 %v234
        %v443 = vunpack.c.l.b16 %v235
        %v444 = vunpack.c.l.b16 %v236
        %v445 = vunpack.c.l.b16 %v237
        %v446 = vunpack.c.l.b16 %v238
        %v447 = vunpack.c.l.b16 %v239
        %v448 = vunpack.c.l.b16 %v240
        %v449 = vpack.c.b16 %v386, %v385
        %v450 = vpack.c.b16 %v388, %v387
        %v451 = vpack.c.b16 %v390, %v389
        %v452 = vpack.c.b16 %v392, %v391
        %v453 = vpack.c.b16 %v394, %v393
        %v454 = vpack.c.b16 %v396, %v395
        %v455 = vpack.c.b16 %v398, %v397
        %v456 = vpack.c.b16 %v400, %v399
        %v457 = vpack.c.b16 %v402, %v401
        %v458 = vpack.c.b16 %v404, %v403
        %v459 = vpack.c.b16 %v406, %v405
        %v460 = vpack.c.b16 %v408, %v407
        %v461 = vpack.c.b16 %v410, %v409
        %v462 = vpack.c.b16 %v412, %v411
        %v463 = vpack.c.b16 %v414, %v413
        %v464 = vpack.c.b16 %v416, %v415
        %v465 = vpack.c.b16 %v418, %v417
        %v466 = vpack.c.b16 %v420, %v419
        %v467 = vpack.c.b16 %v422, %v421
        %v468 = vpack.c.b16 %v424, %v423
        %v469 = vpack.c.b16 %v426, %v425
        %v470 = vpack.c.b16 %v428, %v427
        %v471 = vpack.c.b16 %v430, %v429
        %v472 = vpack.c.b16 %v432, %v431
        %v473 = vpack.c.b16 %v434, %v433
        %v474 = vpack.c.b16 %v436, %v435
        %v475 = vpack.c.b16 %v438, %v437
        %v476 = vpack.c.b16 %v440, %v439
        %v477 = vpack.c.b16 %v442, %v441
        %v478 = vpack.c.b16 %v444, %v443
        %v479 = vpack.c.b16 %v446, %v445
        %v480 = vpack.c.b16 %v448, %v447
        %513 = vmatpush.bf16.msra.mxu0 %v456
        %514 = vmatpush.bf16.msra.mxu0 %v455
        %515 = vmatpush.bf16.msra.mxu0 %v454
        %516 = vmatpush.bf16.msra.mxu0 %v453
        %517 = vmatpush.bf16.msra.mxu0 %v452
        %518 = vmatpush.bf16.msra.mxu0 %v451
        %519 = vmatpush.bf16.msra.mxu0 %v450
        %520 = vmatpush.bf16.msra.mxu0 %v449
        %521 = vmatmul.bf16.gmra.mxu0 %v289
        %v522 = vpop.f32.mrf.mxu0
        %v523 = vadd.f32 0.0, %v522
        %v524 = vpop.f32.mrf.mxu0
        %v525 = vadd.f32 0.0, %v524
        %526 = vmatmul.bf16.gmra.mxu0 %v293
        %v527 = vpop.f32.mrf.mxu0
        %v528 = vadd.f32 0.0, %v527
        %v529 = vpop.f32.mrf.mxu0
        %v530 = vadd.f32 0.0, %v529
        %531 = vmatmul.bf16.gmra.mxu0 %v297
        %v532 = vpop.f32.mrf.mxu0
        %v533 = vadd.f32 0.0, %v532
        %v534 = vpop.f32.mrf.mxu0
        %v535 = vadd.f32 0.0, %v534
        %536 = vmatmul.bf16.gmra.mxu0 %v301
        %v537 = vpop.f32.mrf.mxu0
        %v538 = vadd.f32 0.0, %v537
        %v539 = vpop.f32.mrf.mxu0
        %v540 = vadd.f32 0.0, %v539
        %541 = vdwg.mxu0
        %542 = vmatpush.bf16.msra.mxu0 %v464
        %543 = vmatpush.bf16.msra.mxu0 %v463
        %544 = vmatpush.bf16.msra.mxu0 %v462
        %545 = vmatpush.bf16.msra.mxu0 %v461
        %546 = vmatpush.bf16.msra.mxu0 %v460
        %547 = vmatpush.bf16.msra.mxu0 %v459
        %548 = vmatpush.bf16.msra.mxu0 %v458
        %549 = vmatpush.bf16.msra.mxu0 %v457
        %550 = vmatmul.bf16.gmra.mxu0 %v290
        %v551 = vpop.f32.mrf.mxu0
        %v552 = vadd.f32 %v523, %v551
        %v553 = vpop.f32.mrf.mxu0
        %v554 = vadd.f32 %v525, %v553
        %555 = vmatmul.bf16.gmra.mxu0 %v294
        %v556 = vpop.f32.mrf.mxu0
        %v557 = vadd.f32 %v528, %v556
        %v558 = vpop.f32.mrf.mxu0
        %v559 = vadd.f32 %v530, %v558
        %560 = vmatmul.bf16.gmra.mxu0 %v298
        %v561 = vpop.f32.mrf.mxu0
        %v562 = vadd.f32 %v533, %v561
        %v563 = vpop.f32.mrf.mxu0
        %v564 = vadd.f32 %v535, %v563
        %565 = vmatmul.bf16.gmra.mxu0 %v302
        %v566 = vpop.f32.mrf.mxu0
        %v567 = vadd.f32 %v538, %v566
        %v568 = vpop.f32.mrf.mxu0
        %v569 = vadd.f32 %v540, %v568
        %570 = vdwg.mxu0
        %571 = vmatpush.bf16.msra.mxu0 %v472
        %572 = vmatpush.bf16.msra.mxu0 %v471
        %573 = vmatpush.bf16.msra.mxu0 %v470
        %574 = vmatpush.bf16.msra.mxu0 %v469
        %575 = vmatpush.bf16.msra.mxu0 %v468
        %576 = vmatpush.bf16.msra.mxu0 %v467
        %577 = vmatpush.bf16.msra.mxu0 %v466
        %578 = vmatpush.bf16.msra.mxu0 %v465
        %579 = vmatmul.bf16.gmra.mxu0 %v291
        %v580 = vpop.f32.mrf.mxu0
        %v581 = vadd.f32 %v552, %v580
        %v582 = vpop.f32.mrf.mxu0
        %v583 = vadd.f32 %v554, %v582
        %584 = vmatmul.bf16.gmra.mxu0 %v295
        %v585 = vpop.f32.mrf.mxu0
        %v586 = vadd.f32 %v557, %v585
        %v587 = vpop.f32.mrf.mxu0
        %v588 = vadd.f32 %v559, %v587
        %589 = vmatmul.bf16.gmra.mxu0 %v299
        %v590 = vpop.f32.mrf.mxu0
        %v591 = vadd.f32 %v562, %v590
        %v592 = vpop.f32.mrf.mxu0
        %v593 = vadd.f32 %v564, %v592
        %594 = vmatmul.bf16.gmra.mxu0 %v303
        %v595 = vpop.f32.mrf.mxu0
        %v596 = vadd.f32 %v567, %v595
        %v597 = vpop.f32.mrf.mxu0
        %v598 = vadd.f32 %v569, %v597
        %599 = vdwg.mxu0
        %600 = vmatpush.bf16.msra.mxu0 %v480
        %601 = vmatpush.bf16.msra.mxu0 %v479
        %602 = vmatpush.bf16.msra.mxu0 %v478
        %603 = vmatpush.bf16.msra.mxu0 %v477
        %604 = vmatpush.bf16.msra.mxu0 %v476
        %605 = vmatpush.bf16.msra.mxu0 %v475
        %606 = vmatpush.bf16.msra.mxu0 %v474
        %607 = vmatpush.bf16.msra.mxu0 %v473
        %608 = vmatmul.bf16.gmra.mxu0 %v292
        %v609 = vpop.f32.mrf.mxu0
        %v610 = vadd.f32 %v581, %v609
        %v611 = vpop.f32.mrf.mxu0
        %v612 = vadd.f32 %v583, %v611
        %613 = vmatmul.bf16.gmra.mxu0 %v296
        %v614 = vpop.f32.mrf.mxu0
        %v615 = vadd.f32 %v586, %v614
        %v616 = vpop.f32.mrf.mxu0
        %v617 = vadd.f32 %v588, %v616
        %618 = vmatmul.bf16.gmra.mxu0 %v300
        %v619 = vpop.f32.mrf.mxu0
        %v620 = vadd.f32 %v591, %v619
        %v621 = vpop.f32.mrf.mxu0
        %v622 = vadd.f32 %v593, %v621
        %623 = vmatmul.bf16.gmra.mxu0 %v304
        %v624 = vpop.f32.mrf.mxu0
        %v625 = vadd.f32 %v596, %v624
        %v626 = vpop.f32.mrf.mxu0
        %v627 = vadd.f32 %v598, %v626
        %628 = vdwg.mxu0
        %629 = vst [vmem:[#allocation2] sm:$0xff] %v610
        %630 = vst [vmem:[#allocation2 + $0x8] sm:$0xff] %v612
        %631 = vst [vmem:[#allocation2 + $0x10] sm:$0xff] %v615
        %632 = vst [vmem:[#allocation2 + $0x18] sm:$0xff] %v617
        %633 = vst [vmem:[#allocation2 + $0x20] sm:$0xff] %v620
        %634 = vst [vmem:[#allocation2 + $0x28] sm:$0xff] %v622
        %635 = vst [vmem:[#allocation2 + $0x30] sm:$0xff] %v625
        %636 = vst [vmem:[#allocation2 + $0x38] sm:$0xff] %v627
        %v637 = vld [vmem:[%s160] sm:$0xff]
        %v638 = vld [vmem:[%s160 + $0x8] sm:$0xff]
        %v639 = vld [vmem:[%s160 + $0x10] sm:$0x11]
        %v640 = vld [vmem:[%s160 + $0x18] sm:$0x11]
        %v641 = vld [vmem:[%s160 + $0x20] sm:$0xff]
        %v642 = vld [vmem:[%s160 + $0x28] sm:$0xff]
        %v643 = vld [vmem:[%s160 + $0x30] sm:$0x11]
        %v644 = vld [vmem:[%s160 + $0x38] sm:$0x11]
        %v645 = vld [vmem:[%s160 + $0x40] sm:$0xff]
        %v646 = vld [vmem:[%s160 + $0x48] sm:$0xff]
        %v647 = vld [vmem:[%s160 + $0x50] sm:$0x11]
        %v648 = vld [vmem:[%s160 + $0x58] sm:$0x11]
        %v649 = vld [vmem:[%s160 + $0x60] sm:$0xff]
        %v650 = vld [vmem:[%s160 + $0x68] sm:$0xff]
        %v651 = vld [vmem:[%s160 + $0x70] sm:$0x11]
        %v652 = vld [vmem:[%s160 + $0x78] sm:$0x11]
        %v653 = vld [vmem:[%s160 + $0x80] sm:$0xff]
        %v654 = vld [vmem:[%s160 + $0x88] sm:$0xff]
        %v655 = vld [vmem:[%s160 + $0x90] sm:$0x11]
        %v656 = vld [vmem:[%s160 + $0x98] sm:$0x11]
        %v657 = vld [vmem:[%s160 + $0xa0] sm:$0xff]
        %v658 = vld [vmem:[%s160 + $0xa8] sm:$0xff]
        %v659 = vld [vmem:[%s160 + $0xb0] sm:$0x11]
        %v660 = vld [vmem:[%s160 + $0xb8] sm:$0x11]
        %v661 = vld [vmem:[%s160 + $0xc0] sm:$0xff]
        %v662 = vld [vmem:[%s160 + $0xc8] sm:$0xff]
        %v663 = vld [vmem:[%s160 + $0xd0] sm:$0x11]
        %v664 = vld [vmem:[%s160 + $0xd8] sm:$0x11]
        %v665 = vld [vmem:[%s160 + $0xe0] sm:$0xff]
        %v666 = vld [vmem:[%s160 + $0xe8] sm:$0xff]
        %v667 = vld [vmem:[%s160 + $0xf0] sm:$0x11]
        %v668 = vld [vmem:[%s160 + $0xf8] sm:$0x11]
        %vm669 = vsmask.f32 3328
        %vm670 = vsmask.f32 7440
        %vm671 = vmor %vm669, %vm670
        %v673 = vshrl.u32 %v637, 16
        %v675 = vrot.slane %v673, 4
        %v676 = vshll.u32 %v637, 16
        %v678 = vrot.slane %v676, 5
        %v679 = vor.u32 %v675, %v678
        %v680 = vrot.slane %v679, 4
        %v682 = vshll.u32 %v639, 16
        %v684 = vrot.slane %v682, 5
        %v685 = vsel %vm671, %v680, %v684
        %v687 = vshrl.u32 %v638, 16
        %v689 = vrot.slane %v687, 4
        %v690 = vshll.u32 %v638, 16
        %v692 = vrot.slane %v690, 5
        %v693 = vor.u32 %v689, %v692
        %v694 = vrot.slane %v693, 4
        %v696 = vshll.u32 %v640, 16
        %v698 = vrot.slane %v696, 5
        %v699 = vsel %vm671, %v694, %v698
        %v701 = vshrl.u32 %v641, 16
        %v703 = vrot.slane %v701, 4
        %v704 = vshll.u32 %v641, 16
        %v706 = vrot.slane %v704, 5
        %v707 = vor.u32 %v703, %v706
        %v708 = vrot.slane %v707, 4
        %v710 = vshll.u32 %v643, 16
        %v712 = vrot.slane %v710, 5
        %v713 = vsel %vm671, %v708, %v712
        %v715 = vshrl.u32 %v642, 16
        %v717 = vrot.slane %v715, 4
        %v718 = vshll.u32 %v642, 16
        %v720 = vrot.slane %v718, 5
        %v721 = vor.u32 %v717, %v720
        %v722 = vrot.slane %v721, 4
        %v724 = vshll.u32 %v644, 16
        %v726 = vrot.slane %v724, 5
        %v727 = vsel %vm671, %v722, %v726
        %v729 = vshrl.u32 %v645, 16
        %v731 = vrot.slane %v729, 4
        %v732 = vshll.u32 %v645, 16
        %v734 = vrot.slane %v732, 5
        %v735 = vor.u32 %v731, %v734
        %v736 = vrot.slane %v735, 4
        %v738 = vshll.u32 %v647, 16
        %v740 = vrot.slane %v738, 5
        %v741 = vsel %vm671, %v736, %v740
        %v743 = vshrl.u32 %v646, 16
        %v745 = vrot.slane %v743, 4
        %v746 = vshll.u32 %v646, 16
        %v748 = vrot.slane %v746, 5
        %v749 = vor.u32 %v745, %v748
        %v750 = vrot.slane %v749, 4
        %v752 = vshll.u32 %v648, 16
        %v754 = vrot.slane %v752, 5
        %v755 = vsel %vm671, %v750, %v754
        %v757 = vshrl.u32 %v649, 16
        %v759 = vrot.slane %v757, 4
        %v760 = vshll.u32 %v649, 16
        %v762 = vrot.slane %v760, 5
        %v763 = vor.u32 %v759, %v762
        %v764 = vrot.slane %v763, 4
        %v766 = vshll.u32 %v651, 16
        %v768 = vrot.slane %v766, 5
        %v769 = vsel %vm671, %v764, %v768
        %v771 = vshrl.u32 %v650, 16
        %v773 = vrot.slane %v771, 4
        %v774 = vshll.u32 %v650, 16
        %v776 = vrot.slane %v774, 5
        %v777 = vor.u32 %v773, %v776
        %v778 = vrot.slane %v777, 4
        %v780 = vshll.u32 %v652, 16
        %v782 = vrot.slane %v780, 5
        %v783 = vsel %vm671, %v778, %v782
        %v785 = vshrl.u32 %v653, 16
        %v787 = vrot.slane %v785, 4
        %v788 = vshll.u32 %v653, 16
        %v790 = vrot.slane %v788, 5
        %v791 = vor.u32 %v787, %v790
        %v792 = vrot.slane %v791, 4
        %v794 = vshll.u32 %v655, 16
        %v796 = vrot.slane %v794, 5
        %v797 = vsel %vm671, %v792, %v796
        %v799 = vshrl.u32 %v654, 16
        %v801 = vrot.slane %v799, 4
        %v802 = vshll.u32 %v654, 16
        %v804 = vrot.slane %v802, 5
        %v805 = vor.u32 %v801, %v804
        %v806 = vrot.slane %v805, 4
        %v808 = vshll.u32 %v656, 16
        %v810 = vrot.slane %v808, 5
        %v811 = vsel %vm671, %v806, %v810
        %v813 = vshrl.u32 %v657, 16
        %v815 = vrot.slane %v813, 4
        %v816 = vshll.u32 %v657, 16
        %v818 = vrot.slane %v816, 5
        %v819 = vor.u32 %v815, %v818
        %v820 = vrot.slane %v819, 4
        %v822 = vshll.u32 %v659, 16
        %v824 = vrot.slane %v822, 5
        %v825 = vsel %vm671, %v820, %v824
        %v827 = vshrl.u32 %v658, 16
        %v829 = vrot.slane %v827, 4
        %v830 = vshll.u32 %v658, 16
        %v832 = vrot.slane %v830, 5
        %v833 = vor.u32 %v829, %v832
        %v834 = vrot.slane %v833, 4
        %v836 = vshll.u32 %v660, 16
        %v838 = vrot.slane %v836, 5
        %v839 = vsel %vm671, %v834, %v838
        %v841 = vshrl.u32 %v661, 16
        %v843 = vrot.slane %v841, 4
        %v844 = vshll.u32 %v661, 16
        %v846 = vrot.slane %v844, 5
        %v847 = vor.u32 %v843, %v846
        %v848 = vrot.slane %v847, 4
        %v850 = vshll.u32 %v663, 16
        %v852 = vrot.slane %v850, 5
        %v853 = vsel %vm671, %v848, %v852
        %v855 = vshrl.u32 %v662, 16
        %v857 = vrot.slane %v855, 4
        %v858 = vshll.u32 %v662, 16
        %v860 = vrot.slane %v858, 5
        %v861 = vor.u32 %v857, %v860
        %v862 = vrot.slane %v861, 4
        %v864 = vshll.u32 %v664, 16
        %v866 = vrot.slane %v864, 5
        %v867 = vsel %vm671, %v862, %v866
        %v869 = vshrl.u32 %v665, 16
        %v871 = vrot.slane %v869, 4
        %v872 = vshll.u32 %v665, 16
        %v874 = vrot.slane %v872, 5
        %v875 = vor.u32 %v871, %v874
        %v876 = vrot.slane %v875, 4
        %v878 = vshll.u32 %v667, 16
        %v880 = vrot.slane %v878, 5
        %v881 = vsel %vm671, %v876, %v880
        %v883 = vshrl.u32 %v666, 16
        %v885 = vrot.slane %v883, 4
        %v886 = vshll.u32 %v666, 16
        %v888 = vrot.slane %v886, 5
        %v889 = vor.u32 %v885, %v888
        %v890 = vrot.slane %v889, 4
        %v892 = vshll.u32 %v668, 16
        %v894 = vrot.slane %v892, 5
        %v895 = vsel %vm671, %v890, %v894
        %v896 = vld [vmem:[%s1 + $0x100] sm:$0xf]
        %v897 = vld [vmem:[%s1 + $0x104] sm:$0xf]
        %v898 = vld [vmem:[%s1 + $0x108] sm:$0xf]
        %v899 = vld [vmem:[%s1 + $0x10c] sm:$0xf]
        %v900 = vld [vmem:[%s1 + $0x110] sm:$0xf]
        %v901 = vld [vmem:[%s1 + $0x114] sm:$0xf]
        %v902 = vld [vmem:[%s1 + $0x118] sm:$0xf]
        %v903 = vld [vmem:[%s1 + $0x11c] sm:$0xf]
        %v904 = vld [vmem:[%s1 + $0x120] sm:$0xf]
        %v905 = vld [vmem:[%s1 + $0x124] sm:$0xf]
        %v906 = vld [vmem:[%s1 + $0x128] sm:$0xf]
        %v907 = vld [vmem:[%s1 + $0x12c] sm:$0xf]
        %v908 = vld [vmem:[%s1 + $0x130] sm:$0xf]
        %v909 = vld [vmem:[%s1 + $0x134] sm:$0xf]
        %v910 = vld [vmem:[%s1 + $0x138] sm:$0xf]
        %v911 = vld [vmem:[%s1 + $0x13c] sm:$0xf]
        %v912 = vld [vmem:[%s1 + $0x140] sm:$0xf]
        %v913 = vld [vmem:[%s1 + $0x144] sm:$0xf]
        %v914 = vld [vmem:[%s1 + $0x148] sm:$0xf]
        %v915 = vld [vmem:[%s1 + $0x14c] sm:$0xf]
        %v916 = vld [vmem:[%s1 + $0x150] sm:$0xf]
        %v917 = vld [vmem:[%s1 + $0x154] sm:$0xf]
        %v918 = vld [vmem:[%s1 + $0x158] sm:$0xf]
        %v919 = vld [vmem:[%s1 + $0x15c] sm:$0xf]
        %v920 = vld [vmem:[%s1 + $0x160] sm:$0xf]
        %v921 = vld [vmem:[%s1 + $0x164] sm:$0xf]
        %v922 = vld [vmem:[%s1 + $0x168] sm:$0xf]
        %v923 = vld [vmem:[%s1 + $0x16c] sm:$0xf]
        %v924 = vld [vmem:[%s1 + $0x170] sm:$0xf]
        %v925 = vld [vmem:[%s1 + $0x174] sm:$0xf]
        %v926 = vld [vmem:[%s1 + $0x178] sm:$0xf]
        %v927 = vld [vmem:[%s1 + $0x17c] sm:$0xf]
        %v928 = vld [vmem:[%s1 + $0x180] sm:$0xf]
        %v929 = vld [vmem:[%s1 + $0x184] sm:$0xf]
        %v930 = vld [vmem:[%s1 + $0x188] sm:$0xf]
        %v931 = vld [vmem:[%s1 + $0x18c] sm:$0xf]
        %v932 = vld [vmem:[%s1 + $0x190] sm:$0xf]
        %v933 = vld [vmem:[%s1 + $0x194] sm:$0xf]
        %v934 = vld [vmem:[%s1 + $0x198] sm:$0xf]
        %v935 = vld [vmem:[%s1 + $0x19c] sm:$0xf]
        %v936 = vld [vmem:[%s1 + $0x1a0] sm:$0xf]
        %v937 = vld [vmem:[%s1 + $0x1a4] sm:$0xf]
        %v938 = vld [vmem:[%s1 + $0x1a8] sm:$0xf]
        %v939 = vld [vmem:[%s1 + $0x1ac] sm:$0xf]
        %v940 = vld [vmem:[%s1 + $0x1b0] sm:$0xf]
        %v941 = vld [vmem:[%s1 + $0x1b4] sm:$0xf]
        %v942 = vld [vmem:[%s1 + $0x1b8] sm:$0xf]
        %v943 = vld [vmem:[%s1 + $0x1bc] sm:$0xf]
        %v944 = vld [vmem:[%s1 + $0x1c0] sm:$0xf]
        %v945 = vld [vmem:[%s1 + $0x1c4] sm:$0xf]
        %v946 = vld [vmem:[%s1 + $0x1c8] sm:$0xf]
        %v947 = vld [vmem:[%s1 + $0x1cc] sm:$0xf]
        %v948 = vld [vmem:[%s1 + $0x1d0] sm:$0xf]
        %v949 = vld [vmem:[%s1 + $0x1d4] sm:$0xf]
        %v950 = vld [vmem:[%s1 + $0x1d8] sm:$0xf]
        %v951 = vld [vmem:[%s1 + $0x1dc] sm:$0xf]
        %v952 = vld [vmem:[%s1 + $0x1e0] sm:$0xf]
        %v953 = vld [vmem:[%s1 + $0x1e4] sm:$0xf]
        %v954 = vld [vmem:[%s1 + $0x1e8] sm:$0xf]
        %v955 = vld [vmem:[%s1 + $0x1ec] sm:$0xf]
        %v956 = vld [vmem:[%s1 + $0x1f0] sm:$0xf]
        %v957 = vld [vmem:[%s1 + $0x1f4] sm:$0xf]
        %v958 = vld [vmem:[%s1 + $0x1f8] sm:$0xf]
        %v959 = vld [vmem:[%s1 + $0x1fc] sm:$0xf]
        %v960 = vunpack.c.l.b16 %v685
        %v961 = vunpack.c.h.b16 %v685
        %v962 = vunpack.c.l.b16 %v699
        %v963 = vunpack.c.h.b16 %v699
        %v964 = vunpack.c.l.b16 %v713
        %v965 = vunpack.c.h.b16 %v713
        %v966 = vunpack.c.l.b16 %v727
        %v967 = vunpack.c.h.b16 %v727
        %v968 = vunpack.c.l.b16 %v741
        %v969 = vunpack.c.h.b16 %v741
        %v970 = vunpack.c.l.b16 %v755
        %v971 = vunpack.c.h.b16 %v755
        %v972 = vunpack.c.l.b16 %v769
        %v973 = vunpack.c.h.b16 %v769
        %v974 = vunpack.c.l.b16 %v783
        %v975 = vunpack.c.h.b16 %v783
        %v976 = vunpack.c.l.b16 %v797
        %v977 = vunpack.c.h.b16 %v797
        %v978 = vunpack.c.l.b16 %v811
        %v979 = vunpack.c.h.b16 %v811
        %v980 = vunpack.c.l.b16 %v825
        %v981 = vunpack.c.h.b16 %v825
        %v982 = vunpack.c.l.b16 %v839
        %v983 = vunpack.c.h.b16 %v839
        %v984 = vunpack.c.l.b16 %v853
        %v985 = vunpack.c.h.b16 %v853
        %v986 = vunpack.c.l.b16 %v867
        %v987 = vunpack.c.h.b16 %v867
        %v988 = vunpack.c.l.b16 %v881
        %v989 = vunpack.c.h.b16 %v881
        %v990 = vunpack.c.l.b16 %v895
        %v991 = vunpack.c.h.b16 %v895
        %v992 = vpack.c.b16 %v964, %v960
        %v993 = vpack.c.b16 %v965, %v961
        %v994 = vpack.c.b16 %v966, %v962
        %v995 = vpack.c.b16 %v967, %v963
        %v996 = vpack.c.b16 %v972, %v968
        %v997 = vpack.c.b16 %v973, %v969
        %v998 = vpack.c.b16 %v974, %v970
        %v999 = vpack.c.b16 %v975, %v971
        %v1000 = vpack.c.b16 %v980, %v976
        %v1001 = vpack.c.b16 %v981, %v977
        %v1002 = vpack.c.b16 %v982, %v978
        %v1003 = vpack.c.b16 %v983, %v979
        %v1004 = vpack.c.b16 %v988, %v984
        %v1005 = vpack.c.b16 %v989, %v985
        %v1006 = vpack.c.b16 %v990, %v986
        %v1007 = vpack.c.b16 %v991, %v987
        %v1088 = vunpack.c.l.b16 %v896
        %v1089 = vunpack.c.l.b16 %v897
        %v1090 = vunpack.c.l.b16 %v898
        %v1091 = vunpack.c.l.b16 %v899
        %v1092 = vunpack.c.l.b16 %v900
        %v1093 = vunpack.c.l.b16 %v901
        %v1094 = vunpack.c.l.b16 %v902
        %v1095 = vunpack.c.l.b16 %v903
        %v1096 = vunpack.c.l.b16 %v904
        %v1097 = vunpack.c.l.b16 %v905
        %v1098 = vunpack.c.l.b16 %v906
        %v1099 = vunpack.c.l.b16 %v907
        %v1100 = vunpack.c.l.b16 %v908
        %v1101 = vunpack.c.l.b16 %v909
        %v1102 = vunpack.c.l.b16 %v910
        %v1103 = vunpack.c.l.b16 %v911
        %v1104 = vunpack.c.l.b16 %v912
        %v1105 = vunpack.c.l.b16 %v913
        %v1106 = vunpack.c.l.b16 %v914
        %v1107 = vunpack.c.l.b16 %v915
        %v1108 = vunpack.c.l.b16 %v916
        %v1109 = vunpack.c.l.b16 %v917
        %v1110 = vunpack.c.l.b16 %v918
        %v1111 = vunpack.c.l.b16 %v919
        %v1112 = vunpack.c.l.b16 %v920
        %v1113 = vunpack.c.l.b16 %v921
        %v1114 = vunpack.c.l.b16 %v922
        %v1115 = vunpack.c.l.b16 %v923
        %v1116 = vunpack.c.l.b16 %v924
        %v1117 = vunpack.c.l.b16 %v925
        %v1118 = vunpack.c.l.b16 %v926
        %v1119 = vunpack.c.l.b16 %v927
        %v1120 = vunpack.c.l.b16 %v928
        %v1121 = vunpack.c.l.b16 %v929
        %v1122 = vunpack.c.l.b16 %v930
        %v1123 = vunpack.c.l.b16 %v931
        %v1124 = vunpack.c.l.b16 %v932
        %v1125 = vunpack.c.l.b16 %v933
        %v1126 = vunpack.c.l.b16 %v934
        %v1127 = vunpack.c.l.b16 %v935
        %v1128 = vunpack.c.l.b16 %v936
        %v1129 = vunpack.c.l.b16 %v937
        %v1130 = vunpack.c.l.b16 %v938
        %v1131 = vunpack.c.l.b16 %v939
        %v1132 = vunpack.c.l.b16 %v940
        %v1133 = vunpack.c.l.b16 %v941
        %v1134 = vunpack.c.l.b16 %v942
        %v1135 = vunpack.c.l.b16 %v943
        %v1136 = vunpack.c.l.b16 %v944
        %v1137 = vunpack.c.l.b16 %v945
        %v1138 = vunpack.c.l.b16 %v946
        %v1139 = vunpack.c.l.b16 %v947
        %v1140 = vunpack.c.l.b16 %v948
        %v1141 = vunpack.c.l.b16 %v949
        %v1142 = vunpack.c.l.b16 %v950
        %v1143 = vunpack.c.l.b16 %v951
        %v1144 = vunpack.c.l.b16 %v952
        %v1145 = vunpack.c.l.b16 %v953
        %v1146 = vunpack.c.l.b16 %v954
        %v1147 = vunpack.c.l.b16 %v955
        %v1148 = vunpack.c.l.b16 %v956
        %v1149 = vunpack.c.l.b16 %v957
        %v1150 = vunpack.c.l.b16 %v958
        %v1151 = vunpack.c.l.b16 %v959
        %v1152 = vpack.c.b16 %v1089, %v1088
        %v1153 = vpack.c.b16 %v1091, %v1090
        %v1154 = vpack.c.b16 %v1093, %v1092
        %v1155 = vpack.c.b16 %v1095, %v1094
        %v1156 = vpack.c.b16 %v1097, %v1096
        %v1157 = vpack.c.b16 %v1099, %v1098
        %v1158 = vpack.c.b16 %v1101, %v1100
        %v1159 = vpack.c.b16 %v1103, %v1102
        %v1160 = vpack.c.b16 %v1105, %v1104
        %v1161 = vpack.c.b16 %v1107, %v1106
        %v1162 = vpack.c.b16 %v1109, %v1108
        %v1163 = vpack.c.b16 %v1111, %v1110
        %v1164 = vpack.c.b16 %v1113, %v1112
        %v1165 = vpack.c.b16 %v1115, %v1114
        %v1166 = vpack.c.b16 %v1117, %v1116
        %v1167 = vpack.c.b16 %v1119, %v1118
        %v1168 = vpack.c.b16 %v1121, %v1120
        %v1169 = vpack.c.b16 %v1123, %v1122
        %v1170 = vpack.c.b16 %v1125, %v1124
        %v1171 = vpack.c.b16 %v1127, %v1126
        %v1172 = vpack.c.b16 %v1129, %v1128
        %v1173 = vpack.c.b16 %v1131, %v1130
        %v1174 = vpack.c.b16 %v1133, %v1132
        %v1175 = vpack.c.b16 %v1135, %v1134
        %v1176 = vpack.c.b16 %v1137, %v1136
        %v1177 = vpack.c.b16 %v1139, %v1138
        %v1178 = vpack.c.b16 %v1141, %v1140
        %v1179 = vpack.c.b16 %v1143, %v1142
        %v1180 = vpack.c.b16 %v1145, %v1144
        %v1181 = vpack.c.b16 %v1147, %v1146
        %v1182 = vpack.c.b16 %v1149, %v1148
        %v1183 = vpack.c.b16 %v1151, %v1150
        %1216 = vmatpush.bf16.msra.mxu0 %v1159
        %1217 = vmatpush.bf16.msra.mxu0 %v1158
        %1218 = vmatpush.bf16.msra.mxu0 %v1157
        %1219 = vmatpush.bf16.msra.mxu0 %v1156
        %1220 = vmatpush.bf16.msra.mxu0 %v1155
        %1221 = vmatpush.bf16.msra.mxu0 %v1154
        %1222 = vmatpush.bf16.msra.mxu0 %v1153
        %1223 = vmatpush.bf16.msra.mxu0 %v1152
        %1224 = vmatmul.bf16.gmra.mxu0 %v992
        %v1225 = vpop.f32.mrf.mxu0
        %v1226 = vadd.f32 0.0, %v1225
        %v1227 = vpop.f32.mrf.mxu0
        %v1228 = vadd.f32 0.0, %v1227
        %1229 = vmatmul.bf16.gmra.mxu0 %v996
        %v1230 = vpop.f32.mrf.mxu0
        %v1231 = vadd.f32 0.0, %v1230
        %v1232 = vpop.f32.mrf.mxu0
        %v1233 = vadd.f32 0.0, %v1232
        %1234 = vmatmul.bf16.gmra.mxu0 %v1000
        %v1235 = vpop.f32.mrf.mxu0
        %v1236 = vadd.f32 0.0, %v1235
        %v1237 = vpop.f32.mrf.mxu0
        %v1238 = vadd.f32 0.0, %v1237
        %1239 = vmatmul.bf16.gmra.mxu0 %v1004
        %v1240 = vpop.f32.mrf.mxu0
        %v1241 = vadd.f32 0.0, %v1240
        %v1242 = vpop.f32.mrf.mxu0
        %v1243 = vadd.f32 0.0, %v1242
        %1244 = vdwg.mxu0
        %1245 = vmatpush.bf16.msra.mxu0 %v1167
        %1246 = vmatpush.bf16.msra.mxu0 %v1166
        %1247 = vmatpush.bf16.msra.mxu0 %v1165
        %1248 = vmatpush.bf16.msra.mxu0 %v1164
        %1249 = vmatpush.bf16.msra.mxu0 %v1163
        %1250 = vmatpush.bf16.msra.mxu0 %v1162
        %1251 = vmatpush.bf16.msra.mxu0 %v1161
        %1252 = vmatpush.bf16.msra.mxu0 %v1160
        %1253 = vmatmul.bf16.gmra.mxu0 %v993
        %v1254 = vpop.f32.mrf.mxu0
        %v1255 = vadd.f32 %v1226, %v1254
        %v1256 = vpop.f32.mrf.mxu0
        %v1257 = vadd.f32 %v1228, %v1256
        %1258 = vmatmul.bf16.gmra.mxu0 %v997
        %v1259 = vpop.f32.mrf.mxu0
        %v1260 = vadd.f32 %v1231, %v1259
        %v1261 = vpop.f32.mrf.mxu0
        %v1262 = vadd.f32 %v1233, %v1261
        %1263 = vmatmul.bf16.gmra.mxu0 %v1001
        %v1264 = vpop.f32.mrf.mxu0
        %v1265 = vadd.f32 %v1236, %v1264
        %v1266 = vpop.f32.mrf.mxu0
        %v1267 = vadd.f32 %v1238, %v1266
        %1268 = vmatmul.bf16.gmra.mxu0 %v1005
        %v1269 = vpop.f32.mrf.mxu0
        %v1270 = vadd.f32 %v1241, %v1269
        %v1271 = vpop.f32.mrf.mxu0
        %v1272 = vadd.f32 %v1243, %v1271
        %1273 = vdwg.mxu0
        %1274 = vmatpush.bf16.msra.mxu0 %v1175
        %1275 = vmatpush.bf16.msra.mxu0 %v1174
        %1276 = vmatpush.bf16.msra.mxu0 %v1173
        %1277 = vmatpush.bf16.msra.mxu0 %v1172
        %1278 = vmatpush.bf16.msra.mxu0 %v1171
        %1279 = vmatpush.bf16.msra.mxu0 %v1170
        %1280 = vmatpush.bf16.msra.mxu0 %v1169
        %1281 = vmatpush.bf16.msra.mxu0 %v1168
        %1282 = vmatmul.bf16.gmra.mxu0 %v994
        %v1283 = vpop.f32.mrf.mxu0
        %v1284 = vadd.f32 %v1255, %v1283
        %v1285 = vpop.f32.mrf.mxu0
        %v1286 = vadd.f32 %v1257, %v1285
        %1287 = vmatmul.bf16.gmra.mxu0 %v998
        %v1288 = vpop.f32.mrf.mxu0
        %v1289 = vadd.f32 %v1260, %v1288
        %v1290 = vpop.f32.mrf.mxu0
        %v1291 = vadd.f32 %v1262, %v1290
        %1292 = vmatmul.bf16.gmra.mxu0 %v1002
        %v1293 = vpop.f32.mrf.mxu0
        %v1294 = vadd.f32 %v1265, %v1293
        %v1295 = vpop.f32.mrf.mxu0
        %v1296 = vadd.f32 %v1267, %v1295
        %1297 = vmatmul.bf16.gmra.mxu0 %v1006
        %v1298 = vpop.f32.mrf.mxu0
        %v1299 = vadd.f32 %v1270, %v1298
        %v1300 = vpop.f32.mrf.mxu0
        %v1301 = vadd.f32 %v1272, %v1300
        %1302 = vdwg.mxu0
        %1303 = vmatpush.bf16.msra.mxu0 %v1183
        %1304 = vmatpush.bf16.msra.mxu0 %v1182
        %1305 = vmatpush.bf16.msra.mxu0 %v1181
        %1306 = vmatpush.bf16.msra.mxu0 %v1180
        %1307 = vmatpush.bf16.msra.mxu0 %v1179
        %1308 = vmatpush.bf16.msra.mxu0 %v1178
        %1309 = vmatpush.bf16.msra.mxu0 %v1177
        %1310 = vmatpush.bf16.msra.mxu0 %v1176
        %1311 = vmatmul.bf16.gmra.mxu0 %v995
        %v1312 = vpop.f32.mrf.mxu0
        %v1313 = vadd.f32 %v1284, %v1312
        %v1314 = vpop.f32.mrf.mxu0
        %v1315 = vadd.f32 %v1286, %v1314
        %1316 = vmatmul.bf16.gmra.mxu0 %v999
        %v1317 = vpop.f32.mrf.mxu0
        %v1318 = vadd.f32 %v1289, %v1317
        %v1319 = vpop.f32.mrf.mxu0
        %v1320 = vadd.f32 %v1291, %v1319
        %1321 = vmatmul.bf16.gmra.mxu0 %v1003
        %v1322 = vpop.f32.mrf.mxu0
        %v1323 = vadd.f32 %v1294, %v1322
        %v1324 = vpop.f32.mrf.mxu0
        %v1325 = vadd.f32 %v1296, %v1324
        %1326 = vmatmul.bf16.gmra.mxu0 %v1007
        %v1327 = vpop.f32.mrf.mxu0
        %v1328 = vadd.f32 %v1299, %v1327
        %v1329 = vpop.f32.mrf.mxu0
        %v1330 = vadd.f32 %v1301, %v1329
        %1331 = vdwg.mxu0
        %v1332 = vld [vmem:[#allocation2] sm:$0xff]
        %v1333 = vld [vmem:[#allocation2 + $0x8] sm:$0xff]
        %v1334 = vld [vmem:[#allocation2 + $0x10] sm:$0xff]
        %v1335 = vld [vmem:[#allocation2 + $0x18] sm:$0xff]
        %v1336 = vld [vmem:[#allocation2 + $0x20] sm:$0xff]
        %v1337 = vld [vmem:[#allocation2 + $0x28] sm:$0xff]
        %v1338 = vld [vmem:[#allocation2 + $0x30] sm:$0xff]
        %v1339 = vld [vmem:[#allocation2 + $0x38] sm:$0xff]
        %v1340 = vadd.f32 %v1332, %v1313
        %v1341 = vadd.f32 %v1333, %v1315
        %v1342 = vadd.f32 %v1334, %v1318
        %v1343 = vadd.f32 %v1335, %v1320
        %v1344 = vadd.f32 %v1336, %v1323
        %v1345 = vadd.f32 %v1337, %v1325
        %v1346 = vadd.f32 %v1338, %v1328
        %v1347 = vadd.f32 %v1339, %v1330
        %1348 = vst [vmem:[#allocation2] sm:$0xff] %v1340
        %1349 = vst [vmem:[#allocation2 + $0x8] sm:$0xff] %v1341
        %1350 = vst [vmem:[#allocation2 + $0x10] sm:$0xff] %v1342
        %1351 = vst [vmem:[#allocation2 + $0x18] sm:$0xff] %v1343
        %1352 = vst [vmem:[#allocation2 + $0x20] sm:$0xff] %v1344
        %1353 = vst [vmem:[#allocation2 + $0x28] sm:$0xff] %v1345
        %1354 = vst [vmem:[#allocation2 + $0x30] sm:$0xff] %v1346
        %1355 = vst [vmem:[#allocation2 + $0x38] sm:$0xff] %v1347
        %v1356 = vld [vmem:[%s160] sm:$0xee]
        %v1357 = vld [vmem:[%s160 + $0x10] sm:$0x11]
        %v1358 = vld [vmem:[%s160 + $0x20] sm:$0xee]
        %v1359 = vld [vmem:[%s160 + $0x30] sm:$0x11]
        %v1360 = vld [vmem:[%s160 + $0x40] sm:$0xee]
        %v1361 = vld [vmem:[%s160 + $0x50] sm:$0x11]
        %v1362 = vld [vmem:[%s160 + $0x60] sm:$0xee]
        %v1363 = vld [vmem:[%s160 + $0x70] sm:$0x11]
        %v1364 = vld [vmem:[%s160 + $0x80] sm:$0xee]
        %v1365 = vld [vmem:[%s160 + $0x90] sm:$0x11]
        %v1366 = vld [vmem:[%s160 + $0xa0] sm:$0xee]
        %v1367 = vld [vmem:[%s160 + $0xb0] sm:$0x11]
        %v1368 = vld [vmem:[%s160 + $0xc0] sm:$0xee]
        %v1369 = vld [vmem:[%s160 + $0xd0] sm:$0x11]
        %v1370 = vld [vmem:[%s160 + $0xe0] sm:$0xee]
        %v1371 = vld [vmem:[%s160 + $0xf0] sm:$0x11]
        %vm1388 = vcmask 1042432
        %vm1389 = vcmask 1046532
        %vm1390 = vmor %vm1388, %vm1389
        %v1391 = vrot.slane %v1356, 5
        %v1392 = vrot.slane %v1391, 4
        %v1393 = vrot.slane %v1357, 5
        %v1394 = vsel %vm1390, %v1392, %v1393
        %v1395 = vrot.slane %v1358, 5
        %v1396 = vrot.slane %v1395, 4
        %v1397 = vrot.slane %v1359, 5
        %v1398 = vsel %vm1390, %v1396, %v1397
        %v1399 = vrot.slane %v1360, 5
        %v1400 = vrot.slane %v1399, 4
        %v1401 = vrot.slane %v1361, 5
        %v1402 = vsel %vm1390, %v1400, %v1401
        %v1403 = vrot.slane %v1362, 5
        %v1404 = vrot.slane %v1403, 4
        %v1405 = vrot.slane %v1363, 5
        %v1406 = vsel %vm1390, %v1404, %v1405
        %v1407 = vrot.slane %v1364, 5
        %v1408 = vrot.slane %v1407, 4
        %v1409 = vrot.slane %v1365, 5
        %v1410 = vsel %vm1390, %v1408, %v1409
        %v1411 = vrot.slane %v1366, 5
        %v1412 = vrot.slane %v1411, 4
        %v1413 = vrot.slane %v1367, 5
        %v1414 = vsel %vm1390, %v1412, %v1413
        %v1415 = vrot.slane %v1368, 5
        %v1416 = vrot.slane %v1415, 4
        %v1417 = vrot.slane %v1369, 5
        %v1418 = vsel %vm1390, %v1416, %v1417
        %v1419 = vrot.slane %v1370, 5
        %v1420 = vrot.slane %v1419, 4
        %v1421 = vrot.slane %v1371, 5
        %v1422 = vsel %vm1390, %v1420, %v1421
        %v1423 = vld [vmem:[%s1 + $0x200] sm:$0xf]
        %v1424 = vld [vmem:[%s1 + $0x204] sm:$0xf]
        %v1425 = vld [vmem:[%s1 + $0x208] sm:$0xf]
        %v1426 = vld [vmem:[%s1 + $0x20c] sm:$0xf]
        %v1427 = vld [vmem:[%s1 + $0x210] sm:$0xf]
        %v1428 = vld [vmem:[%s1 + $0x214] sm:$0xf]
        %v1429 = vld [vmem:[%s1 + $0x218] sm:$0xf]
        %v1430 = vld [vmem:[%s1 + $0x21c] sm:$0xf]
        %v1431 = vld [vmem:[%s1 + $0x220] sm:$0xf]
        %v1432 = vld [vmem:[%s1 + $0x224] sm:$0xf]
        %v1433 = vld [vmem:[%s1 + $0x228] sm:$0xf]
        %v1434 = vld [vmem:[%s1 + $0x22c] sm:$0xf]
        %v1435 = vld [vmem:[%s1 + $0x230] sm:$0xf]
        %v1436 = vld [vmem:[%s1 + $0x234] sm:$0xf]
        %v1437 = vld [vmem:[%s1 + $0x238] sm:$0xf]
        %v1438 = vld [vmem:[%s1 + $0x23c] sm:$0xf]
        %v1439 = vld [vmem:[%s1 + $0x240] sm:$0xf]
        %v1440 = vld [vmem:[%s1 + $0x244] sm:$0xf]
        %v1441 = vld [vmem:[%s1 + $0x248] sm:$0xf]
        %v1442 = vld [vmem:[%s1 + $0x24c] sm:$0xf]
        %v1443 = vld [vmem:[%s1 + $0x250] sm:$0xf]
        %v1444 = vld [vmem:[%s1 + $0x254] sm:$0xf]
        %v1445 = vld [vmem:[%s1 + $0x258] sm:$0xf]
        %v1446 = vld [vmem:[%s1 + $0x25c] sm:$0xf]
        %v1447 = vld [vmem:[%s1 + $0x260] sm:$0xf]
        %v1448 = vld [vmem:[%s1 + $0x264] sm:$0xf]
        %v1449 = vld [vmem:[%s1 + $0x268] sm:$0xf]
        %v1450 = vld [vmem:[%s1 + $0x26c] sm:$0xf]
        %v1451 = vld [vmem:[%s1 + $0x270] sm:$0xf]
        %v1452 = vld [vmem:[%s1 + $0x274] sm:$0xf]
        %v1453 = vld [vmem:[%s1 + $0x278] sm:$0xf]
        %v1454 = vld [vmem:[%s1 + $0x27c] sm:$0xf]
        %v1455 = vunpack.c.l.b16 %v1394
        %v1456 = vunpack.c.h.b16 %v1394
        %v1457 = vunpack.c.l.b16 %v1398
        %v1458 = vunpack.c.h.b16 %v1398
        %v1459 = vunpack.c.l.b16 %v1402
        %v1460 = vunpack.c.h.b16 %v1402
        %v1461 = vunpack.c.l.b16 %v1406
        %v1462 = vunpack.c.h.b16 %v1406
        %v1463 = vunpack.c.l.b16 %v1410
        %v1464 = vunpack.c.h.b16 %v1410
        %v1465 = vunpack.c.l.b16 %v1414
        %v1466 = vunpack.c.h.b16 %v1414
        %v1467 = vunpack.c.l.b16 %v1418
        %v1468 = vunpack.c.h.b16 %v1418
        %v1469 = vunpack.c.l.b16 %v1422
        %v1470 = vunpack.c.h.b16 %v1422
        %v1471 = vpack.c.b16 %v1457, %v1455
        %v1472 = vpack.c.b16 %v1458, %v1456
        %v1473 = vpack.c.b16 %v1461, %v1459
        %v1474 = vpack.c.b16 %v1462, %v1460
        %v1475 = vpack.c.b16 %v1465, %v1463
        %v1476 = vpack.c.b16 %v1466, %v1464
        %v1477 = vpack.c.b16 %v1469, %v1467
        %v1478 = vpack.c.b16 %v1470, %v1468
        %v1519 = vunpack.c.l.b16 %v1423
        %v1520 = vunpack.c.l.b16 %v1424
        %v1521 = vunpack.c.l.b16 %v1425
        %v1522 = vunpack.c.l.b16 %v1426
        %v1523 = vunpack.c.l.b16 %v1427
        %v1524 = vunpack.c.l.b16 %v1428
        %v1525 = vunpack.c.l.b16 %v1429
        %v1526 = vunpack.c.l.b16 %v1430
        %v1527 = vunpack.c.l.b16 %v1431
        %v1528 = vunpack.c.l.b16 %v1432
        %v1529 = vunpack.c.l.b16 %v1433
        %v1530 = vunpack.c.l.b16 %v1434
        %v1531 = vunpack.c.l.b16 %v1435
        %v1532 = vunpack.c.l.b16 %v1436
        %v1533 = vunpack.c.l.b16 %v1437
        %v1534 = vunpack.c.l.b16 %v1438
        %v1535 = vunpack.c.l.b16 %v1439
        %v1536 = vunpack.c.l.b16 %v1440
        %v1537 = vunpack.c.l.b16 %v1441
        %v1538 = vunpack.c.l.b16 %v1442
        %v1539 = vunpack.c.l.b16 %v1443
        %v1540 = vunpack.c.l.b16 %v1444
        %v1541 = vunpack.c.l.b16 %v1445
        %v1542 = vunpack.c.l.b16 %v1446
        %v1543 = vunpack.c.l.b16 %v1447
        %v1544 = vunpack.c.l.b16 %v1448
        %v1545 = vunpack.c.l.b16 %v1449
        %v1546 = vunpack.c.l.b16 %v1450
        %v1547 = vunpack.c.l.b16 %v1451
        %v1548 = vunpack.c.l.b16 %v1452
        %v1549 = vunpack.c.l.b16 %v1453
        %v1550 = vunpack.c.l.b16 %v1454
        %v1551 = vpack.c.b16 %v1520, %v1519
        %v1552 = vpack.c.b16 %v1522, %v1521
        %v1553 = vpack.c.b16 %v1524, %v1523
        %v1554 = vpack.c.b16 %v1526, %v1525
        %v1555 = vpack.c.b16 %v1528, %v1527
        %v1556 = vpack.c.b16 %v1530, %v1529
        %v1557 = vpack.c.b16 %v1532, %v1531
        %v1558 = vpack.c.b16 %v1534, %v1533
        %v1559 = vpack.c.b16 %v1536, %v1535
        %v1560 = vpack.c.b16 %v1538, %v1537
        %v1561 = vpack.c.b16 %v1540, %v1539
        %v1562 = vpack.c.b16 %v1542, %v1541
        %v1563 = vpack.c.b16 %v1544, %v1543
        %v1564 = vpack.c.b16 %v1546, %v1545
        %v1565 = vpack.c.b16 %v1548, %v1547
        %v1566 = vpack.c.b16 %v1550, %v1549
        %1583 = vmatpush.bf16.msra.mxu0 %v1558
        %1584 = vmatpush.bf16.msra.mxu0 %v1557
        %1585 = vmatpush.bf16.msra.mxu0 %v1556
        %1586 = vmatpush.bf16.msra.mxu0 %v1555
        %1587 = vmatpush.bf16.msra.mxu0 %v1554
        %1588 = vmatpush.bf16.msra.mxu0 %v1553
        %1589 = vmatpush.bf16.msra.mxu0 %v1552
        %1590 = vmatpush.bf16.msra.mxu0 %v1551
        %1591 = vmatmul.bf16.gmra.mxu0 %v1471
        %v1592 = vpop.f32.mrf.mxu0
        %v1593 = vadd.f32 0.0, %v1592
        %v1594 = vpop.f32.mrf.mxu0
        %v1595 = vadd.f32 0.0, %v1594
        %1596 = vmatmul.bf16.gmra.mxu0 %v1473
        %v1597 = vpop.f32.mrf.mxu0
        %v1598 = vadd.f32 0.0, %v1597
        %v1599 = vpop.f32.mrf.mxu0
        %v1600 = vadd.f32 0.0, %v1599
        %1601 = vmatmul.bf16.gmra.mxu0 %v1475
        %v1602 = vpop.f32.mrf.mxu0
        %v1603 = vadd.f32 0.0, %v1602
        %v1604 = vpop.f32.mrf.mxu0
        %v1605 = vadd.f32 0.0, %v1604
        %1606 = vmatmul.bf16.gmra.mxu0 %v1477
        %v1607 = vpop.f32.mrf.mxu0
        %v1608 = vadd.f32 0.0, %v1607
        %v1609 = vpop.f32.mrf.mxu0
        %v1610 = vadd.f32 0.0, %v1609
        %1611 = vdwg.mxu0
        %1612 = vmatpush.bf16.msra.mxu0 %v1566
        %1613 = vmatpush.bf16.msra.mxu0 %v1565
        %1614 = vmatpush.bf16.msra.mxu0 %v1564
        %1615 = vmatpush.bf16.msra.mxu0 %v1563
        %1616 = vmatpush.bf16.msra.mxu0 %v1562
        %1617 = vmatpush.bf16.msra.mxu0 %v1561
        %1618 = vmatpush.bf16.msra.mxu0 %v1560
        %1619 = vmatpush.bf16.msra.mxu0 %v1559
        %1620 = vmatmul.bf16.gmra.mxu0 %v1472
        %v1621 = vpop.f32.mrf.mxu0
        %v1622 = vadd.f32 %v1593, %v1621
        %v1623 = vpop.f32.mrf.mxu0
        %v1624 = vadd.f32 %v1595, %v1623
        %1625 = vmatmul.bf16.gmra.mxu0 %v1474
        %v1626 = vpop.f32.mrf.mxu0
        %v1627 = vadd.f32 %v1598, %v1626
        %v1628 = vpop.f32.mrf.mxu0
        %v1629 = vadd.f32 %v1600, %v1628
        %1630 = vmatmul.bf16.gmra.mxu0 %v1476
        %v1631 = vpop.f32.mrf.mxu0
        %v1632 = vadd.f32 %v1603, %v1631
        %v1633 = vpop.f32.mrf.mxu0
        %v1634 = vadd.f32 %v1605, %v1633
        %1635 = vmatmul.bf16.gmra.mxu0 %v1478
        %v1636 = vpop.f32.mrf.mxu0
        %v1637 = vadd.f32 %v1608, %v1636
        %v1638 = vpop.f32.mrf.mxu0
        %v1639 = vadd.f32 %v1610, %v1638
        %1640 = vdwg.mxu0
        %v1641 = vld [vmem:[#allocation2] sm:$0xff]
        %v1642 = vld [vmem:[#allocation2 + $0x8] sm:$0xff]
        %v1643 = vld [vmem:[#allocation2 + $0x10] sm:$0xff]
        %v1644 = vld [vmem:[#allocation2 + $0x18] sm:$0xff]
        %v1645 = vld [vmem:[#allocation2 + $0x20] sm:$0xff]
        %v1646 = vld [vmem:[#allocation2 + $0x28] sm:$0xff]
        %v1647 = vld [vmem:[#allocation2 + $0x30] sm:$0xff]
        %v1648 = vld [vmem:[#allocation2 + $0x38] sm:$0xff]
        %v1649 = vadd.f32 %v1641, %v1622
        %v1650 = vadd.f32 %v1642, %v1624
        %v1651 = vadd.f32 %v1643, %v1627
        %v1652 = vadd.f32 %v1644, %v1629
        %v1653 = vadd.f32 %v1645, %v1632
        %v1654 = vadd.f32 %v1646, %v1634
        %v1655 = vadd.f32 %v1647, %v1637
        %v1656 = vadd.f32 %v1648, %v1639
        %1657 = vst [vmem:[#allocation2] sm:$0xff] %v1649
        %1658 = vst [vmem:[#allocation2 + $0x8] sm:$0xff] %v1650
        %1659 = vst [vmem:[#allocation2 + $0x10] sm:$0xff] %v1651
        %1660 = vst [vmem:[#allocation2 + $0x18] sm:$0xff] %v1652
        %1661 = vst [vmem:[#allocation2 + $0x20] sm:$0xff] %v1653
        %1662 = vst [vmem:[#allocation2 + $0x28] sm:$0xff] %v1654
        %1663 = vst [vmem:[#allocation2 + $0x30] sm:$0xff] %v1655
        %1664 = vst [vmem:[#allocation2 + $0x38] sm:$0xff] %v1656
        %s1665 = sadd.s32 %s157, 1
        %s1666 = smul.u32 %s1665, 8
        %s1667 = smul.addr %s1666, 4
        %s1668 = scalar_lea.vmem %s155, %s1667
        %v1669 = vld [vmem:[%s1668] sm:$0xff]
        %v1670 = vld [vmem:[%s1668 + $0x8] sm:$0xff]
        %v1671 = vld [vmem:[%s1668 + $0x20] sm:$0xff]
        %v1672 = vld [vmem:[%s1668 + $0x28] sm:$0xff]
        %v1673 = vld [vmem:[%s1668 + $0x40] sm:$0xff]
        %v1674 = vld [vmem:[%s1668 + $0x48] sm:$0xff]
        %v1675 = vld [vmem:[%s1668 + $0x60] sm:$0xff]
        %v1676 = vld [vmem:[%s1668 + $0x68] sm:$0xff]
        %v1677 = vld [vmem:[%s1668 + $0x80] sm:$0xff]
        %v1678 = vld [vmem:[%s1668 + $0x88] sm:$0xff]
        %v1679 = vld [vmem:[%s1668 + $0xa0] sm:$0xff]
        %v1680 = vld [vmem:[%s1668 + $0xa8] sm:$0xff]
        %v1681 = vld [vmem:[%s1668 + $0xc0] sm:$0xff]
        %v1682 = vld [vmem:[%s1668 + $0xc8] sm:$0xff]
        %v1683 = vld [vmem:[%s1668 + $0xe0] sm:$0xff]
        %v1684 = vld [vmem:[%s1668 + $0xe8] sm:$0xff]
        %v1685 = vld [vmem:[%s1 + $0x280] sm:$0xf]
        %v1686 = vld [vmem:[%s1 + $0x284] sm:$0xf]
        %v1687 = vld [vmem:[%s1 + $0x288] sm:$0xf]
        %v1688 = vld [vmem:[%s1 + $0x28c] sm:$0xf]
        %v1689 = vld [vmem:[%s1 + $0x290] sm:$0xf]
        %v1690 = vld [vmem:[%s1 + $0x294] sm:$0xf]
        %v1691 = vld [vmem:[%s1 + $0x298] sm:$0xf]
        %v1692 = vld [vmem:[%s1 + $0x29c] sm:$0xf]
        %v1693 = vld [vmem:[%s1 + $0x2a0] sm:$0xf]
        %v1694 = vld [vmem:[%s1 + $0x2a4] sm:$0xf]
        %v1695 = vld [vmem:[%s1 + $0x2a8] sm:$0xf]
        %v1696 = vld [vmem:[%s1 + $0x2ac] sm:$0xf]
        %v1697 = vld [vmem:[%s1 + $0x2b0] sm:$0xf]
        %v1698 = vld [vmem:[%s1 + $0x2b4] sm:$0xf]
        %v1699 = vld [vmem:[%s1 + $0x2b8] sm:$0xf]
        %v1700 = vld [vmem:[%s1 + $0x2bc] sm:$0xf]
        %v1701 = vld [vmem:[%s1 + $0x2c0] sm:$0xf]
        %v1702 = vld [vmem:[%s1 + $0x2c4] sm:$0xf]
        %v1703 = vld [vmem:[%s1 + $0x2c8] sm:$0xf]
        %v1704 = vld [vmem:[%s1 + $0x2cc] sm:$0xf]
        %v1705 = vld [vmem:[%s1 + $0x2d0] sm:$0xf]
        %v1706 = vld [vmem:[%s1 + $0x2d4] sm:$0xf]
        %v1707 = vld [vmem:[%s1 + $0x2d8] sm:$0xf]
        %v1708 = vld [vmem:[%s1 + $0x2dc] sm:$0xf]
        %v1709 = vld [vmem:[%s1 + $0x2e0] sm:$0xf]
        %v1710 = vld [vmem:[%s1 + $0x2e4] sm:$0xf]
        %v1711 = vld [vmem:[%s1 + $0x2e8] sm:$0xf]
        %v1712 = vld [vmem:[%s1 + $0x2ec] sm:$0xf]
        %v1713 = vld [vmem:[%s1 + $0x2f0] sm:$0xf]
        %v1714 = vld [vmem:[%s1 + $0x2f4] sm:$0xf]
        %v1715 = vld [vmem:[%s1 + $0x2f8] sm:$0xf]
        %v1716 = vld [vmem:[%s1 + $0x2fc] sm:$0xf]
        %v1717 = vld [vmem:[%s1 + $0x300] sm:$0xf]
        %v1718 = vld [vmem:[%s1 + $0x304] sm:$0xf]
        %v1719 = vld [vmem:[%s1 + $0x308] sm:$0xf]
        %v1720 = vld [vmem:[%s1 + $0x30c] sm:$0xf]
        %v1721 = vld [vmem:[%s1 + $0x310] sm:$0xf]
        %v1722 = vld [vmem:[%s1 + $0x314] sm:$0xf]
        %v1723 = vld [vmem:[%s1 + $0x318] sm:$0xf]
        %v1724 = vld [vmem:[%s1 + $0x31c] sm:$0xf]
        %v1725 = vld [vmem:[%s1 + $0x320] sm:$0xf]
        %v1726 = vld [vmem:[%s1 + $0x324] sm:$0xf]
        %v1727 = vld [vmem:[%s1 + $0x328] sm:$0xf]
        %v1728 = vld [vmem:[%s1 + $0x32c] sm:$0xf]
        %v1729 = vld [vmem:[%s1 + $0x330] sm:$0xf]
        %v1730 = vld [vmem:[%s1 + $0x334] sm:$0xf]
        %v1731 = vld [vmem:[%s1 + $0x338] sm:$0xf]
        %v1732 = vld [vmem:[%s1 + $0x33c] sm:$0xf]
        %v1733 = vld [vmem:[%s1 + $0x340] sm:$0xf]
        %v1734 = vld [vmem:[%s1 + $0x344] sm:$0xf]
        %v1735 = vld [vmem:[%s1 + $0x348] sm:$0xf]
        %v1736 = vld [vmem:[%s1 + $0x34c] sm:$0xf]
        %v1737 = vld [vmem:[%s1 + $0x350] sm:$0xf]
        %v1738 = vld [vmem:[%s1 + $0x354] sm:$0xf]
        %v1739 = vld [vmem:[%s1 + $0x358] sm:$0xf]
        %v1740 = vld [vmem:[%s1 + $0x35c] sm:$0xf]
        %v1741 = vld [vmem:[%s1 + $0x360] sm:$0xf]
        %v1742 = vld [vmem:[%s1 + $0x364] sm:$0xf]
        %v1743 = vld [vmem:[%s1 + $0x368] sm:$0xf]
        %v1744 = vld [vmem:[%s1 + $0x36c] sm:$0xf]
        %v1745 = vld [vmem:[%s1 + $0x370] sm:$0xf]
        %v1746 = vld [vmem:[%s1 + $0x374] sm:$0xf]
        %v1747 = vld [vmem:[%s1 + $0x378] sm:$0xf]
        %v1748 = vld [vmem:[%s1 + $0x37c] sm:$0xf]
        %v1765 = vunpack.c.l.b16 %v1669
        %v1766 = vunpack.c.h.b16 %v1669
        %v1767 = vunpack.c.l.b16 %v1670
        %v1768 = vunpack.c.h.b16 %v1670
        %v1769 = vunpack.c.l.b16 %v1671
        %v1770 = vunpack.c.h.b16 %v1671
        %v1771 = vunpack.c.l.b16 %v1672
        %v1772 = vunpack.c.h.b16 %v1672
        %v1773 = vunpack.c.l.b16 %v1673
        %v1774 = vunpack.c.h.b16 %v1673
        %v1775 = vunpack.c.l.b16 %v1674
        %v1776 = vunpack.c.h.b16 %v1674
        %v1777 = vunpack.c.l.b16 %v1675
        %v1778 = vunpack.c.h.b16 %v1675
        %v1779 = vunpack.c.l.b16 %v1676
        %v1780 = vunpack.c.h.b16 %v1676
        %v1781 = vunpack.c.l.b16 %v1677
        %v1782 = vunpack.c.h.b16 %v1677
        %v1783 = vunpack.c.l.b16 %v1678
        %v1784 = vunpack.c.h.b16 %v1678
        %v1785 = vunpack.c.l.b16 %v1679
        %v1786 = vunpack.c.h.b16 %v1679
        %v1787 = vunpack.c.l.b16 %v1680
        %v1788 = vunpack.c.h.b16 %v1680
        %v1789 = vunpack.c.l.b16 %v1681
        %v1790 = vunpack.c.h.b16 %v1681
        %v1791 = vunpack.c.l.b16 %v1682
        %v1792 = vunpack.c.h.b16 %v1682
        %v1793 = vunpack.c.l.b16 %v1683
        %v1794 = vunpack.c.h.b16 %v1683
        %v1795 = vunpack.c.l.b16 %v1684
        %v1796 = vunpack.c.h.b16 %v1684
        %v1797 = vpack.c.b16 %v1769, %v1765
        %v1798 = vpack.c.b16 %v1770, %v1766
        %v1799 = vpack.c.b16 %v1771, %v1767
        %v1800 = vpack.c.b16 %v1772, %v1768
        %v1801 = vpack.c.b16 %v1777, %v1773
        %v1802 = vpack.c.b16 %v1778, %v1774
        %v1803 = vpack.c.b16 %v1779, %v1775
        %v1804 = vpack.c.b16 %v1780, %v1776
        %v1805 = vpack.c.b16 %v1785, %v1781
        %v1806 = vpack.c.b16 %v1786, %v1782
        %v1807 = vpack.c.b16 %v1787, %v1783
        %v1808 = vpack.c.b16 %v1788, %v1784
        %v1809 = vpack.c.b16 %v1793, %v1789
        %v1810 = vpack.c.b16 %v1794, %v1790
        %v1811 = vpack.c.b16 %v1795, %v1791
        %v1812 = vpack.c.b16 %v1796, %v1792
        %v1893 = vunpack.c.l.b16 %v1685
        %v1894 = vunpack.c.l.b16 %v1686
        %v1895 = vunpack.c.l.b16 %v1687
        %v1896 = vunpack.c.l.b16 %v1688
        %v1897 = vunpack.c.l.b16 %v1689
        %v1898 = vunpack.c.l.b16 %v1690
        %v1899 = vunpack.c.l.b16 %v1691
        %v1900 = vunpack.c.l.b16 %v1692
        %v1901 = vunpack.c.l.b16 %v1693
        %v1902 = vunpack.c.l.b16 %v1694
        %v1903 = vunpack.c.l.b16 %v1695
        %v1904 = vunpack.c.l.b16 %v1696
        %v1905 = vunpack.c.l.b16 %v1697
        %v1906 = vunpack.c.l.b16 %v1698
        %v1907 = vunpack.c.l.b16 %v1699
        %v1908 = vunpack.c.l.b16 %v1700
        %v1909 = vunpack.c.l.b16 %v1701
        %v1910 = vunpack.c.l.b16 %v1702
        %v1911 = vunpack.c.l.b16 %v1703
        %v1912 = vunpack.c.l.b16 %v1704
        %v1913 = vunpack.c.l.b16 %v1705
        %v1914 = vunpack.c.l.b16 %v1706
        %v1915 = vunpack.c.l.b16 %v1707
        %v1916 = vunpack.c.l.b16 %v1708
        %v1917 = vunpack.c.l.b16 %v1709
        %v1918 = vunpack.c.l.b16 %v1710
        %v1919 = vunpack.c.l.b16 %v1711
        %v1920 = vunpack.c.l.b16 %v1712
        %v1921 = vunpack.c.l.b16 %v1713
        %v1922 = vunpack.c.l.b16 %v1714
        %v1923 = vunpack.c.l.b16 %v1715
        %v1924 = vunpack.c.l.b16 %v1716
        %v1925 = vunpack.c.l.b16 %v1717
        %v1926 = vunpack.c.l.b16 %v1718
        %v1927 = vunpack.c.l.b16 %v1719
        %v1928 = vunpack.c.l.b16 %v1720
        %v1929 = vunpack.c.l.b16 %v1721
        %v1930 = vunpack.c.l.b16 %v1722
        %v1931 = vunpack.c.l.b16 %v1723
        %v1932 = vunpack.c.l.b16 %v1724
        %v1933 = vunpack.c.l.b16 %v1725
        %v1934 = vunpack.c.l.b16 %v1726
        %v1935 = vunpack.c.l.b16 %v1727
        %v1936 = vunpack.c.l.b16 %v1728
        %v1937 = vunpack.c.l.b16 %v1729
        %v1938 = vunpack.c.l.b16 %v1730
        %v1939 = vunpack.c.l.b16 %v1731
        %v1940 = vunpack.c.l.b16 %v1732
        %v1941 = vunpack.c.l.b16 %v1733
        %v1942 = vunpack.c.l.b16 %v1734
        %v1943 = vunpack.c.l.b16 %v1735
        %v1944 = vunpack.c.l.b16 %v1736
        %v1945 = vunpack.c.l.b16 %v1737
        %v1946 = vunpack.c.l.b16 %v1738
        %v1947 = vunpack.c.l.b16 %v1739
        %v1948 = vunpack.c.l.b16 %v1740
        %v1949 = vunpack.c.l.b16 %v1741
        %v1950 = vunpack.c.l.b16 %v1742
        %v1951 = vunpack.c.l.b16 %v1743
        %v1952 = vunpack.c.l.b16 %v1744
        %v1953 = vunpack.c.l.b16 %v1745
        %v1954 = vunpack.c.l.b16 %v1746
        %v1955 = vunpack.c.l.b16 %v1747
        %v1956 = vunpack.c.l.b16 %v1748
        %v1957 = vpack.c.b16 %v1894, %v1893
        %v1958 = vpack.c.b16 %v1896, %v1895
        %v1959 = vpack.c.b16 %v1898, %v1897
        %v1960 = vpack.c.b16 %v1900, %v1899
        %v1961 = vpack.c.b16 %v1902, %v1901
        %v1962 = vpack.c.b16 %v1904, %v1903
        %v1963 = vpack.c.b16 %v1906, %v1905
        %v1964 = vpack.c.b16 %v1908, %v1907
        %v1965 = vpack.c.b16 %v1910, %v1909
        %v1966 = vpack.c.b16 %v1912, %v1911
        %v1967 = vpack.c.b16 %v1914, %v1913
        %v1968 = vpack.c.b16 %v1916, %v1915
        %v1969 = vpack.c.b16 %v1918, %v1917
        %v1970 = vpack.c.b16 %v1920, %v1919
        %v1971 = vpack.c.b16 %v1922, %v1921
        %v1972 = vpack.c.b16 %v1924, %v1923
        %v1973 = vpack.c.b16 %v1926, %v1925
        %v1974 = vpack.c.b16 %v1928, %v1927
        %v1975 = vpack.c.b16 %v1930, %v1929
        %v1976 = vpack.c.b16 %v1932, %v1931
        %v1977 = vpack.c.b16 %v1934, %v1933
        %v1978 = vpack.c.b16 %v1936, %v1935
        %v1979 = vpack.c.b16 %v1938, %v1937
        %v1980 = vpack.c.b16 %v1940, %v1939
        %v1981 = vpack.c.b16 %v1942, %v1941
        %v1982 = vpack.c.b16 %v1944, %v1943
        %v1983 = vpack.c.b16 %v1946, %v1945
        %v1984 = vpack.c.b16 %v1948, %v1947
        %v1985 = vpack.c.b16 %v1950, %v1949
        %v1986 = vpack.c.b16 %v1952, %v1951
        %v1987 = vpack.c.b16 %v1954, %v1953
        %v1988 = vpack.c.b16 %v1956, %v1955
        %2021 = vmatpush.bf16.msra.mxu0 %v1964
        %2022 = vmatpush.bf16.msra.mxu0 %v1963
        %2023 = vmatpush.bf16.msra.mxu0 %v1962
        %2024 = vmatpush.bf16.msra.mxu0 %v1961
        %2025 = vmatpush.bf16.msra.mxu0 %v1960
        %2026 = vmatpush.bf16.msra.mxu0 %v1959
        %2027 = vmatpush.bf16.msra.mxu0 %v1958
        %2028 = vmatpush.bf16.msra.mxu0 %v1957
        %2029 = vmatmul.bf16.gmra.mxu0 %v1797
        %v2030 = vpop.f32.mrf.mxu0
        %v2031 = vadd.f32 0.0, %v2030
        %v2032 = vpop.f32.mrf.mxu0
        %v2033 = vadd.f32 0.0, %v2032
        %2034 = vmatmul.bf16.gmra.mxu0 %v1801
        %v2035 = vpop.f32.mrf.mxu0
        %v2036 = vadd.f32 0.0, %v2035
        %v2037 = vpop.f32.mrf.mxu0
        %v2038 = vadd.f32 0.0, %v2037
        %2039 = vmatmul.bf16.gmra.mxu0 %v1805
        %v2040 = vpop.f32.mrf.mxu0
        %v2041 = vadd.f32 0.0, %v2040
        %v2042 = vpop.f32.mrf.mxu0
        %v2043 = vadd.f32 0.0, %v2042
        %2044 = vmatmul.bf16.gmra.mxu0 %v1809
        %v2045 = vpop.f32.mrf.mxu0
        %v2046 = vadd.f32 0.0, %v2045
        %v2047 = vpop.f32.mrf.mxu0
        %v2048 = vadd.f32 0.0, %v2047
        %2049 = vdwg.mxu0
        %2050 = vmatpush.bf16.msra.mxu0 %v1972
        %2051 = vmatpush.bf16.msra.mxu0 %v1971
        %2052 = vmatpush.bf16.msra.mxu0 %v1970
        %2053 = vmatpush.bf16.msra.mxu0 %v1969
        %2054 = vmatpush.bf16.msra.mxu0 %v1968
        %2055 = vmatpush.bf16.msra.mxu0 %v1967
        %2056 = vmatpush.bf16.msra.mxu0 %v1966
        %2057 = vmatpush.bf16.msra.mxu0 %v1965
        %2058 = vmatmul.bf16.gmra.mxu0 %v1798
        %v2059 = vpop.f32.mrf.mxu0
        %v2060 = vadd.f32 %v2031, %v2059
        %v2061 = vpop.f32.mrf.mxu0
        %v2062 = vadd.f32 %v2033, %v2061
        %2063 = vmatmul.bf16.gmra.mxu0 %v1802
        %v2064 = vpop.f32.mrf.mxu0
        %v2065 = vadd.f32 %v2036, %v2064
        %v2066 = vpop.f32.mrf.mxu0
        %v2067 = vadd.f32 %v2038, %v2066
        %2068 = vmatmul.bf16.gmra.mxu0 %v1806
        %v2069 = vpop.f32.mrf.mxu0
        %v2070 = vadd.f32 %v2041, %v2069
        %v2071 = vpop.f32.mrf.mxu0
        %v2072 = vadd.f32 %v2043, %v2071
        %2073 = vmatmul.bf16.gmra.mxu0 %v1810
        %v2074 = vpop.f32.mrf.mxu0
        %v2075 = vadd.f32 %v2046, %v2074
        %v2076 = vpop.f32.mrf.mxu0
        %v2077 = vadd.f32 %v2048, %v2076
        %2078 = vdwg.mxu0
        %2079 = vmatpush.bf16.msra.mxu0 %v1980
        %2080 = vmatpush.bf16.msra.mxu0 %v1979
        %2081 = vmatpush.bf16.msra.mxu0 %v1978
        %2082 = vmatpush.bf16.msra.mxu0 %v1977
        %2083 = vmatpush.bf16.msra.mxu0 %v1976
        %2084 = vmatpush.bf16.msra.mxu0 %v1975
        %2085 = vmatpush.bf16.msra.mxu0 %v1974
        %2086 = vmatpush.bf16.msra.mxu0 %v1973
        %2087 = vmatmul.bf16.gmra.mxu0 %v1799
        %v2088 = vpop.f32.mrf.mxu0
        %v2089 = vadd.f32 %v2060, %v2088
        %v2090 = vpop.f32.mrf.mxu0
        %v2091 = vadd.f32 %v2062, %v2090
        %2092 = vmatmul.bf16.gmra.mxu0 %v1803
        %v2093 = vpop.f32.mrf.mxu0
        %v2094 = vadd.f32 %v2065, %v2093
        %v2095 = vpop.f32.mrf.mxu0
        %v2096 = vadd.f32 %v2067, %v2095
        %2097 = vmatmul.bf16.gmra.mxu0 %v1807
        %v2098 = vpop.f32.mrf.mxu0
        %v2099 = vadd.f32 %v2070, %v2098
        %v2100 = vpop.f32.mrf.mxu0
        %v2101 = vadd.f32 %v2072, %v2100
        %2102 = vmatmul.bf16.gmra.mxu0 %v1811
        %v2103 = vpop.f32.mrf.mxu0
        %v2104 = vadd.f32 %v2075, %v2103
        %v2105 = vpop.f32.mrf.mxu0
        %v2106 = vadd.f32 %v2077, %v2105
        %2107 = vdwg.mxu0
        %2108 = vmatpush.bf16.msra.mxu0 %v1988
        %2109 = vmatpush.bf16.msra.mxu0 %v1987
        %2110 = vmatpush.bf16.msra.mxu0 %v1986
        %2111 = vmatpush.bf16.msra.mxu0 %v1985
        %2112 = vmatpush.bf16.msra.mxu0 %v1984
        %2113 = vmatpush.bf16.msra.mxu0 %v1983
        %2114 = vmatpush.bf16.msra.mxu0 %v1982
        %2115 = vmatpush.bf16.msra.mxu0 %v1981
        %2116 = vmatmul.bf16.gmra.mxu0 %v1800
        %v2117 = vpop.f32.mrf.mxu0
        %v2118 = vadd.f32 %v2089, %v2117
        %v2119 = vpop.f32.mrf.mxu0
        %v2120 = vadd.f32 %v2091, %v2119
        %2121 = vmatmul.bf16.gmra.mxu0 %v1804
        %v2122 = vpop.f32.mrf.mxu0
        %v2123 = vadd.f32 %v2094, %v2122
        %v2124 = vpop.f32.mrf.mxu0
        %v2125 = vadd.f32 %v2096, %v2124
        %2126 = vmatmul.bf16.gmra.mxu0 %v1808
        %v2127 = vpop.f32.mrf.mxu0
        %v2128 = vadd.f32 %v2099, %v2127
        %v2129 = vpop.f32.mrf.mxu0
        %v2130 = vadd.f32 %v2101, %v2129
        %2131 = vmatmul.bf16.gmra.mxu0 %v1812
        %v2132 = vpop.f32.mrf.mxu0
        %v2133 = vadd.f32 %v2104, %v2132
        %v2134 = vpop.f32.mrf.mxu0
        %v2135 = vadd.f32 %v2106, %v2134
        %2136 = vdwg.mxu0
        %v2137 = vld [vmem:[#allocation2] sm:$0xff]
        %v2138 = vld [vmem:[#allocation2 + $0x8] sm:$0xff]
        %v2139 = vld [vmem:[#allocation2 + $0x10] sm:$0xff]
        %v2140 = vld [vmem:[#allocation2 + $0x18] sm:$0xff]
        %v2141 = vld [vmem:[#allocation2 + $0x20] sm:$0xff]
        %v2142 = vld [vmem:[#allocation2 + $0x28] sm:$0xff]
        %v2143 = vld [vmem:[#allocation2 + $0x30] sm:$0xff]
        %v2144 = vld [vmem:[#allocation2 + $0x38] sm:$0xff]
        %v2145 = vadd.f32 %v2137, %v2118
        %v2146 = vadd.f32 %v2138, %v2120
        %v2147 = vadd.f32 %v2139, %v2123
        %v2148 = vadd.f32 %v2140, %v2125
        %v2149 = vadd.f32 %v2141, %v2128
        %v2150 = vadd.f32 %v2142, %v2130
        %v2151 = vadd.f32 %v2143, %v2133
        %v2152 = vadd.f32 %v2144, %v2135
        %2153 = vst [vmem:[#allocation2] sm:$0xff] %v2145
        %2154 = vst [vmem:[#allocation2 + $0x8] sm:$0xff] %v2146
        %2155 = vst [vmem:[#allocation2 + $0x10] sm:$0xff] %v2147
        %2156 = vst [vmem:[#allocation2 + $0x18] sm:$0xff] %v2148
        %2157 = vst [vmem:[#allocation2 + $0x20] sm:$0xff] %v2149
        %2158 = vst [vmem:[#allocation2 + $0x28] sm:$0xff] %v2150
        %2159 = vst [vmem:[#allocation2 + $0x30] sm:$0xff] %v2151
        %2160 = vst [vmem:[#allocation2 + $0x38] sm:$0xff] %v2152
        %v2161 = vld [vmem:[%s1668] sm:$0xff]
        %v2162 = vld [vmem:[%s1668 + $0x8] sm:$0xff]
        %v2163 = vld [vmem:[%s1668 + $0x10] sm:$0x11]
        %v2164 = vld [vmem:[%s1668 + $0x18] sm:$0x11]
        %v2165 = vld [vmem:[%s1668 + $0x20] sm:$0xff]
        %v2166 = vld [vmem:[%s1668 + $0x28] sm:$0xff]
        %v2167 = vld [vmem:[%s1668 + $0x30] sm:$0x11]
        %v2168 = vld [vmem:[%s1668 + $0x38] sm:$0x11]
        %v2169 = vld [vmem:[%s1668 + $0x40] sm:$0xff]
        %v2170 = vld [vmem:[%s1668 + $0x48] sm:$0xff]
        %v2171 = vld [vmem:[%s1668 + $0x50] sm:$0x11]
        %v2172 = vld [vmem:[%s1668 + $0x58] sm:$0x11]
        %v2173 = vld [vmem:[%s1668 + $0x60] sm:$0xff]
        %v2174 = vld [vmem:[%s1668 + $0x68] sm:$0xff]
        %v2175 = vld [vmem:[%s1668 + $0x70] sm:$0x11]
        %v2176 = vld [vmem:[%s1668 + $0x78] sm:$0x11]
        %v2177 = vld [vmem:[%s1668 + $0x80] sm:$0xff]
        %v2178 = vld [vmem:[%s1668 + $0x88] sm:$0xff]
        %v2179 = vld [vmem:[%s1668 + $0x90] sm:$0x11]
        %v2180 = vld [vmem:[%s1668 + $0x98] sm:$0x11]
        %v2181 = vld [vmem:[%s1668 + $0xa0] sm:$0xff]
        %v2182 = vld [vmem:[%s1668 + $0xa8] sm:$0xff]
        %v2183 = vld [vmem:[%s1668 + $0xb0] sm:$0x11]
        %v2184 = vld [vmem:[%s1668 + $0xb8] sm:$0x11]
        %v2185 = vld [vmem:[%s1668 + $0xc0] sm:$0xff]
        %v2186 = vld [vmem:[%s1668 + $0xc8] sm:$0xff]
        %v2187 = vld [vmem:[%s1668 + $0xd0] sm:$0x11]
        %v2188 = vld [vmem:[%s1668 + $0xd8] sm:$0x11]
        %v2189 = vld [vmem:[%s1668 + $0xe0] sm:$0xff]
        %v2190 = vld [vmem:[%s1668 + $0xe8] sm:$0xff]
        %v2191 = vld [vmem:[%s1668 + $0xf0] sm:$0x11]
        %v2192 = vld [vmem:[%s1668 + $0xf8] sm:$0x11]
        %v2194 = vshrl.u32 %v2161, 16
        %v2196 = vrot.slane %v2194, 4
        %v2197 = vshll.u32 %v2161, 16
        %v2199 = vrot.slane %v2197, 5
        %v2200 = vor.u32 %v2196, %v2199
        %v2201 = vrot.slane %v2200, 4
        %v2203 = vshll.u32 %v2163, 16
        %v2205 = vrot.slane %v2203, 5
        %v2206 = vsel %vm671, %v2201, %v2205
        %v2208 = vshrl.u32 %v2162, 16
        %v2210 = vrot.slane %v2208, 4
        %v2211 = vshll.u32 %v2162, 16
        %v2213 = vrot.slane %v2211, 5
        %v2214 = vor.u32 %v2210, %v2213
        %v2215 = vrot.slane %v2214, 4
        %v2217 = vshll.u32 %v2164, 16
        %v2219 = vrot.slane %v2217, 5
        %v2220 = vsel %vm671, %v2215, %v2219
        %v2222 = vshrl.u32 %v2165, 16
        %v2224 = vrot.slane %v2222, 4
        %v2225 = vshll.u32 %v2165, 16
        %v2227 = vrot.slane %v2225, 5
        %v2228 = vor.u32 %v2224, %v2227
        %v2229 = vrot.slane %v2228, 4
        %v2231 = vshll.u32 %v2167, 16
        %v2233 = vrot.slane %v2231, 5
        %v2234 = vsel %vm671, %v2229, %v2233
        %v2236 = vshrl.u32 %v2166, 16
        %v2238 = vrot.slane %v2236, 4
        %v2239 = vshll.u32 %v2166, 16
        %v2241 = vrot.slane %v2239, 5
        %v2242 = vor.u32 %v2238, %v2241
        %v2243 = vrot.slane %v2242, 4
        %v2245 = vshll.u32 %v2168, 16
        %v2247 = vrot.slane %v2245, 5
        %v2248 = vsel %vm671, %v2243, %v2247
        %v2250 = vshrl.u32 %v2169, 16
        %v2252 = vrot.slane %v2250, 4
        %v2253 = vshll.u32 %v2169, 16
        %v2255 = vrot.slane %v2253, 5
        %v2256 = vor.u32 %v2252, %v2255
        %v2257 = vrot.slane %v2256, 4
        %v2259 = vshll.u32 %v2171, 16
        %v2261 = vrot.slane %v2259, 5
        %v2262 = vsel %vm671, %v2257, %v2261
        %v2264 = vshrl.u32 %v2170, 16
        %v2266 = vrot.slane %v2264, 4
        %v2267 = vshll.u32 %v2170, 16
        %v2269 = vrot.slane %v2267, 5
        %v2270 = vor.u32 %v2266, %v2269
        %v2271 = vrot.slane %v2270, 4
        %v2273 = vshll.u32 %v2172, 16
        %v2275 = vrot.slane %v2273, 5
        %v2276 = vsel %vm671, %v2271, %v2275
        %v2278 = vshrl.u32 %v2173, 16
        %v2280 = vrot.slane %v2278, 4
        %v2281 = vshll.u32 %v2173, 16
        %v2283 = vrot.slane %v2281, 5
        %v2284 = vor.u32 %v2280, %v2283
        %v2285 = vrot.slane %v2284, 4
        %v2287 = vshll.u32 %v2175, 16
        %v2289 = vrot.slane %v2287, 5
        %v2290 = vsel %vm671, %v2285, %v2289
        %v2292 = vshrl.u32 %v2174, 16
        %v2294 = vrot.slane %v2292, 4
        %v2295 = vshll.u32 %v2174, 16
        %v2297 = vrot.slane %v2295, 5
        %v2298 = vor.u32 %v2294, %v2297
        %v2299 = vrot.slane %v2298, 4
        %v2301 = vshll.u32 %v2176, 16
        %v2303 = vrot.slane %v2301, 5
        %v2304 = vsel %vm671, %v2299, %v2303
        %v2306 = vshrl.u32 %v2177, 16
        %v2308 = vrot.slane %v2306, 4
        %v2309 = vshll.u32 %v2177, 16
        %v2311 = vrot.slane %v2309, 5
        %v2312 = vor.u32 %v2308, %v2311
        %v2313 = vrot.slane %v2312, 4
        %v2315 = vshll.u32 %v2179, 16
        %v2317 = vrot.slane %v2315, 5
        %v2318 = vsel %vm671, %v2313, %v2317
        %v2320 = vshrl.u32 %v2178, 16
        %v2322 = vrot.slane %v2320, 4
        %v2323 = vshll.u32 %v2178, 16
        %v2325 = vrot.slane %v2323, 5
        %v2326 = vor.u32 %v2322, %v2325
        %v2327 = vrot.slane %v2326, 4
        %v2329 = vshll.u32 %v2180, 16
        %v2331 = vrot.slane %v2329, 5
        %v2332 = vsel %vm671, %v2327, %v2331
        %v2334 = vshrl.u32 %v2181, 16
        %v2336 = vrot.slane %v2334, 4
        %v2337 = vshll.u32 %v2181, 16
        %v2339 = vrot.slane %v2337, 5
        %v2340 = vor.u32 %v2336, %v2339
        %v2341 = vrot.slane %v2340, 4
        %v2343 = vshll.u32 %v2183, 16
        %v2345 = vrot.slane %v2343, 5
        %v2346 = vsel %vm671, %v2341, %v2345
        %v2348 = vshrl.u32 %v2182, 16
        %v2350 = vrot.slane %v2348, 4
        %v2351 = vshll.u32 %v2182, 16
        %v2353 = vrot.slane %v2351, 5
        %v2354 = vor.u32 %v2350, %v2353
        %v2355 = vrot.slane %v2354, 4
        %v2357 = vshll.u32 %v2184, 16
        %v2359 = vrot.slane %v2357, 5
        %v2360 = vsel %vm671, %v2355, %v2359
        %v2362 = vshrl.u32 %v2185, 16
        %v2364 = vrot.slane %v2362, 4
        %v2365 = vshll.u32 %v2185, 16
        %v2367 = vrot.slane %v2365, 5
        %v2368 = vor.u32 %v2364, %v2367
        %v2369 = vrot.slane %v2368, 4
        %v2371 = vshll.u32 %v2187, 16
        %v2373 = vrot.slane %v2371, 5
        %v2374 = vsel %vm671, %v2369, %v2373
        %v2376 = vshrl.u32 %v2186, 16
        %v2378 = vrot.slane %v2376, 4
        %v2379 = vshll.u32 %v2186, 16
        %v2381 = vrot.slane %v2379, 5
        %v2382 = vor.u32 %v2378, %v2381
        %v2383 = vrot.slane %v2382, 4
        %v2385 = vshll.u32 %v2188, 16
        %v2387 = vrot.slane %v2385, 5
        %v2388 = vsel %vm671, %v2383, %v2387
        %v2390 = vshrl.u32 %v2189, 16
        %v2392 = vrot.slane %v2390, 4
        %v2393 = vshll.u32 %v2189, 16
        %v2395 = vrot.slane %v2393, 5
        %v2396 = vor.u32 %v2392, %v2395
        %v2397 = vrot.slane %v2396, 4
        %v2399 = vshll.u32 %v2191, 16
        %v2401 = vrot.slane %v2399, 5
        %v2402 = vsel %vm671, %v2397, %v2401
        %v2404 = vshrl.u32 %v2190, 16
        %v2406 = vrot.slane %v2404, 4
        %v2407 = vshll.u32 %v2190, 16
        %v2409 = vrot.slane %v2407, 5
        %v2410 = vor.u32 %v2406, %v2409
        %v2411 = vrot.slane %v2410, 4
        %v2413 = vshll.u32 %v2192, 16
        %v2415 = vrot.slane %v2413, 5
        %v2416 = vsel %vm671, %v2411, %v2415
        %v2417 = vld [vmem:[%s1 + $0x380] sm:$0xf]
        %v2418 = vld [vmem:[%s1 + $0x384] sm:$0xf]
        %v2419 = vld [vmem:[%s1 + $0x388] sm:$0xf]
        %v2420 = vld [vmem:[%s1 + $0x38c] sm:$0xf]
        %v2421 = vld [vmem:[%s1 + $0x390] sm:$0xf]
        %v2422 = vld [vmem:[%s1 + $0x394] sm:$0xf]
        %v2423 = vld [vmem:[%s1 + $0x398] sm:$0xf]
        %v2424 = vld [vmem:[%s1 + $0x39c] sm:$0xf]
        %v2425 = vld [vmem:[%s1 + $0x3a0] sm:$0xf]
        %v2426 = vld [vmem:[%s1 + $0x3a4] sm:$0xf]
        %v2427 = vld [vmem:[%s1 + $0x3a8] sm:$0xf]
        %v2428 = vld [vmem:[%s1 + $0x3ac] sm:$0xf]
        %v2429 = vld [vmem:[%s1 + $0x3b0] sm:$0xf]
        %v2430 = vld [vmem:[%s1 + $0x3b4] sm:$0xf]
        %v2431 = vld [vmem:[%s1 + $0x3b8] sm:$0xf]
        %v2432 = vld [vmem:[%s1 + $0x3bc] sm:$0xf]
        %v2433 = vld [vmem:[%s1 + $0x3c0] sm:$0xf]
        %v2434 = vld [vmem:[%s1 + $0x3c4] sm:$0xf]
        %v2435 = vld [vmem:[%s1 + $0x3c8] sm:$0xf]
        %v2436 = vld [vmem:[%s1 + $0x3cc] sm:$0xf]
        %v2437 = vld [vmem:[%s1 + $0x3d0] sm:$0xf]
        %v2438 = vld [vmem:[%s1 + $0x3d4] sm:$0xf]
        %v2439 = vld [vmem:[%s1 + $0x3d8] sm:$0xf]
        %v2440 = vld [vmem:[%s1 + $0x3dc] sm:$0xf]
        %v2441 = vld [vmem:[%s1 + $0x3e0] sm:$0xf]
        %v2442 = vld [vmem:[%s1 + $0x3e4] sm:$0xf]
        %v2443 = vld [vmem:[%s1 + $0x3e8] sm:$0xf]
        %v2444 = vld [vmem:[%s1 + $0x3ec] sm:$0xf]
        %v2445 = vld [vmem:[%s1 + $0x3f0] sm:$0xf]
        %v2446 = vld [vmem:[%s1 + $0x3f4] sm:$0xf]
        %v2447 = vld [vmem:[%s1 + $0x3f8] sm:$0xf]
        %v2448 = vld [vmem:[%s1 + $0x3fc] sm:$0xf]
        %v2449 = vld [vmem:[%s1 + $0x400] sm:$0xf]
        %v2450 = vld [vmem:[%s1 + $0x404] sm:$0xf]
        %v2451 = vld [vmem:[%s1 + $0x408] sm:$0xf]
        %v2452 = vld [vmem:[%s1 + $0x40c] sm:$0xf]
        %v2453 = vld [vmem:[%s1 + $0x410] sm:$0xf]
        %v2454 = vld [vmem:[%s1 + $0x414] sm:$0xf]
        %v2455 = vld [vmem:[%s1 + $0x418] sm:$0xf]
        %v2456 = vld [vmem:[%s1 + $0x41c] sm:$0xf]
        %v2457 = vld [vmem:[%s1 + $0x420] sm:$0xf]
        %v2458 = vld [vmem:[%s1 + $0x424] sm:$0xf]
        %v2459 = vld [vmem:[%s1 + $0x428] sm:$0xf]
        %v2460 = vld [vmem:[%s1 + $0x42c] sm:$0xf]
        %v2461 = vld [vmem:[%s1 + $0x430] sm:$0xf]
        %v2462 = vld [vmem:[%s1 + $0x434] sm:$0xf]
        %v2463 = vld [vmem:[%s1 + $0x438] sm:$0xf]
        %v2464 = vld [vmem:[%s1 + $0x43c] sm:$0xf]
        %v2465 = vld [vmem:[%s1 + $0x440] sm:$0xf]
        %v2466 = vld [vmem:[%s1 + $0x444] sm:$0xf]
        %v2467 = vld [vmem:[%s1 + $0x448] sm:$0xf]
        %v2468 = vld [vmem:[%s1 + $0x44c] sm:$0xf]
        %v2469 = vld [vmem:[%s1 + $0x450] sm:$0xf]
        %v2470 = vld [vmem:[%s1 + $0x454] sm:$0xf]
        %v2471 = vld [vmem:[%s1 + $0x458] sm:$0xf]
        %v2472 = vld [vmem:[%s1 + $0x45c] sm:$0xf]
        %v2473 = vld [vmem:[%s1 + $0x460] sm:$0xf]
        %v2474 = vld [vmem:[%s1 + $0x464] sm:$0xf]
        %v2475 = vld [vmem:[%s1 + $0x468] sm:$0xf]
        %v2476 = vld [vmem:[%s1 + $0x46c] sm:$0xf]
        %v2477 = vld [vmem:[%s1 + $0x470] sm:$0xf]
        %v2478 = vld [vmem:[%s1 + $0x474] sm:$0xf]
        %v2479 = vld [vmem:[%s1 + $0x478] sm:$0xf]
        %v2480 = vld [vmem:[%s1 + $0x47c] sm:$0xf]
        %v2481 = vunpack.c.l.b16 %v2206
        %v2482 = vunpack.c.h.b16 %v2206
        %v2483 = vunpack.c.l.b16 %v2220
        %v2484 = vunpack.c.h.b16 %v2220
        %v2485 = vunpack.c.l.b16 %v2234
        %v2486 = vunpack.c.h.b16 %v2234
        %v2487 = vunpack.c.l.b16 %v2248
        %v2488 = vunpack.c.h.b16 %v2248
        %v2489 = vunpack.c.l.b16 %v2262
        %v2490 = vunpack.c.h.b16 %v2262
        %v2491 = vunpack.c.l.b16 %v2276
        %v2492 = vunpack.c.h.b16 %v2276
        %v2493 = vunpack.c.l.b16 %v2290
        %v2494 = vunpack.c.h.b16 %v2290
        %v2495 = vunpack.c.l.b16 %v2304
        %v2496 = vunpack.c.h.b16 %v2304
        %v2497 = vunpack.c.l.b16 %v2318
        %v2498 = vunpack.c.h.b16 %v2318
        %v2499 = vunpack.c.l.b16 %v2332
        %v2500 = vunpack.c.h.b16 %v2332
        %v2501 = vunpack.c.l.b16 %v2346
        %v2502 = vunpack.c.h.b16 %v2346
        %v2503 = vunpack.c.l.b16 %v2360
        %v2504 = vunpack.c.h.b16 %v2360
        %v2505 = vunpack.c.l.b16 %v2374
        %v2506 = vunpack.c.h.b16 %v2374
        %v2507 = vunpack.c.l.b16 %v2388
        %v2508 = vunpack.c.h.b16 %v2388
        %v2509 = vunpack.c.l.b16 %v2402
        %v2510 = vunpack.c.h.b16 %v2402
        %v2511 = vunpack.c.l.b16 %v2416
        %v2512 = vunpack.c.h.b16 %v2416
        %v2513 = vpack.c.b16 %v2485, %v2481
        %v2514 = vpack.c.b16 %v2486, %v2482
        %v2515 = vpack.c.b16 %v2487, %v2483
        %v2516 = vpack.c.b16 %v2488, %v2484
        %v2517 = vpack.c.b16 %v2493, %v2489
        %v2518 = vpack.c.b16 %v2494, %v2490
        %v2519 = vpack.c.b16 %v2495, %v2491
        %v2520 = vpack.c.b16 %v2496, %v2492
        %v2521 = vpack.c.b16 %v2501, %v2497
        %v2522 = vpack.c.b16 %v2502, %v2498
        %v2523 = vpack.c.b16 %v2503, %v2499
        %v2524 = vpack.c.b16 %v2504, %v2500
        %v2525 = vpack.c.b16 %v2509, %v2505
        %v2526 = vpack.c.b16 %v2510, %v2506
        %v2527 = vpack.c.b16 %v2511, %v2507
        %v2528 = vpack.c.b16 %v2512, %v2508
        %v2609 = vunpack.c.l.b16 %v2417
        %v2610 = vunpack.c.l.b16 %v2418
        %v2611 = vunpack.c.l.b16 %v2419
        %v2612 = vunpack.c.l.b16 %v2420
        %v2613 = vunpack.c.l.b16 %v2421
        %v2614 = vunpack.c.l.b16 %v2422
        %v2615 = vunpack.c.l.b16 %v2423
        %v2616 = vunpack.c.l.b16 %v2424
        %v2617 = vunpack.c.l.b16 %v2425
        %v2618 = vunpack.c.l.b16 %v2426
        %v2619 = vunpack.c.l.b16 %v2427
        %v2620 = vunpack.c.l.b16 %v2428
        %v2621 = vunpack.c.l.b16 %v2429
        %v2622 = vunpack.c.l.b16 %v2430
        %v2623 = vunpack.c.l.b16 %v2431
        %v2624 = vunpack.c.l.b16 %v2432
        %v2625 = vunpack.c.l.b16 %v2433
        %v2626 = vunpack.c.l.b16 %v2434
        %v2627 = vunpack.c.l.b16 %v2435
        %v2628 = vunpack.c.l.b16 %v2436
        %v2629 = vunpack.c.l.b16 %v2437
        %v2630 = vunpack.c.l.b16 %v2438
        %v2631 = vunpack.c.l.b16 %v2439
        %v2632 = vunpack.c.l.b16 %v2440
        %v2633 = vunpack.c.l.b16 %v2441
        %v2634 = vunpack.c.l.b16 %v2442
        %v2635 = vunpack.c.l.b16 %v2443
        %v2636 = vunpack.c.l.b16 %v2444
        %v2637 = vunpack.c.l.b16 %v2445
        %v2638 = vunpack.c.l.b16 %v2446
        %v2639 = vunpack.c.l.b16 %v2447
        %v2640 = vunpack.c.l.b16 %v2448
        %v2641 = vunpack.c.l.b16 %v2449
        %v2642 = vunpack.c.l.b16 %v2450
        %v2643 = vunpack.c.l.b16 %v2451
        %v2644 = vunpack.c.l.b16 %v2452
        %v2645 = vunpack.c.l.b16 %v2453
        %v2646 = vunpack.c.l.b16 %v2454
        %v2647 = vunpack.c.l.b16 %v2455
        %v2648 = vunpack.c.l.b16 %v2456
        %v2649 = vunpack.c.l.b16 %v2457
        %v2650 = vunpack.c.l.b16 %v2458
        %v2651 = vunpack.c.l.b16 %v2459
        %v2652 = vunpack.c.l.b16 %v2460
        %v2653 = vunpack.c.l.b16 %v2461
        %v2654 = vunpack.c.l.b16 %v2462
        %v2655 = vunpack.c.l.b16 %v2463
        %v2656 = vunpack.c.l.b16 %v2464
        %v2657 = vunpack.c.l.b16 %v2465
        %v2658 = vunpack.c.l.b16 %v2466
        %v2659 = vunpack.c.l.b16 %v2467
        %v2660 = vunpack.c.l.b16 %v2468
        %v2661 = vunpack.c.l.b16 %v2469
        %v2662 = vunpack.c.l.b16 %v2470
        %v2663 = vunpack.c.l.b16 %v2471
        %v2664 = vunpack.c.l.b16 %v2472
        %v2665 = vunpack.c.l.b16 %v2473
        %v2666 = vunpack.c.l.b16 %v2474
        %v2667 = vunpack.c.l.b16 %v2475
        %v2668 = vunpack.c.l.b16 %v2476
        %v2669 = vunpack.c.l.b16 %v2477
        %v2670 = vunpack.c.l.b16 %v2478
        %v2671 = vunpack.c.l.b16 %v2479
        %v2672 = vunpack.c.l.b16 %v2480
        %v2673 = vpack.c.b16 %v2610, %v2609
        %v2674 = vpack.c.b16 %v2612, %v2611
        %v2675 = vpack.c.b16 %v2614, %v2613
        %v2676 = vpack.c.b16 %v2616, %v2615
        %v2677 = vpack.c.b16 %v2618, %v2617
        %v2678 = vpack.c.b16 %v2620, %v2619
        %v2679 = vpack.c.b16 %v2622, %v2621
        %v2680 = vpack.c.b16 %v2624, %v2623
        %v2681 = vpack.c.b16 %v2626, %v2625
        %v2682 = vpack.c.b16 %v2628, %v2627
        %v2683 = vpack.c.b16 %v2630, %v2629
        %v2684 = vpack.c.b16 %v2632, %v2631
        %v2685 = vpack.c.b16 %v2634, %v2633
        %v2686 = vpack.c.b16 %v2636, %v2635
        %v2687 = vpack.c.b16 %v2638, %v2637
        %v2688 = vpack.c.b16 %v2640, %v2639
        %v2689 = vpack.c.b16 %v2642, %v2641
        %v2690 = vpack.c.b16 %v2644, %v2643
        %v2691 = vpack.c.b16 %v2646, %v2645
        %v2692 = vpack.c.b16 %v2648, %v2647
        %v2693 = vpack.c.b16 %v2650, %v2649
        %v2694 = vpack.c.b16 %v2652, %v2651
        %v2695 = vpack.c.b16 %v2654, %v2653
        %v2696 = vpack.c.b16 %v2656, %v2655
        %v2697 = vpack.c.b16 %v2658, %v2657
        %v2698 = vpack.c.b16 %v2660, %v2659
        %v2699 = vpack.c.b16 %v2662, %v2661
        %v2700 = vpack.c.b16 %v2664, %v2663
        %v2701 = vpack.c.b16 %v2666, %v2665
        %v2702 = vpack.c.b16 %v2668, %v2667
        %v2703 = vpack.c.b16 %v2670, %v2669
        %v2704 = vpack.c.b16 %v2672, %v2671
        %2737 = vmatpush.bf16.msra.mxu0 %v2680
        %2738 = vmatpush.bf16.msra.mxu0 %v2679
        %2739 = vmatpush.bf16.msra.mxu0 %v2678
        %2740 = vmatpush.bf16.msra.mxu0 %v2677
        %2741 = vmatpush.bf16.msra.mxu0 %v2676
        %2742 = vmatpush.bf16.msra.mxu0 %v2675
        %2743 = vmatpush.bf16.msra.mxu0 %v2674
        %2744 = vmatpush.bf16.msra.mxu0 %v2673
        %2745 = vmatmul.bf16.gmra.mxu0 %v2513
        %v2746 = vpop.f32.mrf.mxu0
        %v2747 = vadd.f32 0.0, %v2746
        %v2748 = vpop.f32.mrf.mxu0
        %v2749 = vadd.f32 0.0, %v2748
        %2750 = vmatmul.bf16.gmra.mxu0 %v2517
        %v2751 = vpop.f32.mrf.mxu0
        %v2752 = vadd.f32 0.0, %v2751
        %v2753 = vpop.f32.mrf.mxu0
        %v2754 = vadd.f32 0.0, %v2753
        %2755 = vmatmul.bf16.gmra.mxu0 %v2521
        %v2756 = vpop.f32.mrf.mxu0
        %v2757 = vadd.f32 0.0, %v2756
        %v2758 = vpop.f32.mrf.mxu0
        %v2759 = vadd.f32 0.0, %v2758
        %2760 = vmatmul.bf16.gmra.mxu0 %v2525
        %v2761 = vpop.f32.mrf.mxu0
        %v2762 = vadd.f32 0.0, %v2761
        %v2763 = vpop.f32.mrf.mxu0
        %v2764 = vadd.f32 0.0, %v2763
        %2765 = vdwg.mxu0
        %2766 = vmatpush.bf16.msra.mxu0 %v2688
        %2767 = vmatpush.bf16.msra.mxu0 %v2687
        %2768 = vmatpush.bf16.msra.mxu0 %v2686
        %2769 = vmatpush.bf16.msra.mxu0 %v2685
        %2770 = vmatpush.bf16.msra.mxu0 %v2684
        %2771 = vmatpush.bf16.msra.mxu0 %v2683
        %2772 = vmatpush.bf16.msra.mxu0 %v2682
        %2773 = vmatpush.bf16.msra.mxu0 %v2681
        %2774 = vmatmul.bf16.gmra.mxu0 %v2514
        %v2775 = vpop.f32.mrf.mxu0
        %v2776 = vadd.f32 %v2747, %v2775
        %v2777 = vpop.f32.mrf.mxu0
        %v2778 = vadd.f32 %v2749, %v2777
        %2779 = vmatmul.bf16.gmra.mxu0 %v2518
        %v2780 = vpop.f32.mrf.mxu0
        %v2781 = vadd.f32 %v2752, %v2780
        %v2782 = vpop.f32.mrf.mxu0
        %v2783 = vadd.f32 %v2754, %v2782
        %2784 = vmatmul.bf16.gmra.mxu0 %v2522
        %v2785 = vpop.f32.mrf.mxu0
        %v2786 = vadd.f32 %v2757, %v2785
        %v2787 = vpop.f32.mrf.mxu0
        %v2788 = vadd.f32 %v2759, %v2787
        %2789 = vmatmul.bf16.gmra.mxu0 %v2526
        %v2790 = vpop.f32.mrf.mxu0
        %v2791 = vadd.f32 %v2762, %v2790
        %v2792 = vpop.f32.mrf.mxu0
        %v2793 = vadd.f32 %v2764, %v2792
        %2794 = vdwg.mxu0
        %2795 = vmatpush.bf16.msra.mxu0 %v2696
        %2796 = vmatpush.bf16.msra.mxu0 %v2695
        %2797 = vmatpush.bf16.msra.mxu0 %v2694
        %2798 = vmatpush.bf16.msra.mxu0 %v2693
        %2799 = vmatpush.bf16.msra.mxu0 %v2692
        %2800 = vmatpush.bf16.msra.mxu0 %v2691
        %2801 = vmatpush.bf16.msra.mxu0 %v2690
        %2802 = vmatpush.bf16.msra.mxu0 %v2689
        %2803 = vmatmul.bf16.gmra.mxu0 %v2515
        %v2804 = vpop.f32.mrf.mxu0
        %v2805 = vadd.f32 %v2776, %v2804
        %v2806 = vpop.f32.mrf.mxu0
        %v2807 = vadd.f32 %v2778, %v2806
        %2808 = vmatmul.bf16.gmra.mxu0 %v2519
        %v2809 = vpop.f32.mrf.mxu0
        %v2810 = vadd.f32 %v2781, %v2809
        %v2811 = vpop.f32.mrf.mxu0
        %v2812 = vadd.f32 %v2783, %v2811
        %2813 = vmatmul.bf16.gmra.mxu0 %v2523
        %v2814 = vpop.f32.mrf.mxu0
        %v2815 = vadd.f32 %v2786, %v2814
        %v2816 = vpop.f32.mrf.mxu0
        %v2817 = vadd.f32 %v2788, %v2816
        %2818 = vmatmul.bf16.gmra.mxu0 %v2527
        %v2819 = vpop.f32.mrf.mxu0
        %v2820 = vadd.f32 %v2791, %v2819
        %v2821 = vpop.f32.mrf.mxu0
        %v2822 = vadd.f32 %v2793, %v2821
        %2823 = vdwg.mxu0
        %2824 = vmatpush.bf16.msra.mxu0 %v2704
        %2825 = vmatpush.bf16.msra.mxu0 %v2703
        %2826 = vmatpush.bf16.msra.mxu0 %v2702
        %2827 = vmatpush.bf16.msra.mxu0 %v2701
        %2828 = vmatpush.bf16.msra.mxu0 %v2700
        %2829 = vmatpush.bf16.msra.mxu0 %v2699
        %2830 = vmatpush.bf16.msra.mxu0 %v2698
        %2831 = vmatpush.bf16.msra.mxu0 %v2697
        %2832 = vmatmul.bf16.gmra.mxu0 %v2516
        %v2833 = vpop.f32.mrf.mxu0
        %v2834 = vadd.f32 %v2805, %v2833
        %v2835 = vpop.f32.mrf.mxu0
        %v2836 = vadd.f32 %v2807, %v2835
        %2837 = vmatmul.bf16.gmra.mxu0 %v2520
        %v2838 = vpop.f32.mrf.mxu0
        %v2839 = vadd.f32 %v2810, %v2838
        %v2840 = vpop.f32.mrf.mxu0
        %v2841 = vadd.f32 %v2812, %v2840
        %2842 = vmatmul.bf16.gmra.mxu0 %v2524
        %v2843 = vpop.f32.mrf.mxu0
        %v2844 = vadd.f32 %v2815, %v2843
        %v2845 = vpop.f32.mrf.mxu0
        %v2846 = vadd.f32 %v2817, %v2845
        %2847 = vmatmul.bf16.gmra.mxu0 %v2528
        %v2848 = vpop.f32.mrf.mxu0
        %v2849 = vadd.f32 %v2820, %v2848
        %v2850 = vpop.f32.mrf.mxu0
        %v2851 = vadd.f32 %v2822, %v2850
        %2852 = vdwg.mxu0
        %v2853 = vld [vmem:[#allocation2] sm:$0xff]
        %v2854 = vld [vmem:[#allocation2 + $0x8] sm:$0xff]
        %v2855 = vld [vmem:[#allocation2 + $0x10] sm:$0xff]
        %v2856 = vld [vmem:[#allocation2 + $0x18] sm:$0xff]
        %v2857 = vld [vmem:[#allocation2 + $0x20] sm:$0xff]
        %v2858 = vld [vmem:[#allocation2 + $0x28] sm:$0xff]
        %v2859 = vld [vmem:[#allocation2 + $0x30] sm:$0xff]
        %v2860 = vld [vmem:[#allocation2 + $0x38] sm:$0xff]
        %v2861 = vadd.f32 %v2853, %v2834
        %v2862 = vadd.f32 %v2854, %v2836
        %v2863 = vadd.f32 %v2855, %v2839
        %v2864 = vadd.f32 %v2856, %v2841
        %v2865 = vadd.f32 %v2857, %v2844
        %v2866 = vadd.f32 %v2858, %v2846
        %v2867 = vadd.f32 %v2859, %v2849
        %v2868 = vadd.f32 %v2860, %v2851
        %2869 = vst [vmem:[#allocation2] sm:$0xff] %v2861
        %2870 = vst [vmem:[#allocation2 + $0x8] sm:$0xff] %v2862
        %2871 = vst [vmem:[#allocation2 + $0x10] sm:$0xff] %v2863
        %2872 = vst [vmem:[#allocation2 + $0x18] sm:$0xff] %v2864
        %2873 = vst [vmem:[#allocation2 + $0x20] sm:$0xff] %v2865
        %2874 = vst [vmem:[#allocation2 + $0x28] sm:$0xff] %v2866
        %2875 = vst [vmem:[#allocation2 + $0x30] sm:$0xff] %v2867
        %2876 = vst [vmem:[#allocation2 + $0x38] sm:$0xff] %v2868
        %v2877 = vld [vmem:[%s1668] sm:$0xee]
        %v2878 = vld [vmem:[%s1668 + $0x10] sm:$0x11]
        %v2879 = vld [vmem:[%s1668 + $0x20] sm:$0xee]
        %v2880 = vld [vmem:[%s1668 + $0x30] sm:$0x11]
        %v2881 = vld [vmem:[%s1668 + $0x40] sm:$0xee]
        %v2882 = vld [vmem:[%s1668 + $0x50] sm:$0x11]
        %v2883 = vld [vmem:[%s1668 + $0x60] sm:$0xee]
        %v2884 = vld [vmem:[%s1668 + $0x70] sm:$0x11]
        %v2885 = vld [vmem:[%s1668 + $0x80] sm:$0xee]
        %v2886 = vld [vmem:[%s1668 + $0x90] sm:$0x11]
        %v2887 = vld [vmem:[%s1668 + $0xa0] sm:$0xee]
        %v2888 = vld [vmem:[%s1668 + $0xb0] sm:$0x11]
        %v2889 = vld [vmem:[%s1668 + $0xc0] sm:$0xee]
        %v2890 = vld [vmem:[%s1668 + $0xd0] sm:$0x11]
        %v2891 = vld [vmem:[%s1668 + $0xe0] sm:$0xee]
        %v2892 = vld [vmem:[%s1668 + $0xf0] sm:$0x11]
        %v2909 = vrot.slane %v2877, 5
        %v2910 = vrot.slane %v2909, 4
        %v2911 = vrot.slane %v2878, 5
        %v2912 = vsel %vm1390, %v2910, %v2911
        %v2913 = vrot.slane %v2879, 5
        %v2914 = vrot.slane %v2913, 4
        %v2915 = vrot.slane %v2880, 5
        %v2916 = vsel %vm1390, %v2914, %v2915
        %v2917 = vrot.slane %v2881, 5
        %v2918 = vrot.slane %v2917, 4
        %v2919 = vrot.slane %v2882, 5
        %v2920 = vsel %vm1390, %v2918, %v2919
        %v2921 = vrot.slane %v2883, 5
        %v2922 = vrot.slane %v2921, 4
        %v2923 = vrot.slane %v2884, 5
        %v2924 = vsel %vm1390, %v2922, %v2923
        %v2925 = vrot.slane %v2885, 5
        %v2926 = vrot.slane %v2925, 4
        %v2927 = vrot.slane %v2886, 5
        %v2928 = vsel %vm1390, %v2926, %v2927
        %v2929 = vrot.slane %v2887, 5
        %v2930 = vrot.slane %v2929, 4
        %v2931 = vrot.slane %v2888, 5
        %v2932 = vsel %vm1390, %v2930, %v2931
        %v2933 = vrot.slane %v2889, 5
        %v2934 = vrot.slane %v2933, 4
        %v2935 = vrot.slane %v2890, 5
        %v2936 = vsel %vm1390, %v2934, %v2935
        %v2937 = vrot.slane %v2891, 5
        %v2938 = vrot.slane %v2937, 4
        %v2939 = vrot.slane %v2892, 5
        %v2940 = vsel %vm1390, %v2938, %v2939
        %v2941 = vld [vmem:[%s1 + $0x480] sm:$0xf]
        %v2942 = vld [vmem:[%s1 + $0x484] sm:$0xf]
        %v2943 = vld [vmem:[%s1 + $0x488] sm:$0xf]
        %v2944 = vld [vmem:[%s1 + $0x48c] sm:$0xf]
        %v2945 = vld [vmem:[%s1 + $0x490] sm:$0xf]
        %v2946 = vld [vmem:[%s1 + $0x494] sm:$0xf]
        %v2947 = vld [vmem:[%s1 + $0x498] sm:$0xf]
        %v2948 = vld [vmem:[%s1 + $0x49c] sm:$0xf]
        %v2949 = vld [vmem:[%s1 + $0x4a0] sm:$0xf]
        %v2950 = vld [vmem:[%s1 + $0x4a4] sm:$0xf]
        %v2951 = vld [vmem:[%s1 + $0x4a8] sm:$0xf]
        %v2952 = vld [vmem:[%s1 + $0x4ac] sm:$0xf]
        %v2953 = vld [vmem:[%s1 + $0x4b0] sm:$0xf]
        %v2954 = vld [vmem:[%s1 + $0x4b4] sm:$0xf]
        %v2955 = vld [vmem:[%s1 + $0x4b8] sm:$0xf]
        %v2956 = vld [vmem:[%s1 + $0x4bc] sm:$0xf]
        %v2957 = vld [vmem:[%s1 + $0x4c0] sm:$0xf]
        %v2958 = vld [vmem:[%s1 + $0x4c4] sm:$0xf]
        %v2959 = vld [vmem:[%s1 + $0x4c8] sm:$0xf]
        %v2960 = vld [vmem:[%s1 + $0x4cc] sm:$0xf]
        %v2961 = vld [vmem:[%s1 + $0x4d0] sm:$0xf]
        %v2962 = vld [vmem:[%s1 + $0x4d4] sm:$0xf]
        %v2963 = vld [vmem:[%s1 + $0x4d8] sm:$0xf]
        %v2964 = vld [vmem:[%s1 + $0x4dc] sm:$0xf]
        %v2965 = vld [vmem:[%s1 + $0x4e0] sm:$0xf]
        %v2966 = vld [vmem:[%s1 + $0x4e4] sm:$0xf]
        %v2967 = vld [vmem:[%s1 + $0x4e8] sm:$0xf]
        %v2968 = vld [vmem:[%s1 + $0x4ec] sm:$0xf]
        %v2969 = vld [vmem:[%s1 + $0x4f0] sm:$0xf]
        %v2970 = vld [vmem:[%s1 + $0x4f4] sm:$0xf]
        %v2971 = vld [vmem:[%s1 + $0x4f8] sm:$0xf]
        %v2972 = vld [vmem:[%s1 + $0x4fc] sm:$0xf]
        %v2973 = vunpack.c.l.b16 %v2912
        %v2974 = vunpack.c.h.b16 %v2912
        %v2975 = vunpack.c.l.b16 %v2916
        %v2976 = vunpack.c.h.b16 %v2916
        %v2977 = vunpack.c.l.b16 %v2920
        %v2978 = vunpack.c.h.b16 %v2920
        %v2979 = vunpack.c.l.b16 %v2924
        %v2980 = vunpack.c.h.b16 %v2924
        %v2981 = vunpack.c.l.b16 %v2928
        %v2982 = vunpack.c.h.b16 %v2928
        %v2983 = vunpack.c.l.b16 %v2932
        %v2984 = vunpack.c.h.b16 %v2932
        %v2985 = vunpack.c.l.b16 %v2936
        %v2986 = vunpack.c.h.b16 %v2936
        %v2987 = vunpack.c.l.b16 %v2940
        %v2988 = vunpack.c.h.b16 %v2940
        %v2989 = vpack.c.b16 %v2975, %v2973
        %v2990 = vpack.c.b16 %v2976, %v2974
        %v2991 = vpack.c.b16 %v2979, %v2977
        %v2992 = vpack.c.b16 %v2980, %v2978
        %v2993 = vpack.c.b16 %v2983, %v2981
        %v2994 = vpack.c.b16 %v2984, %v2982
        %v2995 = vpack.c.b16 %v2987, %v2985
        %v2996 = vpack.c.b16 %v2988, %v2986
        %v3037 = vunpack.c.l.b16 %v2941
        %v3038 = vunpack.c.l.b16 %v2942
        %v3039 = vunpack.c.l.b16 %v2943
        %v3040 = vunpack.c.l.b16 %v2944
        %v3041 = vunpack.c.l.b16 %v2945
        %v3042 = vunpack.c.l.b16 %v2946
        %v3043 = vunpack.c.l.b16 %v2947
        %v3044 = vunpack.c.l.b16 %v2948
        %v3045 = vunpack.c.l.b16 %v2949
        %v3046 = vunpack.c.l.b16 %v2950
        %v3047 = vunpack.c.l.b16 %v2951
        %v3048 = vunpack.c.l.b16 %v2952
        %v3049 = vunpack.c.l.b16 %v2953
        %v3050 = vunpack.c.l.b16 %v2954
        %v3051 = vunpack.c.l.b16 %v2955
        %v3052 = vunpack.c.l.b16 %v2956
        %v3053 = vunpack.c.l.b16 %v2957
        %v3054 = vunpack.c.l.b16 %v2958
        %v3055 = vunpack.c.l.b16 %v2959
        %v3056 = vunpack.c.l.b16 %v2960
        %v3057 = vunpack.c.l.b16 %v2961
        %v3058 = vunpack.c.l.b16 %v2962
        %v3059 = vunpack.c.l.b16 %v2963
        %v3060 = vunpack.c.l.b16 %v2964
        %v3061 = vunpack.c.l.b16 %v2965
        %v3062 = vunpack.c.l.b16 %v2966
        %v3063 = vunpack.c.l.b16 %v2967
        %v3064 = vunpack.c.l.b16 %v2968
        %v3065 = vunpack.c.l.b16 %v2969
        %v3066 = vunpack.c.l.b16 %v2970
        %v3067 = vunpack.c.l.b16 %v2971
        %v3068 = vunpack.c.l.b16 %v2972
        %v3069 = vpack.c.b16 %v3038, %v3037
        %v3070 = vpack.c.b16 %v3040, %v3039
        %v3071 = vpack.c.b16 %v3042, %v3041
        %v3072 = vpack.c.b16 %v3044, %v3043
        %v3073 = vpack.c.b16 %v3046, %v3045
        %v3074 = vpack.c.b16 %v3048, %v3047
        %v3075 = vpack.c.b16 %v3050, %v3049
        %v3076 = vpack.c.b16 %v3052, %v3051
        %v3077 = vpack.c.b16 %v3054, %v3053
        %v3078 = vpack.c.b16 %v3056, %v3055
        %v3079 = vpack.c.b16 %v3058, %v3057
        %v3080 = vpack.c.b16 %v3060, %v3059
        %v3081 = vpack.c.b16 %v3062, %v3061
        %v3082 = vpack.c.b16 %v3064, %v3063
        %v3083 = vpack.c.b16 %v3066, %v3065
        %v3084 = vpack.c.b16 %v3068, %v3067
        %3101 = vmatpush.bf16.msra.mxu0 %v3076
        %3102 = vmatpush.bf16.msra.mxu0 %v3075
        %3103 = vmatpush.bf16.msra.mxu0 %v3074
        %3104 = vmatpush.bf16.msra.mxu0 %v3073
        %3105 = vmatpush.bf16.msra.mxu0 %v3072
        %3106 = vmatpush.bf16.msra.mxu0 %v3071
        %3107 = vmatpush.bf16.msra.mxu0 %v3070
        %3108 = vmatpush.bf16.msra.mxu0 %v3069
        %3109 = vmatmul.bf16.gmra.mxu0 %v2989
        %v3110 = vpop.f32.mrf.mxu0
        %v3111 = vadd.f32 0.0, %v3110
        %v3112 = vpop.f32.mrf.mxu0
        %v3113 = vadd.f32 0.0, %v3112
        %3114 = vmatmul.bf16.gmra.mxu0 %v2991
        %v3115 = vpop.f32.mrf.mxu0
        %v3116 = vadd.f32 0.0, %v3115
        %v3117 = vpop.f32.mrf.mxu0
        %v3118 = vadd.f32 0.0, %v3117
        %3119 = vmatmul.bf16.gmra.mxu0 %v2993
        %v3120 = vpop.f32.mrf.mxu0
        %v3121 = vadd.f32 0.0, %v3120
        %v3122 = vpop.f32.mrf.mxu0
        %v3123 = vadd.f32 0.0, %v3122
        %3124 = vmatmul.bf16.gmra.mxu0 %v2995
        %v3125 = vpop.f32.mrf.mxu0
        %v3126 = vadd.f32 0.0, %v3125
        %v3127 = vpop.f32.mrf.mxu0
        %v3128 = vadd.f32 0.0, %v3127
        %3129 = vdwg.mxu0
        %3130 = vmatpush.bf16.msra.mxu0 %v3084
        %3131 = vmatpush.bf16.msra.mxu0 %v3083
        %3132 = vmatpush.bf16.msra.mxu0 %v3082
        %3133 = vmatpush.bf16.msra.mxu0 %v3081
        %3134 = vmatpush.bf16.msra.mxu0 %v3080
        %3135 = vmatpush.bf16.msra.mxu0 %v3079
        %3136 = vmatpush.bf16.msra.mxu0 %v3078
        %3137 = vmatpush.bf16.msra.mxu0 %v3077
        %3138 = vmatmul.bf16.gmra.mxu0 %v2990
        %v3139 = vpop.f32.mrf.mxu0
        %v3140 = vadd.f32 %v3111, %v3139
        %v3141 = vpop.f32.mrf.mxu0
        %v3142 = vadd.f32 %v3113, %v3141
        %3143 = vmatmul.bf16.gmra.mxu0 %v2992
        %v3144 = vpop.f32.mrf.mxu0
        %v3145 = vadd.f32 %v3116, %v3144
        %v3146 = vpop.f32.mrf.mxu0
        %v3147 = vadd.f32 %v3118, %v3146
        %3148 = vmatmul.bf16.gmra.mxu0 %v2994
        %v3149 = vpop.f32.mrf.mxu0
        %v3150 = vadd.f32 %v3121, %v3149
        %v3151 = vpop.f32.mrf.mxu0
        %v3152 = vadd.f32 %v3123, %v3151
        %3153 = vmatmul.bf16.gmra.mxu0 %v2996
        %v3154 = vpop.f32.mrf.mxu0
        %v3155 = vadd.f32 %v3126, %v3154
        %v3156 = vpop.f32.mrf.mxu0
        %v3157 = vadd.f32 %v3128, %v3156
        %3158 = vdwg.mxu0
        %v3159 = vld [vmem:[#allocation2] sm:$0xff]
        %v3160 = vld [vmem:[#allocation2 + $0x8] sm:$0xff]
        %v3161 = vld [vmem:[#allocation2 + $0x10] sm:$0xff]
        %v3162 = vld [vmem:[#allocation2 + $0x18] sm:$0xff]
        %v3163 = vld [vmem:[#allocation2 + $0x20] sm:$0xff]
        %v3164 = vld [vmem:[#allocation2 + $0x28] sm:$0xff]
        %v3165 = vld [vmem:[#allocation2 + $0x30] sm:$0xff]
        %v3166 = vld [vmem:[#allocation2 + $0x38] sm:$0xff]
        %v3167 = vadd.f32 %v3159, %v3140
        %v3168 = vadd.f32 %v3160, %v3142
        %v3169 = vadd.f32 %v3161, %v3145
        %v3170 = vadd.f32 %v3162, %v3147
        %v3171 = vadd.f32 %v3163, %v3150
        %v3172 = vadd.f32 %v3164, %v3152
        %v3173 = vadd.f32 %v3165, %v3155
        %v3174 = vadd.f32 %v3166, %v3157
        %3175 = vst [vmem:[#allocation2] sm:$0xff] %v3167
        %3176 = vst [vmem:[#allocation2 + $0x8] sm:$0xff] %v3168
        %3177 = vst [vmem:[#allocation2 + $0x10] sm:$0xff] %v3169
        %3178 = vst [vmem:[#allocation2 + $0x18] sm:$0xff] %v3170
        %3179 = vst [vmem:[#allocation2 + $0x20] sm:$0xff] %v3171
        %3180 = vst [vmem:[#allocation2 + $0x28] sm:$0xff] %v3172
        %3181 = vst [vmem:[#allocation2 + $0x30] sm:$0xff] %v3173
        %3182 = vst [vmem:[#allocation2 + $0x38] sm:$0xff] %v3174
        %s3183 = sadd.s32 %s157, 2
        %s3184 = smul.u32 %s3183, 8
        %s3185 = smul.addr %s3184, 4
        %s3186 = scalar_lea.vmem %s155, %s3185
        %v3187 = vld [vmem:[%s3186 + $0x4] sm:$0xff]
        %v3188 = vld [vmem:[%s3186 + $0x24] sm:$0xff]
        %v3189 = vld [vmem:[%s3186 + $0x44] sm:$0xff]
        %v3190 = vld [vmem:[%s3186 + $0x64] sm:$0xff]
        %v3191 = vld [vmem:[%s3186 + $0x84] sm:$0xff]
        %v3192 = vld [vmem:[%s3186 + $0xa4] sm:$0xff]
        %v3193 = vld [vmem:[%s3186 + $0xc4] sm:$0xff]
        %v3194 = vld [vmem:[%s3186 + $0xe4] sm:$0xff]
        %v3195 = vld [vmem:[%s1 + $0x500] sm:$0xf]
        %v3196 = vld [vmem:[%s1 + $0x504] sm:$0xf]
        %v3197 = vld [vmem:[%s1 + $0x508] sm:$0xf]
        %v3198 = vld [vmem:[%s1 + $0x50c] sm:$0xf]
        %v3199 = vld [vmem:[%s1 + $0x510] sm:$0xf]
        %v3200 = vld [vmem:[%s1 + $0x514] sm:$0xf]
        %v3201 = vld [vmem:[%s1 + $0x518] sm:$0xf]
        %v3202 = vld [vmem:[%s1 + $0x51c] sm:$0xf]
        %v3203 = vld [vmem:[%s1 + $0x520] sm:$0xf]
        %v3204 = vld [vmem:[%s1 + $0x524] sm:$0xf]
        %v3205 = vld [vmem:[%s1 + $0x528] sm:$0xf]
        %v3206 = vld [vmem:[%s1 + $0x52c] sm:$0xf]
        %v3207 = vld [vmem:[%s1 + $0x530] sm:$0xf]
        %v3208 = vld [vmem:[%s1 + $0x534] sm:$0xf]
        %v3209 = vld [vmem:[%s1 + $0x538] sm:$0xf]
        %v3210 = vld [vmem:[%s1 + $0x53c] sm:$0xf]
        %v3211 = vld [vmem:[%s1 + $0x540] sm:$0xf]
        %v3212 = vld [vmem:[%s1 + $0x544] sm:$0xf]
        %v3213 = vld [vmem:[%s1 + $0x548] sm:$0xf]
        %v3214 = vld [vmem:[%s1 + $0x54c] sm:$0xf]
        %v3215 = vld [vmem:[%s1 + $0x550] sm:$0xf]
        %v3216 = vld [vmem:[%s1 + $0x554] sm:$0xf]
        %v3217 = vld [vmem:[%s1 + $0x558] sm:$0xf]
        %v3218 = vld [vmem:[%s1 + $0x55c] sm:$0xf]
        %v3219 = vld [vmem:[%s1 + $0x560] sm:$0xf]
        %v3220 = vld [vmem:[%s1 + $0x564] sm:$0xf]
        %v3221 = vld [vmem:[%s1 + $0x568] sm:$0xf]
        %v3222 = vld [vmem:[%s1 + $0x56c] sm:$0xf]
        %v3223 = vld [vmem:[%s1 + $0x570] sm:$0xf]
        %v3224 = vld [vmem:[%s1 + $0x574] sm:$0xf]
        %v3225 = vld [vmem:[%s1 + $0x578] sm:$0xf]
        %v3226 = vld [vmem:[%s1 + $0x57c] sm:$0xf]
        %v3235 = vunpack.c.l.b16 %v3187
        %v3236 = vunpack.c.h.b16 %v3187
        %v3237 = vunpack.c.l.b16 %v3188
        %v3238 = vunpack.c.h.b16 %v3188
        %v3239 = vunpack.c.l.b16 %v3189
        %v3240 = vunpack.c.h.b16 %v3189
        %v3241 = vunpack.c.l.b16 %v3190
        %v3242 = vunpack.c.h.b16 %v3190
        %v3243 = vunpack.c.l.b16 %v3191
        %v3244 = vunpack.c.h.b16 %v3191
        %v3245 = vunpack.c.l.b16 %v3192
        %v3246 = vunpack.c.h.b16 %v3192
        %v3247 = vunpack.c.l.b16 %v3193
        %v3248 = vunpack.c.h.b16 %v3193
        %v3249 = vunpack.c.l.b16 %v3194
        %v3250 = vunpack.c.h.b16 %v3194
        %v3251 = vpack.c.b16 %v3237, %v3235
        %v3252 = vpack.c.b16 %v3238, %v3236
        %v3253 = vpack.c.b16 %v3241, %v3239
        %v3254 = vpack.c.b16 %v3242, %v3240
        %v3255 = vpack.c.b16 %v3245, %v3243
        %v3256 = vpack.c.b16 %v3246, %v3244
        %v3257 = vpack.c.b16 %v3249, %v3247
        %v3258 = vpack.c.b16 %v3250, %v3248
        %v3299 = vunpack.c.l.b16 %v3195
        %v3300 = vunpack.c.l.b16 %v3196
        %v3301 = vunpack.c.l.b16 %v3197
        %v3302 = vunpack.c.l.b16 %v3198
        %v3303 = vunpack.c.l.b16 %v3199
        %v3304 = vunpack.c.l.b16 %v3200
        %v3305 = vunpack.c.l.b16 %v3201
        %v3306 = vunpack.c.l.b16 %v3202
        %v3307 = vunpack.c.l.b16 %v3203
        %v3308 = vunpack.c.l.b16 %v3204
        %v3309 = vunpack.c.l.b16 %v3205
        %v3310 = vunpack.c.l.b16 %v3206
        %v3311 = vunpack.c.l.b16 %v3207
        %v3312 = vunpack.c.l.b16 %v3208
        %v3313 = vunpack.c.l.b16 %v3209
        %v3314 = vunpack.c.l.b16 %v3210
        %v3315 = vunpack.c.l.b16 %v3211
        %v3316 = vunpack.c.l.b16 %v3212
        %v3317 = vunpack.c.l.b16 %v3213
        %v3318 = vunpack.c.l.b16 %v3214
        %v3319 = vunpack.c.l.b16 %v3215
        %v3320 = vunpack.c.l.b16 %v3216
        %v3321 = vunpack.c.l.b16 %v3217
        %v3322 = vunpack.c.l.b16 %v3218
        %v3323 = vunpack.c.l.b16 %v3219
        %v3324 = vunpack.c.l.b16 %v3220
        %v3325 = vunpack.c.l.b16 %v3221
        %v3326 = vunpack.c.l.b16 %v3222
        %v3327 = vunpack.c.l.b16 %v3223
        %v3328 = vunpack.c.l.b16 %v3224
        %v3329 = vunpack.c.l.b16 %v3225
        %v3330 = vunpack.c.l.b16 %v3226
        %v3331 = vpack.c.b16 %v3300, %v3299
        %v3332 = vpack.c.b16 %v3302, %v3301
        %v3333 = vpack.c.b16 %v3304, %v3303
        %v3334 = vpack.c.b16 %v3306, %v3305
        %v3335 = vpack.c.b16 %v3308, %v3307
        %v3336 = vpack.c.b16 %v3310, %v3309
        %v3337 = vpack.c.b16 %v3312, %v3311
        %v3338 = vpack.c.b16 %v3314, %v3313
        %v3339 = vpack.c.b16 %v3316, %v3315
        %v3340 = vpack.c.b16 %v3318, %v3317
        %v3341 = vpack.c.b16 %v3320, %v3319
        %v3342 = vpack.c.b16 %v3322, %v3321
        %v3343 = vpack.c.b16 %v3324, %v3323
        %v3344 = vpack.c.b16 %v3326, %v3325
        %v3345 = vpack.c.b16 %v3328, %v3327
        %v3346 = vpack.c.b16 %v3330, %v3329
        %3363 = vmatpush.bf16.msra.mxu0 %v3338
        %3364 = vmatpush.bf16.msra.mxu0 %v3337
        %3365 = vmatpush.bf16.msra.mxu0 %v3336
        %3366 = vmatpush.bf16.msra.mxu0 %v3335
        %3367 = vmatpush.bf16.msra.mxu0 %v3334
        %3368 = vmatpush.bf16.msra.mxu0 %v3333
        %3369 = vmatpush.bf16.msra.mxu0 %v3332
        %3370 = vmatpush.bf16.msra.mxu0 %v3331
        %3371 = vmatmul.bf16.gmra.mxu0 %v3251
        %v3372 = vpop.f32.mrf.mxu0
        %v3373 = vadd.f32 0.0, %v3372
        %v3374 = vpop.f32.mrf.mxu0
        %v3375 = vadd.f32 0.0, %v3374
        %3376 = vmatmul.bf16.gmra.mxu0 %v3253
        %v3377 = vpop.f32.mrf.mxu0
        %v3378 = vadd.f32 0.0, %v3377
        %v3379 = vpop.f32.mrf.mxu0
        %v3380 = vadd.f32 0.0, %v3379
        %3381 = vmatmul.bf16.gmra.mxu0 %v3255
        %v3382 = vpop.f32.mrf.mxu0
        %v3383 = vadd.f32 0.0, %v3382
        %v3384 = vpop.f32.mrf.mxu0
        %v3385 = vadd.f32 0.0, %v3384
        %3386 = vmatmul.bf16.gmra.mxu0 %v3257
        %v3387 = vpop.f32.mrf.mxu0
        %v3388 = vadd.f32 0.0, %v3387
        %v3389 = vpop.f32.mrf.mxu0
        %v3390 = vadd.f32 0.0, %v3389
        %3391 = vdwg.mxu0
        %3392 = vmatpush.bf16.msra.mxu0 %v3346
        %3393 = vmatpush.bf16.msra.mxu0 %v3345
        %3394 = vmatpush.bf16.msra.mxu0 %v3344
        %3395 = vmatpush.bf16.msra.mxu0 %v3343
        %3396 = vmatpush.bf16.msra.mxu0 %v3342
        %3397 = vmatpush.bf16.msra.mxu0 %v3341
        %3398 = vmatpush.bf16.msra.mxu0 %v3340
        %3399 = vmatpush.bf16.msra.mxu0 %v3339
        %3400 = vmatmul.bf16.gmra.mxu0 %v3252
        %v3401 = vpop.f32.mrf.mxu0
        %v3402 = vadd.f32 %v3373, %v3401
        %v3403 = vpop.f32.mrf.mxu0
        %v3404 = vadd.f32 %v3375, %v3403
        %3405 = vmatmul.bf16.gmra.mxu0 %v3254
        %v3406 = vpop.f32.mrf.mxu0
        %v3407 = vadd.f32 %v3378, %v3406
        %v3408 = vpop.f32.mrf.mxu0
        %v3409 = vadd.f32 %v3380, %v3408
        %3410 = vmatmul.bf16.gmra.mxu0 %v3256
        %v3411 = vpop.f32.mrf.mxu0
        %v3412 = vadd.f32 %v3383, %v3411
        %v3413 = vpop.f32.mrf.mxu0
        %v3414 = vadd.f32 %v3385, %v3413
        %3415 = vmatmul.bf16.gmra.mxu0 %v3258
        %v3416 = vpop.f32.mrf.mxu0
        %v3417 = vadd.f32 %v3388, %v3416
        %v3418 = vpop.f32.mrf.mxu0
        %v3419 = vadd.f32 %v3390, %v3418
        %3420 = vdwg.mxu0
        %v3421 = vld [vmem:[#allocation2] sm:$0xff]
        %v3422 = vld [vmem:[#allocation2 + $0x8] sm:$0xff]
        %v3423 = vld [vmem:[#allocation2 + $0x10] sm:$0xff]
        %v3424 = vld [vmem:[#allocation2 + $0x18] sm:$0xff]
        %v3425 = vld [vmem:[#allocation2 + $0x20] sm:$0xff]
        %v3426 = vld [vmem:[#allocation2 + $0x28] sm:$0xff]
        %v3427 = vld [vmem:[#allocation2 + $0x30] sm:$0xff]
        %v3428 = vld [vmem:[#allocation2 + $0x38] sm:$0xff]
        %v3429 = vadd.f32 %v3421, %v3402
        %v3430 = vadd.f32 %v3422, %v3404
        %v3431 = vadd.f32 %v3423, %v3407
        %v3432 = vadd.f32 %v3424, %v3409
        %v3433 = vadd.f32 %v3425, %v3412
        %v3434 = vadd.f32 %v3426, %v3414
        %v3435 = vadd.f32 %v3427, %v3417
        %v3436 = vadd.f32 %v3428, %v3419
        %3437 = vst [vmem:[#allocation2] sm:$0xff] %v3429
        %3438 = vst [vmem:[#allocation2 + $0x8] sm:$0xff] %v3430
        %3439 = vst [vmem:[#allocation2 + $0x10] sm:$0xff] %v3431
        %3440 = vst [vmem:[#allocation2 + $0x18] sm:$0xff] %v3432
        %3441 = vst [vmem:[#allocation2 + $0x20] sm:$0xff] %v3433
        %3442 = vst [vmem:[#allocation2 + $0x28] sm:$0xff] %v3434
        %3443 = vst [vmem:[#allocation2 + $0x30] sm:$0xff] %v3435
        %3444 = vst [vmem:[#allocation2 + $0x38] sm:$0xff] %v3436
        %v3445 = vld [vmem:[%s3186 + $0x4] sm:$0xff]
        %v3446 = vld [vmem:[%s3186 + $0x14] sm:$0x11]
        %v3447 = vld [vmem:[%s3186 + $0x24] sm:$0xff]
        %v3448 = vld [vmem:[%s3186 + $0x34] sm:$0x11]
        %v3449 = vld [vmem:[%s3186 + $0x44] sm:$0xff]
        %v3450 = vld [vmem:[%s3186 + $0x54] sm:$0x11]
        %v3451 = vld [vmem:[%s3186 + $0x64] sm:$0xff]
        %v3452 = vld [vmem:[%s3186 + $0x74] sm:$0x11]
        %v3453 = vld [vmem:[%s3186 + $0x84] sm:$0xff]
        %v3454 = vld [vmem:[%s3186 + $0x94] sm:$0x11]
        %v3455 = vld [vmem:[%s3186 + $0xa4] sm:$0xff]
        %v3456 = vld [vmem:[%s3186 + $0xb4] sm:$0x11]
        %v3457 = vld [vmem:[%s3186 + $0xc4] sm:$0xff]
        %v3458 = vld [vmem:[%s3186 + $0xd4] sm:$0x11]
        %v3459 = vld [vmem:[%s3186 + $0xe4] sm:$0xff]
        %v3460 = vld [vmem:[%s3186 + $0xf4] sm:$0x11]
        %v3462 = vshrl.u32 %v3445, 16
        %v3464 = vrot.slane %v3462, 4
        %v3465 = vshll.u32 %v3445, 16
        %v3467 = vrot.slane %v3465, 5
        %v3468 = vor.u32 %v3464, %v3467
        %v3469 = vrot.slane %v3468, 4
        %v3471 = vshll.u32 %v3446, 16
        %v3473 = vrot.slane %v3471, 5
        %v3474 = vsel %vm671, %v3469, %v3473
        %v3476 = vshrl.u32 %v3447, 16
        %v3478 = vrot.slane %v3476, 4
        %v3479 = vshll.u32 %v3447, 16
        %v3481 = vrot.slane %v3479, 5
        %v3482 = vor.u32 %v3478, %v3481
        %v3483 = vrot.slane %v3482, 4
        %v3485 = vshll.u32 %v3448, 16
        %v3487 = vrot.slane %v3485, 5
        %v3488 = vsel %vm671, %v3483, %v3487
        %v3490 = vshrl.u32 %v3449, 16
        %v3492 = vrot.slane %v3490, 4
        %v3493 = vshll.u32 %v3449, 16
        %v3495 = vrot.slane %v3493, 5
        %v3496 = vor.u32 %v3492, %v3495
        %v3497 = vrot.slane %v3496, 4
        %v3499 = vshll.u32 %v3450, 16
        %v3501 = vrot.slane %v3499, 5
        %v3502 = vsel %vm671, %v3497, %v3501
        %v3504 = vshrl.u32 %v3451, 16
        %v3506 = vrot.slane %v3504, 4
        %v3507 = vshll.u32 %v3451, 16
        %v3509 = vrot.slane %v3507, 5
        %v3510 = vor.u32 %v3506, %v3509
        %v3511 = vrot.slane %v3510, 4
        %v3513 = vshll.u32 %v3452, 16
        %v3515 = vrot.slane %v3513, 5
        %v3516 = vsel %vm671, %v3511, %v3515
        %v3518 = vshrl.u32 %v3453, 16
        %v3520 = vrot.slane %v3518, 4
        %v3521 = vshll.u32 %v3453, 16
        %v3523 = vrot.slane %v3521, 5
        %v3524 = vor.u32 %v3520, %v3523
        %v3525 = vrot.slane %v3524, 4
        %v3527 = vshll.u32 %v3454, 16
        %v3529 = vrot.slane %v3527, 5
        %v3530 = vsel %vm671, %v3525, %v3529
        %v3532 = vshrl.u32 %v3455, 16
        %v3534 = vrot.slane %v3532, 4
        %v3535 = vshll.u32 %v3455, 16
        %v3537 = vrot.slane %v3535, 5
        %v3538 = vor.u32 %v3534, %v3537
        %v3539 = vrot.slane %v3538, 4
        %v3541 = vshll.u32 %v3456, 16
        %v3543 = vrot.slane %v3541, 5
        %v3544 = vsel %vm671, %v3539, %v3543
        %v3546 = vshrl.u32 %v3457, 16
        %v3548 = vrot.slane %v3546, 4
        %v3549 = vshll.u32 %v3457, 16
        %v3551 = vrot.slane %v3549, 5
        %v3552 = vor.u32 %v3548, %v3551
        %v3553 = vrot.slane %v3552, 4
        %v3555 = vshll.u32 %v3458, 16
        %v3557 = vrot.slane %v3555, 5
        %v3558 = vsel %vm671, %v3553, %v3557
        %v3560 = vshrl.u32 %v3459, 16
        %v3562 = vrot.slane %v3560, 4
        %v3563 = vshll.u32 %v3459, 16
        %v3565 = vrot.slane %v3563, 5
        %v3566 = vor.u32 %v3562, %v3565
        %v3567 = vrot.slane %v3566, 4
        %v3569 = vshll.u32 %v3460, 16
        %v3571 = vrot.slane %v3569, 5
        %v3572 = vsel %vm671, %v3567, %v3571
        %v3573 = vld [vmem:[%s1 + $0x580] sm:$0xf]
        %v3574 = vld [vmem:[%s1 + $0x584] sm:$0xf]
        %v3575 = vld [vmem:[%s1 + $0x588] sm:$0xf]
        %v3576 = vld [vmem:[%s1 + $0x58c] sm:$0xf]
        %v3577 = vld [vmem:[%s1 + $0x590] sm:$0xf]
        %v3578 = vld [vmem:[%s1 + $0x594] sm:$0xf]
        %v3579 = vld [vmem:[%s1 + $0x598] sm:$0xf]
        %v3580 = vld [vmem:[%s1 + $0x59c] sm:$0xf]
        %v3581 = vld [vmem:[%s1 + $0x5a0] sm:$0xf]
        %v3582 = vld [vmem:[%s1 + $0x5a4] sm:$0xf]
        %v3583 = vld [vmem:[%s1 + $0x5a8] sm:$0xf]
        %v3584 = vld [vmem:[%s1 + $0x5ac] sm:$0xf]
        %v3585 = vld [vmem:[%s1 + $0x5b0] sm:$0xf]
        %v3586 = vld [vmem:[%s1 + $0x5b4] sm:$0xf]
        %v3587 = vld [vmem:[%s1 + $0x5b8] sm:$0xf]
        %v3588 = vld [vmem:[%s1 + $0x5bc] sm:$0xf]
        %v3589 = vld [vmem:[%s1 + $0x5c0] sm:$0xf]
        %v3590 = vld [vmem:[%s1 + $0x5c4] sm:$0xf]
        %v3591 = vld [vmem:[%s1 + $0x5c8] sm:$0xf]
        %v3592 = vld [vmem:[%s1 + $0x5cc] sm:$0xf]
        %v3593 = vld [vmem:[%s1 + $0x5d0] sm:$0xf]
        %v3594 = vld [vmem:[%s1 + $0x5d4] sm:$0xf]
        %v3595 = vld [vmem:[%s1 + $0x5d8] sm:$0xf]
        %v3596 = vld [vmem:[%s1 + $0x5dc] sm:$0xf]
        %v3597 = vld [vmem:[%s1 + $0x5e0] sm:$0xf]
        %v3598 = vld [vmem:[%s1 + $0x5e4] sm:$0xf]
        %v3599 = vld [vmem:[%s1 + $0x5e8] sm:$0xf]
        %v3600 = vld [vmem:[%s1 + $0x5ec] sm:$0xf]
        %v3601 = vld [vmem:[%s1 + $0x5f0] sm:$0xf]
        %v3602 = vld [vmem:[%s1 + $0x5f4] sm:$0xf]
        %v3603 = vld [vmem:[%s1 + $0x5f8] sm:$0xf]
        %v3604 = vld [vmem:[%s1 + $0x5fc] sm:$0xf]
        %v3605 = vunpack.c.l.b16 %v3474
        %v3606 = vunpack.c.h.b16 %v3474
        %v3607 = vunpack.c.l.b16 %v3488
        %v3608 = vunpack.c.h.b16 %v3488
        %v3609 = vunpack.c.l.b16 %v3502
        %v3610 = vunpack.c.h.b16 %v3502
        %v3611 = vunpack.c.l.b16 %v3516
        %v3612 = vunpack.c.h.b16 %v3516
        %v3613 = vunpack.c.l.b16 %v3530
        %v3614 = vunpack.c.h.b16 %v3530
        %v3615 = vunpack.c.l.b16 %v3544
        %v3616 = vunpack.c.h.b16 %v3544
        %v3617 = vunpack.c.l.b16 %v3558
        %v3618 = vunpack.c.h.b16 %v3558
        %v3619 = vunpack.c.l.b16 %v3572
        %v3620 = vunpack.c.h.b16 %v3572
        %v3621 = vpack.c.b16 %v3607, %v3605
        %v3622 = vpack.c.b16 %v3608, %v3606
        %v3623 = vpack.c.b16 %v3611, %v3609
        %v3624 = vpack.c.b16 %v3612, %v3610
        %v3625 = vpack.c.b16 %v3615, %v3613
        %v3626 = vpack.c.b16 %v3616, %v3614
        %v3627 = vpack.c.b16 %v3619, %v3617
        %v3628 = vpack.c.b16 %v3620, %v3618
        %v3669 = vunpack.c.l.b16 %v3573
        %v3670 = vunpack.c.l.b16 %v3574
        %v3671 = vunpack.c.l.b16 %v3575
        %v3672 = vunpack.c.l.b16 %v3576
        %v3673 = vunpack.c.l.b16 %v3577
        %v3674 = vunpack.c.l.b16 %v3578
        %v3675 = vunpack.c.l.b16 %v3579
        %v3676 = vunpack.c.l.b16 %v3580
        %v3677 = vunpack.c.l.b16 %v3581
        %v3678 = vunpack.c.l.b16 %v3582
        %v3679 = vunpack.c.l.b16 %v3583
        %v3680 = vunpack.c.l.b16 %v3584
        %v3681 = vunpack.c.l.b16 %v3585
        %v3682 = vunpack.c.l.b16 %v3586
        %v3683 = vunpack.c.l.b16 %v3587
        %v3684 = vunpack.c.l.b16 %v3588
        %v3685 = vunpack.c.l.b16 %v3589
        %v3686 = vunpack.c.l.b16 %v3590
        %v3687 = vunpack.c.l.b16 %v3591
        %v3688 = vunpack.c.l.b16 %v3592
        %v3689 = vunpack.c.l.b16 %v3593
        %v3690 = vunpack.c.l.b16 %v3594
        %v3691 = vunpack.c.l.b16 %v3595
        %v3692 = vunpack.c.l.b16 %v3596
        %v3693 = vunpack.c.l.b16 %v3597
        %v3694 = vunpack.c.l.b16 %v3598
        %v3695 = vunpack.c.l.b16 %v3599
        %v3696 = vunpack.c.l.b16 %v3600
        %v3697 = vunpack.c.l.b16 %v3601
        %v3698 = vunpack.c.l.b16 %v3602
        %v3699 = vunpack.c.l.b16 %v3603
        %v3700 = vunpack.c.l.b16 %v3604
        %v3701 = vpack.c.b16 %v3670, %v3669
        %v3702 = vpack.c.b16 %v3672, %v3671
        %v3703 = vpack.c.b16 %v3674, %v3673
        %v3704 = vpack.c.b16 %v3676, %v3675
        %v3705 = vpack.c.b16 %v3678, %v3677
        %v3706 = vpack.c.b16 %v3680, %v3679
        %v3707 = vpack.c.b16 %v3682, %v3681
        %v3708 = vpack.c.b16 %v3684, %v3683
        %v3709 = vpack.c.b16 %v3686, %v3685
        %v3710 = vpack.c.b16 %v3688, %v3687
        %v3711 = vpack.c.b16 %v3690, %v3689
        %v3712 = vpack.c.b16 %v3692, %v3691
        %v3713 = vpack.c.b16 %v3694, %v3693
        %v3714 = vpack.c.b16 %v3696, %v3695
        %v3715 = vpack.c.b16 %v3698, %v3697
        %v3716 = vpack.c.b16 %v3700, %v3699
        %3733 = vmatpush.bf16.msra.mxu0 %v3708
        %3734 = vmatpush.bf16.msra.mxu0 %v3707
        %3735 = vmatpush.bf16.msra.mxu0 %v3706
        %3736 = vmatpush.bf16.msra.mxu0 %v3705
        %3737 = vmatpush.bf16.msra.mxu0 %v3704
        %3738 = vmatpush.bf16.msra.mxu0 %v3703
        %3739 = vmatpush.bf16.msra.mxu0 %v3702
        %3740 = vmatpush.bf16.msra.mxu0 %v3701
        %3741 = vmatmul.bf16.gmra.mxu0 %v3621
        %v3742 = vpop.f32.mrf.mxu0
        %v3743 = vadd.f32 0.0, %v3742
        %v3744 = vpop.f32.mrf.mxu0
        %v3745 = vadd.f32 0.0, %v3744
        %3746 = vmatmul.bf16.gmra.mxu0 %v3623
        %v3747 = vpop.f32.mrf.mxu0
        %v3748 = vadd.f32 0.0, %v3747
        %v3749 = vpop.f32.mrf.mxu0
        %v3750 = vadd.f32 0.0, %v3749
        %3751 = vmatmul.bf16.gmra.mxu0 %v3625
        %v3752 = vpop.f32.mrf.mxu0
        %v3753 = vadd.f32 0.0, %v3752
        %v3754 = vpop.f32.mrf.mxu0
        %v3755 = vadd.f32 0.0, %v3754
        %3756 = vmatmul.bf16.gmra.mxu0 %v3627
        %v3757 = vpop.f32.mrf.mxu0
        %v3758 = vadd.f32 0.0, %v3757
        %v3759 = vpop.f32.mrf.mxu0
        %v3760 = vadd.f32 0.0, %v3759
        %3761 = vdwg.mxu0
        %3762 = vmatpush.bf16.msra.mxu0 %v3716
        %3763 = vmatpush.bf16.msra.mxu0 %v3715
        %3764 = vmatpush.bf16.msra.mxu0 %v3714
        %3765 = vmatpush.bf16.msra.mxu0 %v3713
        %3766 = vmatpush.bf16.msra.mxu0 %v3712
        %3767 = vmatpush.bf16.msra.mxu0 %v3711
        %3768 = vmatpush.bf16.msra.mxu0 %v3710
        %3769 = vmatpush.bf16.msra.mxu0 %v3709
        %3770 = vmatmul.bf16.gmra.mxu0 %v3622
        %v3771 = vpop.f32.mrf.mxu0
        %v3772 = vadd.f32 %v3743, %v3771
        %v3773 = vpop.f32.mrf.mxu0
        %v3774 = vadd.f32 %v3745, %v3773
        %3775 = vmatmul.bf16.gmra.mxu0 %v3624
        %v3776 = vpop.f32.mrf.mxu0
        %v3777 = vadd.f32 %v3748, %v3776
        %v3778 = vpop.f32.mrf.mxu0
        %v3779 = vadd.f32 %v3750, %v3778
        %3780 = vmatmul.bf16.gmra.mxu0 %v3626
        %v3781 = vpop.f32.mrf.mxu0
        %v3782 = vadd.f32 %v3753, %v3781
        %v3783 = vpop.f32.mrf.mxu0
        %v3784 = vadd.f32 %v3755, %v3783
        %3785 = vmatmul.bf16.gmra.mxu0 %v3628
        %v3786 = vpop.f32.mrf.mxu0
        %v3787 = vadd.f32 %v3758, %v3786
        %v3788 = vpop.f32.mrf.mxu0
        %v3789 = vadd.f32 %v3760, %v3788
        %3790 = vdwg.mxu0
        %v3791 = vld [vmem:[#allocation2] sm:$0xff]
        %v3792 = vld [vmem:[#allocation2 + $0x8] sm:$0xff]
        %v3793 = vld [vmem:[#allocation2 + $0x10] sm:$0xff]
        %v3794 = vld [vmem:[#allocation2 + $0x18] sm:$0xff]
        %v3795 = vld [vmem:[#allocation2 + $0x20] sm:$0xff]
        %v3796 = vld [vmem:[#allocation2 + $0x28] sm:$0xff]
        %v3797 = vld [vmem:[#allocation2 + $0x30] sm:$0xff]
        %v3798 = vld [vmem:[#allocation2 + $0x38] sm:$0xff]
        %v3799 = vadd.f32 %v3791, %v3772
        %v3800 = vadd.f32 %v3792, %v3774
        %v3801 = vadd.f32 %v3793, %v3777
        %v3802 = vadd.f32 %v3794, %v3779
        %v3803 = vadd.f32 %v3795, %v3782
        %v3804 = vadd.f32 %v3796, %v3784
        %v3805 = vadd.f32 %v3797, %v3787
        %v3806 = vadd.f32 %v3798, %v3789
        %3807 = vst [vmem:[#allocation2] sm:$0xff] %v3799
        %3808 = vst [vmem:[#allocation2 + $0x8] sm:$0xff] %v3800
        %3809 = vst [vmem:[#allocation2 + $0x10] sm:$0xff] %v3801
        %3810 = vst [vmem:[#allocation2 + $0x18] sm:$0xff] %v3802
        %3811 = vst [vmem:[#allocation2 + $0x20] sm:$0xff] %v3803
        %3812 = vst [vmem:[#allocation2 + $0x28] sm:$0xff] %v3804
        %3813 = vst [vmem:[#allocation2 + $0x30] sm:$0xff] %v3805
        %3814 = vst [vmem:[#allocation2 + $0x38] sm:$0xff] %v3806
        %v3815 = vld [vmem:[%s3186 + $0x4] sm:$0xe]
        %v3816 = vld [vmem:[%s3186 + $0x14] sm:$0x1]
        %v3817 = vld [vmem:[%s3186 + $0x24] sm:$0xe]
        %v3818 = vld [vmem:[%s3186 + $0x34] sm:$0x1]
        %v3819 = vld [vmem:[%s3186 + $0x44] sm:$0xe]
        %v3820 = vld [vmem:[%s3186 + $0x54] sm:$0x1]
        %v3821 = vld [vmem:[%s3186 + $0x64] sm:$0xe]
        %v3822 = vld [vmem:[%s3186 + $0x74] sm:$0x1]
        %v3823 = vld [vmem:[%s3186 + $0x84] sm:$0xe]
        %v3824 = vld [vmem:[%s3186 + $0x94] sm:$0x1]
        %v3825 = vld [vmem:[%s3186 + $0xa4] sm:$0xe]
        %v3826 = vld [vmem:[%s3186 + $0xb4] sm:$0x1]
        %v3827 = vld [vmem:[%s3186 + $0xc4] sm:$0xe]
        %v3828 = vld [vmem:[%s3186 + $0xd4] sm:$0x1]
        %v3829 = vld [vmem:[%s3186 + $0xe4] sm:$0xe]
        %v3830 = vld [vmem:[%s3186 + $0xf4] sm:$0x1]
        %v3847 = vrot.slane %v3815, 5
        %v3848 = vrot.slane %v3847, 4
        %v3849 = vrot.slane %v3816, 5
        %v3850 = vsel %vm1390, %v3848, %v3849
        %v3851 = vrot.slane %v3817, 5
        %v3852 = vrot.slane %v3851, 4
        %v3853 = vrot.slane %v3818, 5
        %v3854 = vsel %vm1390, %v3852, %v3853
        %v3855 = vrot.slane %v3819, 5
        %v3856 = vrot.slane %v3855, 4
        %v3857 = vrot.slane %v3820, 5
        %v3858 = vsel %vm1390, %v3856, %v3857
        %v3859 = vrot.slane %v3821, 5
        %v3860 = vrot.slane %v3859, 4
        %v3861 = vrot.slane %v3822, 5
        %v3862 = vsel %vm1390, %v3860, %v3861
        %v3863 = vrot.slane %v3823, 5
        %v3864 = vrot.slane %v3863, 4
        %v3865 = vrot.slane %v3824, 5
        %v3866 = vsel %vm1390, %v3864, %v3865
        %v3867 = vrot.slane %v3825, 5
        %v3868 = vrot.slane %v3867, 4
        %v3869 = vrot.slane %v3826, 5
        %v3870 = vsel %vm1390, %v3868, %v3869
        %v3871 = vrot.slane %v3827, 5
        %v3872 = vrot.slane %v3871, 4
        %v3873 = vrot.slane %v3828, 5
        %v3874 = vsel %vm1390, %v3872, %v3873
        %v3875 = vrot.slane %v3829, 5
        %v3876 = vrot.slane %v3875, 4
        %v3877 = vrot.slane %v3830, 5
        %v3878 = vsel %vm1390, %v3876, %v3877
        %v3879 = vld [vmem:[%s1 + $0x600] sm:$0xf]
        %v3880 = vld [vmem:[%s1 + $0x604] sm:$0xf]
        %v3881 = vld [vmem:[%s1 + $0x608] sm:$0xf]
        %v3882 = vld [vmem:[%s1 + $0x60c] sm:$0xf]
        %v3883 = vld [vmem:[%s1 + $0x610] sm:$0xf]
        %v3884 = vld [vmem:[%s1 + $0x614] sm:$0xf]
        %v3885 = vld [vmem:[%s1 + $0x618] sm:$0xf]
        %v3886 = vld [vmem:[%s1 + $0x61c] sm:$0xf]
        %v3887 = vld [vmem:[%s1 + $0x620] sm:$0xf]
        %v3888 = vld [vmem:[%s1 + $0x624] sm:$0xf]
        %v3889 = vld [vmem:[%s1 + $0x628] sm:$0xf]
        %v3890 = vld [vmem:[%s1 + $0x62c] sm:$0xf]
        %v3891 = vld [vmem:[%s1 + $0x630] sm:$0xf]
        %v3892 = vld [vmem:[%s1 + $0x634] sm:$0xf]
        %v3893 = vld [vmem:[%s1 + $0x638] sm:$0xf]
        %v3894 = vld [vmem:[%s1 + $0x63c] sm:$0xf]
        %v3895 = vunpack.c.l.b16 %v3850
        %v3896 = vunpack.c.l.b16 %v3854
        %v3897 = vunpack.c.l.b16 %v3858
        %v3898 = vunpack.c.l.b16 %v3862
        %v3899 = vunpack.c.l.b16 %v3866
        %v3900 = vunpack.c.l.b16 %v3870
        %v3901 = vunpack.c.l.b16 %v3874
        %v3902 = vunpack.c.l.b16 %v3878
        %v3903 = vpack.c.b16 %v3896, %v3895
        %v3904 = vpack.c.b16 %v3898, %v3897
        %v3905 = vpack.c.b16 %v3900, %v3899
        %v3906 = vpack.c.b16 %v3902, %v3901
        %v3927 = vunpack.c.l.b16 %v3879
        %v3928 = vunpack.c.l.b16 %v3880
        %v3929 = vunpack.c.l.b16 %v3881
        %v3930 = vunpack.c.l.b16 %v3882
        %v3931 = vunpack.c.l.b16 %v3883
        %v3932 = vunpack.c.l.b16 %v3884
        %v3933 = vunpack.c.l.b16 %v3885
        %v3934 = vunpack.c.l.b16 %v3886
        %v3935 = vunpack.c.l.b16 %v3887
        %v3936 = vunpack.c.l.b16 %v3888
        %v3937 = vunpack.c.l.b16 %v3889
        %v3938 = vunpack.c.l.b16 %v3890
        %v3939 = vunpack.c.l.b16 %v3891
        %v3940 = vunpack.c.l.b16 %v3892
        %v3941 = vunpack.c.l.b16 %v3893
        %v3942 = vunpack.c.l.b16 %v3894
        %v3943 = vpack.c.b16 %v3928, %v3927
        %v3944 = vpack.c.b16 %v3930, %v3929
        %v3945 = vpack.c.b16 %v3932, %v3931
        %v3946 = vpack.c.b16 %v3934, %v3933
        %v3947 = vpack.c.b16 %v3936, %v3935
        %v3948 = vpack.c.b16 %v3938, %v3937
        %v3949 = vpack.c.b16 %v3940, %v3939
        %v3950 = vpack.c.b16 %v3942, %v3941
        %3959 = vmatpush.bf16.msra.mxu0 %v3950
        %3960 = vmatpush.bf16.msra.mxu0 %v3949
        %3961 = vmatpush.bf16.msra.mxu0 %v3948
        %3962 = vmatpush.bf16.msra.mxu0 %v3947
        %3963 = vmatpush.bf16.msra.mxu0 %v3946
        %3964 = vmatpush.bf16.msra.mxu0 %v3945
        %3965 = vmatpush.bf16.msra.mxu0 %v3944
        %3966 = vmatpush.bf16.msra.mxu0 %v3943
        %3967 = vmatmul.bf16.gmra.mxu0 %v3903
        %v3968 = vpop.f32.mrf.mxu0
        %v3969 = vadd.f32 0.0, %v3968
        %v3970 = vpop.f32.mrf.mxu0
        %v3971 = vadd.f32 0.0, %v3970
        %3972 = vmatmul.bf16.gmra.mxu0 %v3904
        %v3973 = vpop.f32.mrf.mxu0
        %v3974 = vadd.f32 0.0, %v3973
        %v3975 = vpop.f32.mrf.mxu0
        %v3976 = vadd.f32 0.0, %v3975
        %3977 = vmatmul.bf16.gmra.mxu0 %v3905
        %v3978 = vpop.f32.mrf.mxu0
        %v3979 = vadd.f32 0.0, %v3978
        %v3980 = vpop.f32.mrf.mxu0
        %v3981 = vadd.f32 0.0, %v3980
        %3982 = vmatmul.bf16.gmra.mxu0 %v3906
        %v3983 = vpop.f32.mrf.mxu0
        %v3984 = vadd.f32 0.0, %v3983
        %v3985 = vpop.f32.mrf.mxu0
        %v3986 = vadd.f32 0.0, %v3985
        %3987 = vdwg.mxu0
        %v3988 = vld [vmem:[#allocation2] sm:$0xff]
        %v3989 = vld [vmem:[#allocation2 + $0x8] sm:$0xff]
        %v3990 = vld [vmem:[#allocation2 + $0x10] sm:$0xff]
        %v3991 = vld [vmem:[#allocation2 + $0x18] sm:$0xff]
        %v3992 = vld [vmem:[#allocation2 + $0x20] sm:$0xff]
        %v3993 = vld [vmem:[#allocation2 + $0x28] sm:$0xff]
        %v3994 = vld [vmem:[#allocation2 + $0x30] sm:$0xff]
        %v3995 = vld [vmem:[#allocation2 + $0x38] sm:$0xff]
        %v3996 = vadd.f32 %v3988, %v3969
        %v3997 = vadd.f32 %v3989, %v3971
        %v3998 = vadd.f32 %v3990, %v3974
        %v3999 = vadd.f32 %v3991, %v3976
        %v4000 = vadd.f32 %v3992, %v3979
        %v4001 = vadd.f32 %v3993, %v3981
        %v4002 = vadd.f32 %v3994, %v3984
        %v4003 = vadd.f32 %v3995, %v3986
        %4004 = vst [vmem:[#allocation2] sm:$0xff] %v3996
        %4005 = vst [vmem:[#allocation2 + $0x8] sm:$0xff] %v3997
        %4006 = vst [vmem:[#allocation2 + $0x10] sm:$0xff] %v3998
        %4007 = vst [vmem:[#allocation2 + $0x18] sm:$0xff] %v3999
        %4008 = vst [vmem:[#allocation2 + $0x20] sm:$0xff] %v4000
        %4009 = vst [vmem:[#allocation2 + $0x28] sm:$0xff] %v4001
        %4010 = vst [vmem:[#allocation2 + $0x30] sm:$0xff] %v4002
        %4011 = vst [vmem:[#allocation2 + $0x38] sm:$0xff] %v4003
        %v4012 = vld [vmem:[#allocation2] sm:$0xff]
        %v4013 = vld [vmem:[#allocation2 + $0x8] sm:$0xff]
        %v4014 = vld [vmem:[#allocation2 + $0x10] sm:$0xff]
        %v4015 = vld [vmem:[#allocation2 + $0x18] sm:$0xff]
        %v4016 = vld [vmem:[#allocation2 + $0x20] sm:$0xff]
        %v4017 = vld [vmem:[#allocation2 + $0x28] sm:$0xff]
        %v4018 = vld [vmem:[#allocation2 + $0x30] sm:$0xff]
        %v4019 = vld [vmem:[#allocation2 + $0x38] sm:$0xff]
        %vm4020 = vcmp.gt.f32.partialorder %v4012, 0.0
        %vm4021 = vcmp.gt.f32.partialorder %v4013, 0.0
        %vm4022 = vcmp.gt.f32.partialorder %v4014, 0.0
        %vm4023 = vcmp.gt.f32.partialorder %v4015, 0.0
        %vm4024 = vcmp.gt.f32.partialorder %v4016, 0.0
        %vm4025 = vcmp.gt.f32.partialorder %v4017, 0.0
        %vm4026 = vcmp.gt.f32.partialorder %v4018, 0.0
        %vm4027 = vcmp.gt.f32.partialorder %v4019, 0.0
        %v4028 = vmul.f32 %v4012, 0.01
        %v4029 = vmul.f32 %v4013, 0.01
        %v4030 = vmul.f32 %v4014, 0.01
        %v4031 = vmul.f32 %v4015, 0.01
        %v4032 = vmul.f32 %v4016, 0.01
        %v4033 = vmul.f32 %v4017, 0.01
        %v4034 = vmul.f32 %v4018, 0.01
        %v4035 = vmul.f32 %v4019, 0.01
        %v4036 = vsel %vm4020, %v4012, %v4028
        %v4037 = vsel %vm4021, %v4013, %v4029
        %v4038 = vsel %vm4022, %v4014, %v4030
        %v4039 = vsel %vm4023, %v4015, %v4031
        %v4040 = vsel %vm4024, %v4016, %v4032
        %v4041 = vsel %vm4025, %v4017, %v4033
        %v4042 = vsel %vm4026, %v4018, %v4034
        %v4043 = vsel %vm4027, %v4019, %v4035
        %v4044 = vpack.c.bf16 %v4036, %v4036
        %v4045 = vpack.c.bf16 %v4037, %v4037
        %v4046 = vpack.c.bf16 %v4038, %v4038
        %v4047 = vpack.c.bf16 %v4039, %v4039
        %v4048 = vpack.c.bf16 %v4040, %v4040
        %v4049 = vpack.c.bf16 %v4041, %v4041
        %v4050 = vpack.c.bf16 %v4042, %v4042
        %v4051 = vpack.c.bf16 %v4043, %v4043
        %4052 = vst [vmem:[%s150] sm:$0xf] %v4044
        %4053 = vst [vmem:[%s150 + $0x4] sm:$0xf] %v4045
        %4054 = vst [vmem:[%s150 + $0x8] sm:$0xf] %v4046
        %4055 = vst [vmem:[%s150 + $0xc] sm:$0xf] %v4047
        %4056 = vst [vmem:[%s150 + $0x10] sm:$0xf] %v4048
        %4057 = vst [vmem:[%s150 + $0x14] sm:$0xf] %v4049
        %4058 = vst [vmem:[%s150 + $0x18] sm:$0xf] %v4050
        %4059 = vst [vmem:[%s150 + $0x1c] sm:$0xf] %v4051
        %s4060 = sand.u32 %s85, 1
        %s4061 = scalar_lea.sflag [#allocation4], %s4060
        %s4062 = sand.u32 %s85, 1
        %s4063 = smul.addr %s4062, 32
        %s4064 = scalar_lea.vmem [#allocation3], %s4063
        // Predicated region
        $region29: #{conv_relu_block5.1} parent=27 // pred_check
          %p4065 = pneg %p95
        $region30: #{conv_relu_block5.1} parent=27 // pred_check_branch
          %4067 = sbr.rel (%p4065) target = $region32
        $region31: #{conv_relu_block5.1} parent=27 // pred_region
          %s4068 = smul.u32 8, %s21
          %4070 = vsyncadd %s4061, 0
          %s4071 = smul.addr %s20, 8
          %s4072 = sadd.s32 %s4068, %s4071
          %s4073 = smul.addr %s4072, 4
          %s4074 = scalar_lea.hbm %s2, %s4073
          %s4075 = sshll.u32 %s4064, 4
          %s4076 = int_to_ptr.vmem [resolvable:$true] %s4075
          %s4077 = sshll.u32 %s4074, 4
          %s4078 = int_to_ptr.hbm [resolvable:$true] %s4077
          %4083 = dma.vmem_to_hbm [thread:$0]  %s4076, 512, %s4078, %s4061, 64, 64, 4
        $region32: #{conv_relu_block5.1} parent=27 // pred_fallthru
          _
      $region28: #{conv_relu_block5.1} parent=5 // pred_fallthru
        _
      %p4084 = scmp.le.s32.totalorder 2, %s11
      // Predicated region
      $region33: #{conv_relu_block5.1} parent=5 // pred_check
        %p4085 = pneg %p4084
      $region34: #{conv_relu_block5.1} parent=5 // pred_check_branch
        %4087 = sbr.rel (%p4085) target = $region36
      $region35: #{conv_relu_block5.1} parent=5 // pred_region
        %s4088 = ssub.s32 %s11, 2
        // Predicated region
        $region37: #{conv_relu_block5.1} parent=35 // pred_check
          %p4089 = pneg %p101
        $region38: #{conv_relu_block5.1} parent=35 // pred_check_branch
          %4091 = sbr.rel (%p4089) target = $region40
        $region39: #{conv_relu_block5.1} parent=35 // pred_region
          %s4092 = sand.u32 %s86, 1
          %s4093 = scalar_lea.sflag [#allocation4], %s4092
          %s4094 = sand.u32 %s86, 1
          %s4095 = smul.addr %s4094, 32
          %s4096 = scalar_lea.vmem [#allocation3], %s4095
          %4098 = dma.done %s4093, 512
        $region40: #{conv_relu_block5.1} parent=35 // pred_fallthru
          _
      $region36: #{conv_relu_block5.1} parent=5 // pred_fallthru
        _
    $region6: #{conv_relu_block5.1} parent=1 // loop_footer
      %s15 = sadd.s32 1, %s11
    $region7: #{conv_relu_block5.1} parent=1 // loop_footer_branch
      %10 = sbr.rel target = $region3
    $region8: #{conv_relu_block5.1} parent=1 // loop_exit
      _
    %4099 = vsyncpa [#allocation4], 1
    %s4100 = scalar_lea.sflag [#allocation4], 1
    %4101 = vsyncpa %s4100, 1

</llo_original>
